<compile_context>
chip_gen: v7x
topology: tpu7x:2x2x1
jax: 0.10.0
libtpu: 0.0.40
codegen_flags: <defaults>
</compile_context>

<pallas_src>
import functools

import jax
import jax.numpy as jnp
from jax.experimental import pallas as pl
from jax.experimental.pallas import tpu as pltpu

IN_FEATURES = 4
IN_PADDED = 128              # 4 rounded up to a full lane group
HIDDEN = 400
HIDDEN_PADDED = 512          # 400 rounded up to a multiple of 128 lanes
OUT_FEATURES = 1
OUT_PADDED = 128             # 1 rounded up to a full lane group


def _round_up(v, m):
    return ((v + m - 1) // m) * m


def _mlp_kernel(x_ref,
                w1_ref, b1_ref,
                w2_ref, b2_ref,
                w3_ref, b3_ref,
                w4_ref, b4_ref,
                w5_ref, b5_ref,
                o_ref):
    # Layer 1 (128 -> 512): bf16 MXU matmul, f32 accumulation.
    acc = jnp.dot(x_ref[...], w1_ref[...], preferred_element_type=jnp.float32)
    h = jnp.maximum(acc + b1_ref[...], 0.0).astype(jnp.bfloat16)

    # Layers 2-4 (512 -> 512): bf16 MXU matmuls; bias + ReLU in f32, stored bf16.
    for w_ref, b_ref in ((w2_ref, b2_ref), (w3_ref, b3_ref), (w4_ref, b4_ref)):
        acc = jnp.dot(h, w_ref[...], preferred_element_type=jnp.float32)
        h = jnp.maximum(acc + b_ref[...], 0.0).astype(jnp.bfloat16)

    # Output layer (512 -> 128 padded, only column 0 is real): bf16 MXU matmul,
    # lane-dense (tb, 128) store.
    out = jnp.dot(h, w5_ref[...], preferred_element_type=jnp.float32) + b5_ref[...]
    o_ref[...] = out.astype(o_ref.dtype)


def prepare_params(params):
    """Pad (4->128, 400->512, 1->128), cast weights to bf16, biases stay f32.

    params: list of (W, b) pairs with W as (in, out) f32 and b as (1, out) f32
    (torch.nn.Linear semantics with the weight pre-transposed).  Done once,
    outside the per-step grid, so there is no per-iteration conversion cost.
    """
    (w1, b1), (w2, b2), (w3, b3), (w4, b4), (w5, b5) = params
    hp = HIDDEN_PADDED

    def pad_bias(b, width):
        b = jnp.reshape(b, (1, -1))
        return jnp.pad(b, ((0, 0), (0, width - b.shape[1]))).astype(jnp.float32)

    def pad_w(w, rows, cols):
        w = jnp.pad(w, ((0, rows - w.shape[0]), (0, cols - w.shape[1])))
        return w.astype(jnp.bfloat16)

    w1p, b1p = pad_w(w1, IN_PADDED, hp), pad_bias(b1, hp)        # (128,512) bf16
    w2p, b2p = pad_w(w2, hp, hp), pad_bias(b2, hp)               # (512,512) bf16
    w3p, b3p = pad_w(w3, hp, hp), pad_bias(b3, hp)
    w4p, b4p = pad_w(w4, hp, hp), pad_bias(b4, hp)
    w5p, b5p = pad_w(w5, hp, OUT_PADDED), pad_bias(b5, OUT_PADDED)  # (512,128) bf16

    return (w1p, b1p, w2p, b2p, w3p, b3p, w4p, b4p, w5p, b5p)


def black_scholes_ann_forward(x, prepped, *, tb=1024):
    """x: (B, 4) float32; prepped: output of prepare_params(). Returns (B, 1) f32."""
    B = x.shape[0]
    # Clamp the batch tile for small batches (keep it a multiple of 8 sublanes),
    # and pad the batch so the grid divides evenly.
    tb = min(tb, max(_round_up(B, 8), 8))
    Bp = _round_up(B, tb)
    # Pad batch and feature dim (4 -> 128), cast to bf16 once, outside the grid.
    xp = jnp.pad(x, ((0, Bp - B), (0, IN_PADDED - x.shape[1]))).astype(jnp.bfloat16)

    in_specs = [pl.BlockSpec((tb, IN_PADDED), lambda i: (i, 0))]
    for arr in prepped:
        # Full-extent blocks for weights/biases, same block every grid step.
        in_specs.append(pl.BlockSpec(arr.shape, lambda i: (0, 0)))
    out_spec = pl.BlockSpec((tb, OUT_PADDED), lambda i: (i, 0))

    # Advisory cost estimate using the padded dims that are actually executed.
    flops = 2 * Bp * (IN_PADDED * HIDDEN_PADDED
                      + 3 * HIDDEN_PADDED * HIDDEN_PADDED
                      + HIDDEN_PADDED * OUT_PADDED)
    weight_bytes = sum(int(a.size) * a.dtype.itemsize for a in prepped)
    bytes_accessed = (int(xp.size) * xp.dtype.itemsize
                      + 4 * Bp * OUT_PADDED
                      + weight_bytes)

    out = pl.pallas_call(
        _mlp_kernel,
        out_shape=jax.ShapeDtypeStruct((Bp, OUT_PADDED), jnp.float32),
        grid_spec=pltpu.PrefetchScalarGridSpec(
            num_scalar_prefetch=0,
            grid=(Bp // tb,),
            in_specs=in_specs,
            out_specs=out_spec,
        ),
        compiler_params=pltpu.CompilerParams(
            dimension_semantics=("parallel",),   # batch axis shards across TCs on v7x
            vmem_limit_bytes=32 * 1024 * 1024,
        ),
        cost_estimate=pl.CostEstimate(
            flops=flops, transcendentals=0, bytes_accessed=bytes_accessed),
    )(xp, *prepped)
    return out[:B, :OUT_FEATURES]


def init_params(key):
    """Xavier-uniform weights (as (in, out)), small uniform biases (as (1, out))."""
    dims = [IN_FEATURES, HIDDEN, HIDDEN, HIDDEN, HIDDEN, OUT_FEATURES]
    params = []
    for li in range(len(dims) - 1):
        fan_in, fan_out = dims[li], dims[li + 1]
        key, wk, bk = jax.random.split(key, 3)
        limit = (6.0 / (fan_in + fan_out)) ** 0.5
        w = jax.random.uniform(wk, (fan_in, fan_out), jnp.float32, -limit, limit)
        b = jax.random.uniform(bk, (1, fan_out), jnp.float32, -0.05, 0.05)
        params.append((w, b))
    return params


def reference_forward_matched(x, prepped):
    """Pure-JAX reference mirroring the kernel's numerics (bf16 matmul path)."""
    w1, b1, w2, b2, w3, b3, w4, b4, w5, b5 = prepped
    xp = jnp.pad(x, ((0, 0), (0, IN_PADDED - x.shape[1]))).astype(jnp.bfloat16)
    acc = jnp.dot(xp, w1, preferred_element_type=jnp.float32)
    h = jnp.maximum(acc + b1, 0.0).astype(jnp.bfloat16)
    for w, b in ((w2, b2), (w3, b3), (w4, b4)):
        acc = jnp.dot(h, w, preferred_element_type=jnp.float32)
        h = jnp.maximum(acc + b, 0.0).astype(jnp.bfloat16)
    out = jnp.dot(h, w5, preferred_element_type=jnp.float32) + b5
    return out[:, :OUT_FEATURES]


def reference_forward_f32(x, params):
    """Pure-f32 reference of the original module semantics."""
    h = x
    for li, (w, b) in enumerate(params):
        h = h @ w + jnp.reshape(b, (1, -1))
        if li < len(params) - 1:
            h = jnp.maximum(h, 0.0)
    return h


if __name__ == "__main__":
    key = jax.random.PRNGKey(0)
    pkey, xkey = jax.random.split(key)

    params = init_params(pkey)
    prepped = prepare_params(params)

    B = 64                                     # small demo batch
    x = jax.random.normal(xkey, (B, IN_FEATURES), jnp.float32)

    fwd = jax.jit(functools.partial(black_scholes_ann_forward, tb=1024))
    out = jax.block_until_ready(fwd(x, prepped))
    assert out.shape == (B, OUT_FEATURES), out.shape
    assert bool(jnp.all(jnp.isfinite(out))), "non-finite output"

    # Exact-numerics reference (same bf16 matmul path as the kernel).
    ref = reference_forward_matched(x, prepped)
    assert jnp.allclose(out, ref, atol=3e-3, rtol=3e-3), "mismatch vs matched reference"

    # Loose check against the original full-f32 module semantics (bf16 weights
    # and activations introduce ~1% level differences).
    ref_f32 = reference_forward_f32(x, params)
    assert jnp.allclose(out, ref_f32, atol=5e-2, rtol=5e-2), "mismatch vs f32 reference"

    print("KERNEL_OK")
</pallas_src>

<mosaic_0001>
module attributes {stable_mosaic.version = 11 : i64} {
  func.func @_mlp_kernel(%arg0: i32, %arg1: memref<64x128xbf16, #tpu.memory_space<vmem>>, %arg2: memref<128x512xbf16, #tpu.memory_space<vmem>>, %arg3: memref<1x512xf32, #tpu.memory_space<vmem>>, %arg4: memref<512x512xbf16, #tpu.memory_space<vmem>>, %arg5: memref<1x512xf32, #tpu.memory_space<vmem>>, %arg6: memref<512x512xbf16, #tpu.memory_space<vmem>>, %arg7: memref<1x512xf32, #tpu.memory_space<vmem>>, %arg8: memref<512x512xbf16, #tpu.memory_space<vmem>>, %arg9: memref<1x512xf32, #tpu.memory_space<vmem>>, %arg10: memref<512x128xbf16, #tpu.memory_space<vmem>>, %arg11: memref<1x128xf32, #tpu.memory_space<vmem>>, %arg12: memref<64x128xf32, #tpu.memory_space<vmem>>) attributes {dimension_semantics = [#tpu.dimension_semantics<parallel>], iteration_bounds = array<i64: 1>, scalar_prefetch = 0 : i64, scratch_operands = 0 : i64, tpu.core_type = #tpu.core_type<tc>, window_params = [{transform_indices = @transform_0, window_bounds = array<i64: 64, 128>}, {pipeline_mode = #tpu.pipeline_mode<synchronous>, transform_indices = @transform_1, window_bounds = array<i64: 128, 512>}, {pipeline_mode = #tpu.pipeline_mode<synchronous>, transform_indices = @transform_2, window_bounds = array<i64: 1, 512>}, {pipeline_mode = #tpu.pipeline_mode<synchronous>, transform_indices = @transform_3, window_bounds = array<i64: 512, 512>}, {pipeline_mode = #tpu.pipeline_mode<synchronous>, transform_indices = @transform_4, window_bounds = array<i64: 1, 512>}, {pipeline_mode = #tpu.pipeline_mode<synchronous>, transform_indices = @transform_5, window_bounds = array<i64: 512, 512>}, {pipeline_mode = #tpu.pipeline_mode<synchronous>, transform_indices = @transform_6, window_bounds = array<i64: 1, 512>}, {pipeline_mode = #tpu.pipeline_mode<synchronous>, transform_indices = @transform_7, window_bounds = array<i64: 512, 512>}, {pipeline_mode = #tpu.pipeline_mode<synchronous>, transform_indices = @transform_8, window_bounds = array<i64: 1, 512>}, {pipeline_mode = #tpu.pipeline_mode<synchronous>, transform_indices = @transform_9, window_bounds = array<i64: 512, 128>}, {pipeline_mode = #tpu.pipeline_mode<synchronous>, transform_indices = @transform_10, window_bounds = array<i64: 1, 128>}, {transform_indices = @transform_11, window_bounds = array<i64: 64, 128>}]} {
    %c0 = arith.constant 0 : index
    %c0_0 = arith.constant 0 : index
    %0 = vector.load %arg1[%c0, %c0_0] : memref<64x128xbf16, #tpu.memory_space<vmem>>, vector<64x128xbf16>
    %c0_1 = arith.constant 0 : index
    %c0_2 = arith.constant 0 : index
    %1 = vector.load %arg2[%c0_1, %c0_2] : memref<128x512xbf16, #tpu.memory_space<vmem>>, vector<128x512xbf16>
    %cst = arith.constant dense<0.000000e+00> : vector<64x512xf32>
    %2 = tpu.matmul %0, %1, %cst {dimension_numbers = #tpu.dot_dimension_numbers<[1], [0], [0], [1], [0, 0, 1, 1], [], []>} : vector<64x128xbf16>, vector<128x512xbf16>, vector<64x512xf32> -> vector<64x512xf32>
    %c0_3 = arith.constant 0 : index
    %c0_4 = arith.constant 0 : index
    %3 = vector.load %arg3[%c0_3, %c0_4] : memref<1x512xf32, #tpu.memory_space<vmem>>, vector<1x512xf32>
    %4 = vector.broadcast %3 : vector<1x512xf32> to vector<64x512xf32>
    %5 = arith.addf %2, %4 : vector<64x512xf32>
    %cst_5 = arith.constant 0.000000e+00 : f32
    %6 = vector.broadcast %cst_5 : f32 to vector<64x512xf32>
    %7 = arith.maximumf %5, %6 : vector<64x512xf32>
    %8 = arith.truncf %7 : vector<64x512xf32> to vector<64x512xbf16>
    %c0_6 = arith.constant 0 : index
    %c0_7 = arith.constant 0 : index
    %9 = vector.load %arg4[%c0_6, %c0_7] : memref<512x512xbf16, #tpu.memory_space<vmem>>, vector<512x512xbf16>
    %cst_8 = arith.constant dense<0.000000e+00> : vector<64x512xf32>
    %10 = tpu.matmul %8, %9, %cst_8 {dimension_numbers = #tpu.dot_dimension_numbers<[1], [0], [0], [1], [0, 0, 1, 1], [], []>} : vector<64x512xbf16>, vector<512x512xbf16>, vector<64x512xf32> -> vector<64x512xf32>
    %c0_9 = arith.constant 0 : index
    %c0_10 = arith.constant 0 : index
    %11 = vector.load %arg5[%c0_9, %c0_10] : memref<1x512xf32, #tpu.memory_space<vmem>>, vector<1x512xf32>
    %12 = vector.broadcast %11 : vector<1x512xf32> to vector<64x512xf32>
    %13 = arith.addf %10, %12 : vector<64x512xf32>
    %cst_11 = arith.constant 0.000000e+00 : f32
    %14 = vector.broadcast %cst_11 : f32 to vector<64x512xf32>
    %15 = arith.maximumf %13, %14 : vector<64x512xf32>
    %16 = arith.truncf %15 : vector<64x512xf32> to vector<64x512xbf16>
    %c0_12 = arith.constant 0 : index
    %c0_13 = arith.constant 0 : index
    %17 = vector.load %arg6[%c0_12, %c0_13] : memref<512x512xbf16, #tpu.memory_space<vmem>>, vector<512x512xbf16>
    %cst_14 = arith.constant dense<0.000000e+00> : vector<64x512xf32>
    %18 = tpu.matmul %16, %17, %cst_14 {dimension_numbers = #tpu.dot_dimension_numbers<[1], [0], [0], [1], [0, 0, 1, 1], [], []>} : vector<64x512xbf16>, vector<512x512xbf16>, vector<64x512xf32> -> vector<64x512xf32>
    %c0_15 = arith.constant 0 : index
    %c0_16 = arith.constant 0 : index
    %19 = vector.load %arg7[%c0_15, %c0_16] : memref<1x512xf32, #tpu.memory_space<vmem>>, vector<1x512xf32>
    %20 = vector.broadcast %19 : vector<1x512xf32> to vector<64x512xf32>
    %21 = arith.addf %18, %20 : vector<64x512xf32>
    %cst_17 = arith.constant 0.000000e+00 : f32
    %22 = vector.broadcast %cst_17 : f32 to vector<64x512xf32>
    %23 = arith.maximumf %21, %22 : vector<64x512xf32>
    %24 = arith.truncf %23 : vector<64x512xf32> to vector<64x512xbf16>
    %c0_18 = arith.constant 0 : index
    %c0_19 = arith.constant 0 : index
    %25 = vector.load %arg8[%c0_18, %c0_19] : memref<512x512xbf16, #tpu.memory_space<vmem>>, vector<512x512xbf16>
    %cst_20 = arith.constant dense<0.000000e+00> : vector<64x512xf32>
    %26 = tpu.matmul %24, %25, %cst_20 {dimension_numbers = #tpu.dot_dimension_numbers<[1], [0], [0], [1], [0, 0, 1, 1], [], []>} : vector<64x512xbf16>, vector<512x512xbf16>, vector<64x512xf32> -> vector<64x512xf32>
    %c0_21 = arith.constant 0 : index
    %c0_22 = arith.constant 0 : index
    %27 = vector.load %arg9[%c0_21, %c0_22] : memref<1x512xf32, #tpu.memory_space<vmem>>, vector<1x512xf32>
    %28 = vector.broadcast %27 : vector<1x512xf32> to vector<64x512xf32>
    %29 = arith.addf %26, %28 : vector<64x512xf32>
    %cst_23 = arith.constant 0.000000e+00 : f32
    %30 = vector.broadcast %cst_23 : f32 to vector<64x512xf32>
    %31 = arith.maximumf %29, %30 : vector<64x512xf32>
    %32 = arith.truncf %31 : vector<64x512xf32> to vector<64x512xbf16>
    %c0_24 = arith.constant 0 : index
    %c0_25 = arith.constant 0 : index
    %33 = vector.load %arg10[%c0_24, %c0_25] : memref<512x128xbf16, #tpu.memory_space<vmem>>, vector<512x128xbf16>
    %cst_26 = arith.constant dense<0.000000e+00> : vector<64x128xf32>
    %34 = tpu.matmul %32, %33, %cst_26 {dimension_numbers = #tpu.dot_dimension_numbers<[1], [0], [0], [1], [0, 0, 1, 1], [], []>} : vector<64x512xbf16>, vector<512x128xbf16>, vector<64x128xf32> -> vector<64x128xf32>
    %c0_27 = arith.constant 0 : index
    %c0_28 = arith.constant 0 : index
    %35 = vector.load %arg11[%c0_27, %c0_28] : memref<1x128xf32, #tpu.memory_space<vmem>>, vector<1x128xf32>
    %36 = vector.broadcast %35 : vector<1x128xf32> to vector<64x128xf32>
    %37 = arith.addf %34, %36 : vector<64x128xf32>
    %c0_29 = arith.constant 0 : index
    %c0_30 = arith.constant 0 : index
    %38 = vector.load %arg12[%c0_29, %c0_30] : memref<64x128xf32, #tpu.memory_space<vmem>>, vector<64x128xf32>
    tpu.vector_store %arg12[%c0_29, %c0_30], %37 {strides = array<i32>} : memref<64x128xf32, #tpu.memory_space<vmem>>, vector<64x128xf32>,
    return
  }
  func.func @transform_0(%arg0: i32) -> (i32, i32) {
    %c0_i32 = arith.constant 0 : i32
    %c0_i32_0 = arith.constant 0 : i32
    return %arg0, %c0_i32 : i32, i32
  }
  func.func @transform_1(%arg0: i32) -> (i32, i32) {
    %c0_i32 = arith.constant 0 : i32
    %c0_i32_0 = arith.constant 0 : i32
    %c0_i32_1 = arith.constant 0 : i32
    return %c0_i32, %c0_i32_0 : i32, i32
  }
  func.func @transform_2(%arg0: i32) -> (i32, i32) {
    %c0_i32 = arith.constant 0 : i32
    %c0_i32_0 = arith.constant 0 : i32
    %c0_i32_1 = arith.constant 0 : i32
    return %c0_i32, %c0_i32_0 : i32, i32
  }
  func.func @transform_3(%arg0: i32) -> (i32, i32) {
    %c0_i32 = arith.constant 0 : i32
    %c0_i32_0 = arith.constant 0 : i32
    %c0_i32_1 = arith.constant 0 : i32
    return %c0_i32, %c0_i32_0 : i32, i32
  }
  func.func @transform_4(%arg0: i32) -> (i32, i32) {
    %c0_i32 = arith.constant 0 : i32
    %c0_i32_0 = arith.constant 0 : i32
    %c0_i32_1 = arith.constant 0 : i32
    return %c0_i32, %c0_i32_0 : i32, i32
  }
  func.func @transform_5(%arg0: i32) -> (i32, i32) {
    %c0_i32 = arith.constant 0 : i32
    %c0_i32_0 = arith.constant 0 : i32
    %c0_i32_1 = arith.constant 0 : i32
    return %c0_i32, %c0_i32_0 : i32, i32
  }
  func.func @transform_6(%arg0: i32) -> (i32, i32) {
    %c0_i32 = arith.constant 0 : i32
    %c0_i32_0 = arith.constant 0 : i32
    %c0_i32_1 = arith.constant 0 : i32
    return %c0_i32, %c0_i32_0 : i32, i32
  }
  func.func @transform_7(%arg0: i32) -> (i32, i32) {
    %c0_i32 = arith.constant 0 : i32
    %c0_i32_0 = arith.constant 0 : i32
    %c0_i32_1 = arith.constant 0 : i32
    return %c0_i32, %c0_i32_0 : i32, i32
  }
  func.func @transform_8(%arg0: i32) -> (i32, i32) {
    %c0_i32 = arith.constant 0 : i32
    %c0_i32_0 = arith.constant 0 : i32
    %c0_i32_1 = arith.constant 0 : i32
    return %c0_i32, %c0_i32_0 : i32, i32
  }
  func.func @transform_9(%arg0: i32) -> (i32, i32) {
    %c0_i32 = arith.constant 0 : i32
    %c0_i32_0 = arith.constant 0 : i32
    %c0_i32_1 = arith.constant 0 : i32
    return %c0_i32, %c0_i32_0 : i32, i32
  }
  func.func @transform_10(%arg0: i32) -> (i32, i32) {
    %c0_i32 = arith.constant 0 : i32
    %c0_i32_0 = arith.constant 0 : i32
    %c0_i32_1 = arith.constant 0 : i32
    return %c0_i32, %c0_i32_0 : i32, i32
  }
  func.func @transform_11(%arg0: i32) -> (i32, i32) {
    %c0_i32 = arith.constant 0 : i32
    %c0_i32_0 = arith.constant 0 : i32
    return %arg0, %c0_i32 : i32, i32
  }
}

</mosaic_0001>

<llo_original>
// kernel: black_scholes_ann_forward.1
$region0: #{black_scholes_ann_forward.1}
  #allocation0 [shape = 'u32[]', space=smem, size = 0x4, offset = 0x4, fixed_abs, tag = 'smem constant byte address 0x4 - core index']
  #allocation1 [shape = 'u32[144,128]{1,0:T(1,128)}', space=vmem, size = 0x12000, scoped, tag = 'internal scratch']
  %s0 = inlined_call_operand.vmem [shape: bf16[64,128], index: 0, kind: input, shape index: {}]
  %s1 = inlined_call_operand.hbm [shape: bf16[128,512], index: 1, kind: input, shape index: {}]
  %s2 = inlined_call_operand.vmem [shape: f32[1,512], index: 2, kind: input, shape index: {}]
  %s3 = inlined_call_operand.hbm [shape: bf16[512,512], index: 3, kind: input, shape index: {}]
  %s4 = inlined_call_operand.vmem [shape: f32[1,512], index: 4, kind: input, shape index: {}]
  %s5 = inlined_call_operand.hbm [shape: bf16[512,512], index: 5, kind: input, shape index: {}]
  %s6 = inlined_call_operand.vmem [shape: f32[1,512], index: 6, kind: input, shape index: {}]
  %s7 = inlined_call_operand.hbm [shape: bf16[512,512], index: 7, kind: input, shape index: {}]
  %s8 = inlined_call_operand.vmem [shape: f32[1,512], index: 8, kind: input, shape index: {}]
  %s9 = inlined_call_operand.hbm [shape: bf16[512,128], index: 9, kind: input, shape index: {}]
  %s10 = inlined_call_operand.vmem [shape: f32[1,128], index: 10, kind: input, shape index: {}]
  %s11 = inlined_call_operand.vmem [shape: f32[64,128], index: 11, kind: output, shape index: {}]
  %s12 = sld [smem:[#allocation0]]
  $region74: #{black_scholes_ann_forward.1} parent=0
    _
  %s14 = ssub.s32 1, %s12
  %s15 = scalar_select 0, %s14, %s12
  $region1: #{black_scholes_ann_forward.1} parent=0
    #allocation2 [shape = 'u8[131072]{0}', space=vmem, size = 0x20000, scoped, tag = 'input window, operand 1, single buffered']
    #allocation3 [shape = 's32[1]{0}', space=sflag, size = 0x4, scoped, tag = 'scoped memory for black_scholes_ann_forward.1']
    #allocation4 [shape = 'u8[524288]{0}', space=vmem, size = 0x80000, scoped, tag = 'input window, operand 3, single buffered']
    #allocation5 [shape = 's32[1]{0}', space=sflag, size = 0x4, scoped, tag = 'scoped memory for black_scholes_ann_forward.1']
    #allocation6 [shape = 'u8[524288]{0}', space=vmem, size = 0x80000, scoped, tag = 'input window, operand 5, single buffered']
    #allocation7 [shape = 'u8[524288]{0}', space=vmem, size = 0x80000, scoped, tag = 'input window, operand 7, single buffered']
    #allocation8 [shape = 's32[1]{0}', space=sflag, size = 0x4, scoped, tag = 'scoped memory for black_scholes_ann_forward.1']
    #allocation9 [shape = 'u8[131072]{0}', space=vmem, size = 0x20000, scoped, tag = 'input window, operand 9, single buffered']
    %16 = vsyncpa [#allocation3], 0
    %17 = vsyncpa [#allocation5], 0
    %18 = vsyncpa [#allocation8], 0
    // Predicated region
    $region2: #{black_scholes_ann_forward.1} parent=1 // pred_check
      _
    $region3: #{black_scholes_ann_forward.1} parent=1 // pred_check_branch
      %20 = sbr.rel (0) target = $region5
    $region4: #{black_scholes_ann_forward.1} parent=1 // pred_region
      _
    $region5: #{black_scholes_ann_forward.1} parent=1 // pred_fallthru
      _
    // Predicated region
    $region6: #{black_scholes_ann_forward.1} parent=1 // pred_check
      _
    $region7: #{black_scholes_ann_forward.1} parent=1 // pred_check_branch
      %22 = sbr.rel (0) target = $region9
    $region8: #{black_scholes_ann_forward.1} parent=1 // pred_region
      %s24 = ssub.s32 4096, 4096
      %25 = vsyncadd [#allocation3], %s24
      %s26 = sshll.u32 [#allocation2], 4
      %s27 = int_to_ptr.vmem [resolvable:$true] %s26
      %32 = dma.hbm_to_vmem [thread:$0]  %s1, 4096, %s27, [#allocation3], 256, 256, 16
    $region9: #{black_scholes_ann_forward.1} parent=1 // pred_fallthru
      _
    // Predicated region
    $region10: #{black_scholes_ann_forward.1} parent=1 // pred_check
      _
    $region11: #{black_scholes_ann_forward.1} parent=1 // pred_check_branch
      %34 = sbr.rel (0) target = $region13
    $region12: #{black_scholes_ann_forward.1} parent=1 // pred_region
      _
    $region13: #{black_scholes_ann_forward.1} parent=1 // pred_fallthru
      _
    // Predicated region
    $region14: #{black_scholes_ann_forward.1} parent=1 // pred_check
      _
    $region15: #{black_scholes_ann_forward.1} parent=1 // pred_check_branch
      %36 = sbr.rel (0) target = $region17
    $region16: #{black_scholes_ann_forward.1} parent=1 // pred_region
      %s38 = ssub.s32 16384, 16384
      %39 = vsyncadd [#allocation5], %s38
      %s40 = sshll.u32 [#allocation4], 4
      %s41 = int_to_ptr.vmem [resolvable:$true] %s40
      %46 = dma.hbm_to_vmem [thread:$0]  %s3, 16384, %s41, [#allocation5], 256, 256, 16
    $region17: #{black_scholes_ann_forward.1} parent=1 // pred_fallthru
      _
    // Predicated region
    $region18: #{black_scholes_ann_forward.1} parent=1 // pred_check
      _
    $region19: #{black_scholes_ann_forward.1} parent=1 // pred_check_branch
      %48 = sbr.rel (0) target = $region21
    $region20: #{black_scholes_ann_forward.1} parent=1 // pred_region
      _
    $region21: #{black_scholes_ann_forward.1} parent=1 // pred_fallthru
      _
    // Predicated region
    $region22: #{black_scholes_ann_forward.1} parent=1 // pred_check
      _
    $region23: #{black_scholes_ann_forward.1} parent=1 // pred_check_branch
      %50 = sbr.rel (0) target = $region25
    $region24: #{black_scholes_ann_forward.1} parent=1 // pred_region
      %s52 = ssub.s32 16384, 16384
      %53 = vsyncadd [#allocation5], %s52
      %s54 = sshll.u32 [#allocation6], 4
      %s55 = int_to_ptr.vmem [resolvable:$true] %s54
      %60 = dma.hbm_to_vmem [thread:$0]  %s5, 16384, %s55, [#allocation5], 256, 256, 16
    $region25: #{black_scholes_ann_forward.1} parent=1 // pred_fallthru
      _
    // Predicated region
    $region26: #{black_scholes_ann_forward.1} parent=1 // pred_check
      _
    $region27: #{black_scholes_ann_forward.1} parent=1 // pred_check_branch
      %62 = sbr.rel (0) target = $region29
    $region28: #{black_scholes_ann_forward.1} parent=1 // pred_region
      _
    $region29: #{black_scholes_ann_forward.1} parent=1 // pred_fallthru
      _
    // Predicated region
    $region30: #{black_scholes_ann_forward.1} parent=1 // pred_check
      _
    $region31: #{black_scholes_ann_forward.1} parent=1 // pred_check_branch
      %64 = sbr.rel (0) target = $region33
    $region32: #{black_scholes_ann_forward.1} parent=1 // pred_region
      %s66 = ssub.s32 16384, 16384
      %67 = vsyncadd [#allocation8], %s66
      %s68 = sshll.u32 [#allocation7], 4
      %s69 = int_to_ptr.vmem [resolvable:$true] %s68
      %74 = dma.hbm_to_vmem [thread:$0]  %s7, 16384, %s69, [#allocation8], 256, 256, 16
    $region33: #{black_scholes_ann_forward.1} parent=1 // pred_fallthru
      _
    // Predicated region
    $region34: #{black_scholes_ann_forward.1} parent=1 // pred_check
      _
    $region35: #{black_scholes_ann_forward.1} parent=1 // pred_check_branch
      %76 = sbr.rel (0) target = $region37
    $region36: #{black_scholes_ann_forward.1} parent=1 // pred_region
      _
    $region37: #{black_scholes_ann_forward.1} parent=1 // pred_fallthru
      _
    // Predicated region
    $region38: #{black_scholes_ann_forward.1} parent=1 // pred_check
      _
    $region39: #{black_scholes_ann_forward.1} parent=1 // pred_check_branch
      %78 = sbr.rel (0) target = $region41
    $region40: #{black_scholes_ann_forward.1} parent=1 // pred_region
      %s80 = ssub.s32 4096, 4096
      %81 = vsyncadd [#allocation8], %s80
      %s82 = sshll.u32 [#allocation9], 4
      %s83 = int_to_ptr.vmem [resolvable:$true] %s82
      %88 = dma.hbm_to_vmem [thread:$0]  %s9, 4096, %s83, [#allocation8], 64, 64, 4
    $region41: #{black_scholes_ann_forward.1} parent=1 // pred_fallthru
      _
    // Predicated region
    $region42: #{black_scholes_ann_forward.1} parent=1 // pred_check
      _
    $region43: #{black_scholes_ann_forward.1} parent=1 // pred_check_branch
      %90 = sbr.rel (0) target = $region45
    $region44: #{black_scholes_ann_forward.1} parent=1 // pred_region
      _
    $region45: #{black_scholes_ann_forward.1} parent=1 // pred_fallthru
      _
    // Predicated region
    $region46: #{black_scholes_ann_forward.1} parent=1 // pred_check
      _
    $region47: #{black_scholes_ann_forward.1} parent=1 // pred_check_branch
      %92 = sbr.rel (0) target = $region49
    $region48: #{black_scholes_ann_forward.1} parent=1 // pred_region
      %93 = dma.done [#allocation3], 4096
    $region49: #{black_scholes_ann_forward.1} parent=1 // pred_fallthru
      _
    // Predicated region
    $region50: #{black_scholes_ann_forward.1} parent=1 // pred_check
      _
    $region51: #{black_scholes_ann_forward.1} parent=1 // pred_check_branch
      %95 = sbr.rel (0) target = $region53
    $region52: #{black_scholes_ann_forward.1} parent=1 // pred_region
      %96 = dma.done [#allocation5], 16384
    $region53: #{black_scholes_ann_forward.1} parent=1 // pred_fallthru
      _
    // Predicated region
    $region54: #{black_scholes_ann_forward.1} parent=1 // pred_check
      _
    $region55: #{black_scholes_ann_forward.1} parent=1 // pred_check_branch
      %98 = sbr.rel (0) target = $region57
    $region56: #{black_scholes_ann_forward.1} parent=1 // pred_region
      %99 = dma.done [#allocation5], 16384
    $region57: #{black_scholes_ann_forward.1} parent=1 // pred_fallthru
      _
    // Predicated region
    $region58: #{black_scholes_ann_forward.1} parent=1 // pred_check
      _
    $region59: #{black_scholes_ann_forward.1} parent=1 // pred_check_branch
      %101 = sbr.rel (0) target = $region61
    $region60: #{black_scholes_ann_forward.1} parent=1 // pred_region
      %102 = dma.done [#allocation8], 16384
    $region61: #{black_scholes_ann_forward.1} parent=1 // pred_fallthru
      _
    // Predicated region
    $region62: #{black_scholes_ann_forward.1} parent=1 // pred_check
      _
    $region63: #{black_scholes_ann_forward.1} parent=1 // pred_check_branch
      %104 = sbr.rel (0) target = $region65
    $region64: #{black_scholes_ann_forward.1} parent=1 // pred_region
      %105 = dma.done [#allocation8], 4096
    $region65: #{black_scholes_ann_forward.1} parent=1 // pred_fallthru
      _
    %v107 = vld [vmem:[%s0] sm:$0xf]
    %v108 = vld [vmem:[%s0 + $0x4] sm:$0xf]
    %v109 = vld [vmem:[%s0 + $0x8] sm:$0xf]
    %v110 = vld [vmem:[%s0 + $0xc] sm:$0xf]
    %v111 = vld [vmem:[%s0 + $0x10] sm:$0xf]
    %v112 = vld [vmem:[%s0 + $0x14] sm:$0xf]
    %v113 = vld [vmem:[%s0 + $0x18] sm:$0xf]
    %v114 = vld [vmem:[%s0 + $0x1c] sm:$0xf]
    %v115 = vld [vmem:[#allocation2] sm:$0xff]
    %v116 = vld [vmem:[#allocation2 + $0x8] sm:$0xff]
    %v117 = vld [vmem:[#allocation2 + $0x10] sm:$0xff]
    %v118 = vld [vmem:[#allocation2 + $0x18] sm:$0xff]
    %v119 = vld [vmem:[#allocation2 + $0x20] sm:$0xff]
    %v120 = vld [vmem:[#allocation2 + $0x28] sm:$0xff]
    %v121 = vld [vmem:[#allocation2 + $0x30] sm:$0xff]
    %v122 = vld [vmem:[#allocation2 + $0x38] sm:$0xff]
    %v123 = vld [vmem:[#allocation2 + $0x40] sm:$0xff]
    %v124 = vld [vmem:[#allocation2 + $0x48] sm:$0xff]
    %v125 = vld [vmem:[#allocation2 + $0x50] sm:$0xff]
    %v126 = vld [vmem:[#allocation2 + $0x58] sm:$0xff]
    %v127 = vld [vmem:[#allocation2 + $0x60] sm:$0xff]
    %v128 = vld [vmem:[#allocation2 + $0x68] sm:$0xff]
    %v129 = vld [vmem:[#allocation2 + $0x70] sm:$0xff]
    %v130 = vld [vmem:[#allocation2 + $0x78] sm:$0xff]
    %v131 = vld [vmem:[#allocation2 + $0x80] sm:$0xff]
    %v132 = vld [vmem:[#allocation2 + $0x88] sm:$0xff]
    %v133 = vld [vmem:[#allocation2 + $0x90] sm:$0xff]
    %v134 = vld [vmem:[#allocation2 + $0x98] sm:$0xff]
    %v135 = vld [vmem:[#allocation2 + $0xa0] sm:$0xff]
    %v136 = vld [vmem:[#allocation2 + $0xa8] sm:$0xff]
    %v137 = vld [vmem:[#allocation2 + $0xb0] sm:$0xff]
    %v138 = vld [vmem:[#allocation2 + $0xb8] sm:$0xff]
    %v139 = vld [vmem:[#allocation2 + $0xc0] sm:$0xff]
    %v140 = vld [vmem:[#allocation2 + $0xc8] sm:$0xff]
    %v141 = vld [vmem:[#allocation2 + $0xd0] sm:$0xff]
    %v142 = vld [vmem:[#allocation2 + $0xd8] sm:$0xff]
    %v143 = vld [vmem:[#allocation2 + $0xe0] sm:$0xff]
    %v144 = vld [vmem:[#allocation2 + $0xe8] sm:$0xff]
    %v145 = vld [vmem:[#allocation2 + $0xf0] sm:$0xff]
    %v146 = vld [vmem:[#allocation2 + $0xf8] sm:$0xff]
    %v147 = vld [vmem:[%s2] sm:$0xf]
    %v149 = vlaneseq
    %v150 = vshrl.u32 %v149, 7
    %v151 = vsub.s32 0, %v150
    %v152 = vrot.slane %v147, %v151
    %v153 = vlaneseq
    %v154 = vshrl.u32 %v153, 7
    %v155 = vsub.s32 1, %v154
    %v156 = vrot.slane %v147, %v155
    %v157 = vlaneseq
    %v158 = vshrl.u32 %v157, 7
    %v159 = vsub.s32 2, %v158
    %v160 = vrot.slane %v147, %v159
    %v161 = vlaneseq
    %v162 = vshrl.u32 %v161, 7
    %v163 = vsub.s32 3, %v162
    %v164 = vrot.slane %v147, %v163
    %v177 = vunpack.c.l.b16 %v107
    %v178 = vunpack.c.l.b16 %v108
    %v179 = vunpack.c.l.b16 %v109
    %v180 = vunpack.c.l.b16 %v110
    %v181 = vunpack.c.l.b16 %v111
    %v182 = vunpack.c.l.b16 %v112
    %v183 = vunpack.c.l.b16 %v113
    %v184 = vunpack.c.l.b16 %v114
    %v185 = vpack.c.b16 %v178, %v177
    %v186 = vpack.c.b16 %v180, %v179
    %v187 = vpack.c.b16 %v182, %v181
    %v188 = vpack.c.b16 %v184, %v183
    %v225 = vunpack.c.l.b16 %v115
    %v226 = vunpack.c.h.b16 %v115
    %v227 = vunpack.c.l.b16 %v116
    %v228 = vunpack.c.h.b16 %v116
    %v229 = vunpack.c.l.b16 %v117
    %v230 = vunpack.c.h.b16 %v117
    %v231 = vunpack.c.l.b16 %v118
    %v232 = vunpack.c.h.b16 %v118
    %v233 = vunpack.c.l.b16 %v119
    %v234 = vunpack.c.h.b16 %v119
    %v235 = vunpack.c.l.b16 %v120
    %v236 = vunpack.c.h.b16 %v120
    %v237 = vunpack.c.l.b16 %v121
    %v238 = vunpack.c.h.b16 %v121
    %v239 = vunpack.c.l.b16 %v122
    %v240 = vunpack.c.h.b16 %v122
    %v241 = vunpack.c.l.b16 %v123
    %v242 = vunpack.c.h.b16 %v123
    %v243 = vunpack.c.l.b16 %v124
    %v244 = vunpack.c.h.b16 %v124
    %v245 = vunpack.c.l.b16 %v125
    %v246 = vunpack.c.h.b16 %v125
    %v247 = vunpack.c.l.b16 %v126
    %v248 = vunpack.c.h.b16 %v126
    %v249 = vunpack.c.l.b16 %v127
    %v250 = vunpack.c.h.b16 %v127
    %v251 = vunpack.c.l.b16 %v128
    %v252 = vunpack.c.h.b16 %v128
    %v253 = vunpack.c.l.b16 %v129
    %v254 = vunpack.c.h.b16 %v129
    %v255 = vunpack.c.l.b16 %v130
    %v256 = vunpack.c.h.b16 %v130
    %v257 = vunpack.c.l.b16 %v131
    %v258 = vunpack.c.h.b16 %v131
    %v259 = vunpack.c.l.b16 %v132
    %v260 = vunpack.c.h.b16 %v132
    %v261 = vunpack.c.l.b16 %v133
    %v262 = vunpack.c.h.b16 %v133
    %v263 = vunpack.c.l.b16 %v134
    %v264 = vunpack.c.h.b16 %v134
    %v265 = vunpack.c.l.b16 %v135
    %v266 = vunpack.c.h.b16 %v135
    %v267 = vunpack.c.l.b16 %v136
    %v268 = vunpack.c.h.b16 %v136
    %v269 = vunpack.c.l.b16 %v137
    %v270 = vunpack.c.h.b16 %v137
    %v271 = vunpack.c.l.b16 %v138
    %v272 = vunpack.c.h.b16 %v138
    %v273 = vunpack.c.l.b16 %v139
    %v274 = vunpack.c.h.b16 %v139
    %v275 = vunpack.c.l.b16 %v140
    %v276 = vunpack.c.h.b16 %v140
    %v277 = vunpack.c.l.b16 %v141
    %v278 = vunpack.c.h.b16 %v141
    %v279 = vunpack.c.l.b16 %v142
    %v280 = vunpack.c.h.b16 %v142
    %v281 = vunpack.c.l.b16 %v143
    %v282 = vunpack.c.h.b16 %v143
    %v283 = vunpack.c.l.b16 %v144
    %v284 = vunpack.c.h.b16 %v144
    %v285 = vunpack.c.l.b16 %v145
    %v286 = vunpack.c.h.b16 %v145
    %v287 = vunpack.c.l.b16 %v146
    %v288 = vunpack.c.h.b16 %v146
    %v289 = vpack.c.b16 %v229, %v225
    %v290 = vpack.c.b16 %v230, %v226
    %v291 = vpack.c.b16 %v231, %v227
    %v292 = vpack.c.b16 %v232, %v228
    %v293 = vpack.c.b16 %v237, %v233
    %v294 = vpack.c.b16 %v238, %v234
    %v295 = vpack.c.b16 %v239, %v235
    %v296 = vpack.c.b16 %v240, %v236
    %v297 = vpack.c.b16 %v245, %v241
    %v298 = vpack.c.b16 %v246, %v242
    %v299 = vpack.c.b16 %v247, %v243
    %v300 = vpack.c.b16 %v248, %v244
    %v301 = vpack.c.b16 %v253, %v249
    %v302 = vpack.c.b16 %v254, %v250
    %v303 = vpack.c.b16 %v255, %v251
    %v304 = vpack.c.b16 %v256, %v252
    %v305 = vpack.c.b16 %v261, %v257
    %v306 = vpack.c.b16 %v262, %v258
    %v307 = vpack.c.b16 %v263, %v259
    %v308 = vpack.c.b16 %v264, %v260
    %v309 = vpack.c.b16 %v269, %v265
    %v310 = vpack.c.b16 %v270, %v266
    %v311 = vpack.c.b16 %v271, %v267
    %v312 = vpack.c.b16 %v272, %v268
    %v313 = vpack.c.b16 %v277, %v273
    %v314 = vpack.c.b16 %v278, %v274
    %v315 = vpack.c.b16 %v279, %v275
    %v316 = vpack.c.b16 %v280, %v276
    %v317 = vpack.c.b16 %v285, %v281
    %v318 = vpack.c.b16 %v286, %v282
    %v319 = vpack.c.b16 %v287, %v283
    %v320 = vpack.c.b16 %v288, %v284
    %353 = vmatprep.subr.bf16.mxu0 %v290
    %354 = vmatpush1.bf16.msra.mxu0 %v289
    %355 = vmatprep.subr.bf16.mxu0 %v294
    %356 = vmatpush1.bf16.msra.mxu0 %v293
    %357 = vmatprep.subr.bf16.mxu0 %v298
    %358 = vmatpush1.bf16.msra.mxu0 %v297
    %359 = vmatprep.subr.bf16.mxu0 %v302
    %360 = vmatpush1.bf16.msra.mxu0 %v301
    %361 = vmatprep.subr.bf16.mxu0 %v306
    %362 = vmatpush1.bf16.msra.mxu0 %v305
    %363 = vmatprep.subr.bf16.mxu0 %v310
    %364 = vmatpush1.bf16.msra.mxu0 %v309
    %365 = vmatprep.subr.bf16.mxu0 %v314
    %366 = vmatpush1.bf16.msra.mxu0 %v313
    %367 = vmatprep.subr.bf16.mxu0 %v318
    %368 = vmatpush1.bf16.msra.mxu0 %v317
    %369 = vmatprep.subr.bf16.mxu0 0
    %370 = vmatpush1.bf16.msra.mxu0 0
    %371 = vmatprep.subr.bf16.mxu0 0
    %372 = vmatpush1.bf16.msra.mxu0 0
    %373 = vmatprep.subr.bf16.mxu0 0
    %374 = vmatpush1.bf16.msra.mxu0 0
    %375 = vmatprep.subr.bf16.mxu0 0
    %376 = vmatpush1.bf16.msra.mxu0 0
    %377 = vmatprep.subr.bf16.mxu0 0
    %378 = vmatpush1.bf16.msra.mxu0 0
    %379 = vmatprep.subr.bf16.mxu0 0
    %380 = vmatpush1.bf16.msra.mxu0 0
    %381 = vmatprep.subr.bf16.mxu0 0
    %382 = vmatpush1.bf16.msra.mxu0 0
    %383 = vmatprep.subr.bf16.mxu0 0
    %384 = vmatpush1.bf16.msra.mxu0 0
    %385 = vmatprep.mubr.bf16.mxu0 0
    %386 = vmatmul.mubr.bf16.gmra.mrb[0].mxu0 %v185
    %v387 = vpop.f32.mrb[0].mxu0
    %v388 = vadd.f32 %v152, %v387
    %v389 = vpop.f32.mrb[0].mxu0
    %v390 = vadd.f32 %v156, %v389
    %v391 = vpop.f32.mrb[0].mxu0
    %v392 = vadd.f32 %v152, %v391
    %v393 = vpop.f32.mrb[0].mxu0
    %v394 = vadd.f32 %v156, %v393
    %395 = vmatprep.mubr.bf16.mxu0 0
    %396 = vmatmul.mubr.bf16.gmra.mrb[0].mxu0 %v186
    %v397 = vpop.f32.mrb[0].mxu0
    %v398 = vadd.f32 %v152, %v397
    %v399 = vpop.f32.mrb[0].mxu0
    %v400 = vadd.f32 %v156, %v399
    %v401 = vpop.f32.mrb[0].mxu0
    %v402 = vadd.f32 %v152, %v401
    %v403 = vpop.f32.mrb[0].mxu0
    %v404 = vadd.f32 %v156, %v403
    %405 = vmatprep.mubr.bf16.mxu0 0
    %406 = vmatmul.mubr.bf16.gmra.mrb[0].mxu0 %v187
    %v407 = vpop.f32.mrb[0].mxu0
    %v408 = vadd.f32 %v152, %v407
    %v409 = vpop.f32.mrb[0].mxu0
    %v410 = vadd.f32 %v156, %v409
    %v411 = vpop.f32.mrb[0].mxu0
    %v412 = vadd.f32 %v152, %v411
    %v413 = vpop.f32.mrb[0].mxu0
    %v414 = vadd.f32 %v156, %v413
    %415 = vmatprep.mubr.bf16.mxu0 0
    %416 = vmatmul.mubr.bf16.gmra.mrb[0].mxu0 %v188
    %v417 = vpop.f32.mrb[0].mxu0
    %v418 = vadd.f32 %v152, %v417
    %v419 = vpop.f32.mrb[0].mxu0
    %v420 = vadd.f32 %v156, %v419
    %v421 = vpop.f32.mrb[0].mxu0
    %v422 = vadd.f32 %v152, %v421
    %v423 = vpop.f32.mrb[0].mxu0
    %v424 = vadd.f32 %v156, %v423
    %425 = vdwg.mxu0
    %426 = vmatprep.subr.bf16.mxu0 %v292
    %427 = vmatpush1.bf16.msra.mxu0 %v291
    %428 = vmatprep.subr.bf16.mxu0 %v296
    %429 = vmatpush1.bf16.msra.mxu0 %v295
    %430 = vmatprep.subr.bf16.mxu0 %v300
    %431 = vmatpush1.bf16.msra.mxu0 %v299
    %432 = vmatprep.subr.bf16.mxu0 %v304
    %433 = vmatpush1.bf16.msra.mxu0 %v303
    %434 = vmatprep.subr.bf16.mxu0 %v308
    %435 = vmatpush1.bf16.msra.mxu0 %v307
    %436 = vmatprep.subr.bf16.mxu0 %v312
    %437 = vmatpush1.bf16.msra.mxu0 %v311
    %438 = vmatprep.subr.bf16.mxu0 %v316
    %439 = vmatpush1.bf16.msra.mxu0 %v315
    %440 = vmatprep.subr.bf16.mxu0 %v320
    %441 = vmatpush1.bf16.msra.mxu0 %v319
    %442 = vmatprep.subr.bf16.mxu0 0
    %443 = vmatpush1.bf16.msra.mxu0 0
    %444 = vmatprep.subr.bf16.mxu0 0
    %445 = vmatpush1.bf16.msra.mxu0 0
    %446 = vmatprep.subr.bf16.mxu0 0
    %447 = vmatpush1.bf16.msra.mxu0 0
    %448 = vmatprep.subr.bf16.mxu0 0
    %449 = vmatpush1.bf16.msra.mxu0 0
    %450 = vmatprep.subr.bf16.mxu0 0
    %451 = vmatpush1.bf16.msra.mxu0 0
    %452 = vmatprep.subr.bf16.mxu0 0
    %453 = vmatpush1.bf16.msra.mxu0 0
    %454 = vmatprep.subr.bf16.mxu0 0
    %455 = vmatpush1.bf16.msra.mxu0 0
    %456 = vmatprep.subr.bf16.mxu0 0
    %457 = vmatpush1.bf16.msra.mxu0 0
    %458 = vmatprep.mubr.bf16.mxu0 0
    %459 = vmatmul.mubr.bf16.gmra.mrb[0].mxu0 %v185
    %v460 = vpop.f32.mrb[0].mxu0
    %v461 = vadd.f32 %v160, %v460
    %v462 = vpop.f32.mrb[0].mxu0
    %v463 = vadd.f32 %v164, %v462
    %v464 = vpop.f32.mrb[0].mxu0
    %v465 = vadd.f32 %v160, %v464
    %v466 = vpop.f32.mrb[0].mxu0
    %v467 = vadd.f32 %v164, %v466
    %468 = vmatprep.mubr.bf16.mxu0 0
    %469 = vmatmul.mubr.bf16.gmra.mrb[0].mxu0 %v186
    %v470 = vpop.f32.mrb[0].mxu0
    %v471 = vadd.f32 %v160, %v470
    %v472 = vpop.f32.mrb[0].mxu0
    %v473 = vadd.f32 %v164, %v472
    %v474 = vpop.f32.mrb[0].mxu0
    %v475 = vadd.f32 %v160, %v474
    %v476 = vpop.f32.mrb[0].mxu0
    %v477 = vadd.f32 %v164, %v476
    %478 = vmatprep.mubr.bf16.mxu0 0
    %479 = vmatmul.mubr.bf16.gmra.mrb[0].mxu0 %v187
    %v480 = vpop.f32.mrb[0].mxu0
    %v481 = vadd.f32 %v160, %v480
    %v482 = vpop.f32.mrb[0].mxu0
    %v483 = vadd.f32 %v164, %v482
    %v484 = vpop.f32.mrb[0].mxu0
    %v485 = vadd.f32 %v160, %v484
    %v486 = vpop.f32.mrb[0].mxu0
    %v487 = vadd.f32 %v164, %v486
    %488 = vmatprep.mubr.bf16.mxu0 0
    %489 = vmatmul.mubr.bf16.gmra.mrb[0].mxu0 %v188
    %v490 = vpop.f32.mrb[0].mxu0
    %v491 = vadd.f32 %v160, %v490
    %v492 = vpop.f32.mrb[0].mxu0
    %v493 = vadd.f32 %v164, %v492
    %v494 = vpop.f32.mrb[0].mxu0
    %v495 = vadd.f32 %v160, %v494
    %v496 = vpop.f32.mrb[0].mxu0
    %v497 = vadd.f32 %v164, %v496
    %498 = vdwg.mxu0
    %v499 = vmax.f32 %v388, 0.0
    %v500 = vmax.f32 %v390, 0.0
    %v501 = vmax.f32 %v461, 0.0
    %v502 = vmax.f32 %v463, 0.0
    %v503 = vmax.f32 %v392, 0.0
    %v504 = vmax.f32 %v394, 0.0
    %v505 = vmax.f32 %v465, 0.0
    %v506 = vmax.f32 %v467, 0.0
    %v507 = vmax.f32 %v398, 0.0
    %v508 = vmax.f32 %v400, 0.0
    %v509 = vmax.f32 %v471, 0.0
    %v510 = vmax.f32 %v473, 0.0
    %v511 = vmax.f32 %v402, 0.0
    %v512 = vmax.f32 %v404, 0.0
    %v513 = vmax.f32 %v475, 0.0
    %v514 = vmax.f32 %v477, 0.0
    %v515 = vmax.f32 %v408, 0.0
    %v516 = vmax.f32 %v410, 0.0
    %v517 = vmax.f32 %v481, 0.0
    %v518 = vmax.f32 %v483, 0.0
    %v519 = vmax.f32 %v412, 0.0
    %v520 = vmax.f32 %v414, 0.0
    %v521 = vmax.f32 %v485, 0.0
    %v522 = vmax.f32 %v487, 0.0
    %v523 = vmax.f32 %v418, 0.0
    %v524 = vmax.f32 %v420, 0.0
    %v525 = vmax.f32 %v491, 0.0
    %v526 = vmax.f32 %v493, 0.0
    %v527 = vmax.f32 %v422, 0.0
    %v528 = vmax.f32 %v424, 0.0
    %v529 = vmax.f32 %v495, 0.0
    %v530 = vmax.f32 %v497, 0.0
    %v531 = vpack.c.bf16 %v503, %v499
    %v532 = vpack.c.bf16 %v504, %v500
    %v533 = vpack.c.bf16 %v505, %v501
    %v534 = vpack.c.bf16 %v506, %v502
    %v535 = vpack.c.bf16 %v511, %v507
    %v536 = vpack.c.bf16 %v512, %v508
    %v537 = vpack.c.bf16 %v513, %v509
    %v538 = vpack.c.bf16 %v514, %v510
    %v539 = vpack.c.bf16 %v519, %v515
    %v540 = vpack.c.bf16 %v520, %v516
    %v541 = vpack.c.bf16 %v521, %v517
    %v542 = vpack.c.bf16 %v522, %v518
    %v543 = vpack.c.bf16 %v527, %v523
    %v544 = vpack.c.bf16 %v528, %v524
    %v545 = vpack.c.bf16 %v529, %v525
    %v546 = vpack.c.bf16 %v530, %v526
    %v547 = vld [vmem:[#allocation4] sm:$0xff]
    %v548 = vld [vmem:[#allocation4 + $0x8] sm:$0xff]
    %v549 = vld [vmem:[#allocation4 + $0x10] sm:$0xff]
    %v550 = vld [vmem:[#allocation4 + $0x18] sm:$0xff]
    %v551 = vld [vmem:[#allocation4 + $0x20] sm:$0xff]
    %v552 = vld [vmem:[#allocation4 + $0x28] sm:$0xff]
    %v553 = vld [vmem:[#allocation4 + $0x30] sm:$0xff]
    %v554 = vld [vmem:[#allocation4 + $0x38] sm:$0xff]
    %v555 = vld [vmem:[#allocation4 + $0x40] sm:$0xff]
    %v556 = vld [vmem:[#allocation4 + $0x48] sm:$0xff]
    %v557 = vld [vmem:[#allocation4 + $0x50] sm:$0xff]
    %v558 = vld [vmem:[#allocation4 + $0x58] sm:$0xff]
    %v559 = vld [vmem:[#allocation4 + $0x60] sm:$0xff]
    %v560 = vld [vmem:[#allocation4 + $0x68] sm:$0xff]
    %v561 = vld [vmem:[#allocation4 + $0x70] sm:$0xff]
    %v562 = vld [vmem:[#allocation4 + $0x78] sm:$0xff]
    %v563 = vld [vmem:[#allocation4 + $0x80] sm:$0xff]
    %v564 = vld [vmem:[#allocation4 + $0x88] sm:$0xff]
    %v565 = vld [vmem:[#allocation4 + $0x90] sm:$0xff]
    %v566 = vld [vmem:[#allocation4 + $0x98] sm:$0xff]
    %v567 = vld [vmem:[#allocation4 + $0xa0] sm:$0xff]
    %v568 = vld [vmem:[#allocation4 + $0xa8] sm:$0xff]
    %v569 = vld [vmem:[#allocation4 + $0xb0] sm:$0xff]
    %v570 = vld [vmem:[#allocation4 + $0xb8] sm:$0xff]
    %v571 = vld [vmem:[#allocation4 + $0xc0] sm:$0xff]
    %v572 = vld [vmem:[#allocation4 + $0xc8] sm:$0xff]
    %v573 = vld [vmem:[#allocation4 + $0xd0] sm:$0xff]
    %v574 = vld [vmem:[#allocation4 + $0xd8] sm:$0xff]
    %v575 = vld [vmem:[#allocation4 + $0xe0] sm:$0xff]
    %v576 = vld [vmem:[#allocation4 + $0xe8] sm:$0xff]
    %v577 = vld [vmem:[#allocation4 + $0xf0] sm:$0xff]
    %v578 = vld [vmem:[#allocation4 + $0xf8] sm:$0xff]
    %v579 = vld [vmem:[#allocation4 + $0x100] sm:$0xff]
    %v580 = vld [vmem:[#allocation4 + $0x108] sm:$0xff]
    %v581 = vld [vmem:[#allocation4 + $0x110] sm:$0xff]
    %v582 = vld [vmem:[#allocation4 + $0x118] sm:$0xff]
    %v583 = vld [vmem:[#allocation4 + $0x120] sm:$0xff]
    %v584 = vld [vmem:[#allocation4 + $0x128] sm:$0xff]
    %v585 = vld [vmem:[#allocation4 + $0x130] sm:$0xff]
    %v586 = vld [vmem:[#allocation4 + $0x138] sm:$0xff]
    %v587 = vld [vmem:[#allocation4 + $0x140] sm:$0xff]
    %v588 = vld [vmem:[#allocation4 + $0x148] sm:$0xff]
    %v589 = vld [vmem:[#allocation4 + $0x150] sm:$0xff]
    %v590 = vld [vmem:[#allocation4 + $0x158] sm:$0xff]
    %v591 = vld [vmem:[#allocation4 + $0x160] sm:$0xff]
    %v592 = vld [vmem:[#allocation4 + $0x168] sm:$0xff]
    %v593 = vld [vmem:[#allocation4 + $0x170] sm:$0xff]
    %v594 = vld [vmem:[#allocation4 + $0x178] sm:$0xff]
    %v595 = vld [vmem:[#allocation4 + $0x180] sm:$0xff]
    %v596 = vld [vmem:[#allocation4 + $0x188] sm:$0xff]
    %v597 = vld [vmem:[#allocation4 + $0x190] sm:$0xff]
    %v598 = vld [vmem:[#allocation4 + $0x198] sm:$0xff]
    %v599 = vld [vmem:[#allocation4 + $0x1a0] sm:$0xff]
    %v600 = vld [vmem:[#allocation4 + $0x1a8] sm:$0xff]
    %v601 = vld [vmem:[#allocation4 + $0x1b0] sm:$0xff]
    %v602 = vld [vmem:[#allocation4 + $0x1b8] sm:$0xff]
    %v603 = vld [vmem:[#allocation4 + $0x1c0] sm:$0xff]
    %v604 = vld [vmem:[#allocation4 + $0x1c8] sm:$0xff]
    %v605 = vld [vmem:[#allocation4 + $0x1d0] sm:$0xff]
    %v606 = vld [vmem:[#allocation4 + $0x1d8] sm:$0xff]
    %v607 = vld [vmem:[#allocation4 + $0x1e0] sm:$0xff]
    %v608 = vld [vmem:[#allocation4 + $0x1e8] sm:$0xff]
    %v609 = vld [vmem:[#allocation4 + $0x1f0] sm:$0xff]
    %v610 = vld [vmem:[#allocation4 + $0x1f8] sm:$0xff]
    %v611 = vld [vmem:[#allocation4 + $0x200] sm:$0xff]
    %v612 = vld [vmem:[#allocation4 + $0x208] sm:$0xff]
    %v613 = vld [vmem:[#allocation4 + $0x210] sm:$0xff]
    %v614 = vld [vmem:[#allocation4 + $0x218] sm:$0xff]
    %v615 = vld [vmem:[#allocation4 + $0x220] sm:$0xff]
    %v616 = vld [vmem:[#allocation4 + $0x228] sm:$0xff]
    %v617 = vld [vmem:[#allocation4 + $0x230] sm:$0xff]
    %v618 = vld [vmem:[#allocation4 + $0x238] sm:$0xff]
    %v619 = vld [vmem:[#allocation4 + $0x240] sm:$0xff]
    %v620 = vld [vmem:[#allocation4 + $0x248] sm:$0xff]
    %v621 = vld [vmem:[#allocation4 + $0x250] sm:$0xff]
    %v622 = vld [vmem:[#allocation4 + $0x258] sm:$0xff]
    %v623 = vld [vmem:[#allocation4 + $0x260] sm:$0xff]
    %v624 = vld [vmem:[#allocation4 + $0x268] sm:$0xff]
    %v625 = vld [vmem:[#allocation4 + $0x270] sm:$0xff]
    %v626 = vld [vmem:[#allocation4 + $0x278] sm:$0xff]
    %v627 = vld [vmem:[#allocation4 + $0x280] sm:$0xff]
    %v628 = vld [vmem:[#allocation4 + $0x288] sm:$0xff]
    %v629 = vld [vmem:[#allocation4 + $0x290] sm:$0xff]
    %v630 = vld [vmem:[#allocation4 + $0x298] sm:$0xff]
    %v631 = vld [vmem:[#allocation4 + $0x2a0] sm:$0xff]
    %v632 = vld [vmem:[#allocation4 + $0x2a8] sm:$0xff]
    %v633 = vld [vmem:[#allocation4 + $0x2b0] sm:$0xff]
    %v634 = vld [vmem:[#allocation4 + $0x2b8] sm:$0xff]
    %v635 = vld [vmem:[#allocation4 + $0x2c0] sm:$0xff]
    %v636 = vld [vmem:[#allocation4 + $0x2c8] sm:$0xff]
    %v637 = vld [vmem:[#allocation4 + $0x2d0] sm:$0xff]
    %v638 = vld [vmem:[#allocation4 + $0x2d8] sm:$0xff]
    %v639 = vld [vmem:[#allocation4 + $0x2e0] sm:$0xff]
    %v640 = vld [vmem:[#allocation4 + $0x2e8] sm:$0xff]
    %v641 = vld [vmem:[#allocation4 + $0x2f0] sm:$0xff]
    %v642 = vld [vmem:[#allocation4 + $0x2f8] sm:$0xff]
    %v643 = vld [vmem:[#allocation4 + $0x300] sm:$0xff]
    %v644 = vld [vmem:[#allocation4 + $0x308] sm:$0xff]
    %v645 = vld [vmem:[#allocation4 + $0x310] sm:$0xff]
    %v646 = vld [vmem:[#allocation4 + $0x318] sm:$0xff]
    %v647 = vld [vmem:[#allocation4 + $0x320] sm:$0xff]
    %v648 = vld [vmem:[#allocation4 + $0x328] sm:$0xff]
    %v649 = vld [vmem:[#allocation4 + $0x330] sm:$0xff]
    %v650 = vld [vmem:[#allocation4 + $0x338] sm:$0xff]
    %v651 = vld [vmem:[#allocation4 + $0x340] sm:$0xff]
    %v652 = vld [vmem:[#allocation4 + $0x348] sm:$0xff]
    %v653 = vld [vmem:[#allocation4 + $0x350] sm:$0xff]
    %v654 = vld [vmem:[#allocation4 + $0x358] sm:$0xff]
    %v655 = vld [vmem:[#allocation4 + $0x360] sm:$0xff]
    %v656 = vld [vmem:[#allocation4 + $0x368] sm:$0xff]
    %v657 = vld [vmem:[#allocation4 + $0x370] sm:$0xff]
    %v658 = vld [vmem:[#allocation4 + $0x378] sm:$0xff]
    %v659 = vld [vmem:[#allocation4 + $0x380] sm:$0xff]
    %v660 = vld [vmem:[#allocation4 + $0x388] sm:$0xff]
    %v661 = vld [vmem:[#allocation4 + $0x390] sm:$0xff]
    %v662 = vld [vmem:[#allocation4 + $0x398] sm:$0xff]
    %v663 = vld [vmem:[#allocation4 + $0x3a0] sm:$0xff]
    %v664 = vld [vmem:[#allocation4 + $0x3a8] sm:$0xff]
    %v665 = vld [vmem:[#allocation4 + $0x3b0] sm:$0xff]
    %v666 = vld [vmem:[#allocation4 + $0x3b8] sm:$0xff]
    %v667 = vld [vmem:[#allocation4 + $0x3c0] sm:$0xff]
    %v668 = vld [vmem:[#allocation4 + $0x3c8] sm:$0xff]
    %v669 = vld [vmem:[#allocation4 + $0x3d0] sm:$0xff]
    %v670 = vld [vmem:[#allocation4 + $0x3d8] sm:$0xff]
    %v671 = vld [vmem:[#allocation4 + $0x3e0] sm:$0xff]
    %v672 = vld [vmem:[#allocation4 + $0x3e8] sm:$0xff]
    %v673 = vld [vmem:[#allocation4 + $0x3f0] sm:$0xff]
    %v674 = vld [vmem:[#allocation4 + $0x3f8] sm:$0xff]
    %v675 = vld [vmem:[%s4] sm:$0xf]
    %v677 = vlaneseq
    %v678 = vshrl.u32 %v677, 7
    %v679 = vsub.s32 0, %v678
    %v680 = vrot.slane %v675, %v679
    %v681 = vlaneseq
    %v682 = vshrl.u32 %v681, 7
    %v683 = vsub.s32 1, %v682
    %v684 = vrot.slane %v675, %v683
    %v685 = vlaneseq
    %v686 = vshrl.u32 %v685, 7
    %v687 = vsub.s32 2, %v686
    %v688 = vrot.slane %v675, %v687
    %v689 = vlaneseq
    %v690 = vshrl.u32 %v689, 7
    %v691 = vsub.s32 3, %v690
    %v692 = vrot.slane %v675, %v691
    %v825 = vunpack.c.l.b16 %v547
    %v826 = vunpack.c.h.b16 %v547
    %v827 = vunpack.c.l.b16 %v548
    %v828 = vunpack.c.h.b16 %v548
    %v829 = vunpack.c.l.b16 %v549
    %v830 = vunpack.c.h.b16 %v549
    %v831 = vunpack.c.l.b16 %v550
    %v832 = vunpack.c.h.b16 %v550
    %v833 = vunpack.c.l.b16 %v551
    %v834 = vunpack.c.h.b16 %v551
    %v835 = vunpack.c.l.b16 %v552
    %v836 = vunpack.c.h.b16 %v552
    %v837 = vunpack.c.l.b16 %v553
    %v838 = vunpack.c.h.b16 %v553
    %v839 = vunpack.c.l.b16 %v554
    %v840 = vunpack.c.h.b16 %v554
    %v841 = vunpack.c.l.b16 %v555
    %v842 = vunpack.c.h.b16 %v555
    %v843 = vunpack.c.l.b16 %v556
    %v844 = vunpack.c.h.b16 %v556
    %v845 = vunpack.c.l.b16 %v557
    %v846 = vunpack.c.h.b16 %v557
    %v847 = vunpack.c.l.b16 %v558
    %v848 = vunpack.c.h.b16 %v558
    %v849 = vunpack.c.l.b16 %v559
    %v850 = vunpack.c.h.b16 %v559
    %v851 = vunpack.c.l.b16 %v560
    %v852 = vunpack.c.h.b16 %v560
    %v853 = vunpack.c.l.b16 %v561
    %v854 = vunpack.c.h.b16 %v561
    %v855 = vunpack.c.l.b16 %v562
    %v856 = vunpack.c.h.b16 %v562
    %v857 = vunpack.c.l.b16 %v563
    %v858 = vunpack.c.h.b16 %v563
    %v859 = vunpack.c.l.b16 %v564
    %v860 = vunpack.c.h.b16 %v564
    %v861 = vunpack.c.l.b16 %v565
    %v862 = vunpack.c.h.b16 %v565
    %v863 = vunpack.c.l.b16 %v566
    %v864 = vunpack.c.h.b16 %v566
    %v865 = vunpack.c.l.b16 %v567
    %v866 = vunpack.c.h.b16 %v567
    %v867 = vunpack.c.l.b16 %v568
    %v868 = vunpack.c.h.b16 %v568
    %v869 = vunpack.c.l.b16 %v569
    %v870 = vunpack.c.h.b16 %v569
    %v871 = vunpack.c.l.b16 %v570
    %v872 = vunpack.c.h.b16 %v570
    %v873 = vunpack.c.l.b16 %v571
    %v874 = vunpack.c.h.b16 %v571
    %v875 = vunpack.c.l.b16 %v572
    %v876 = vunpack.c.h.b16 %v572
    %v877 = vunpack.c.l.b16 %v573
    %v878 = vunpack.c.h.b16 %v573
    %v879 = vunpack.c.l.b16 %v574
    %v880 = vunpack.c.h.b16 %v574
    %v881 = vunpack.c.l.b16 %v575
    %v882 = vunpack.c.h.b16 %v575
    %v883 = vunpack.c.l.b16 %v576
    %v884 = vunpack.c.h.b16 %v576
    %v885 = vunpack.c.l.b16 %v577
    %v886 = vunpack.c.h.b16 %v577
    %v887 = vunpack.c.l.b16 %v578
    %v888 = vunpack.c.h.b16 %v578
    %v889 = vunpack.c.l.b16 %v579
    %v890 = vunpack.c.h.b16 %v579
    %v891 = vunpack.c.l.b16 %v580
    %v892 = vunpack.c.h.b16 %v580
    %v893 = vunpack.c.l.b16 %v581
    %v894 = vunpack.c.h.b16 %v581
    %v895 = vunpack.c.l.b16 %v582
    %v896 = vunpack.c.h.b16 %v582
    %v897 = vunpack.c.l.b16 %v583
    %v898 = vunpack.c.h.b16 %v583
    %v899 = vunpack.c.l.b16 %v584
    %v900 = vunpack.c.h.b16 %v584
    %v901 = vunpack.c.l.b16 %v585
    %v902 = vunpack.c.h.b16 %v585
    %v903 = vunpack.c.l.b16 %v586
    %v904 = vunpack.c.h.b16 %v586
    %v905 = vunpack.c.l.b16 %v587
    %v906 = vunpack.c.h.b16 %v587
    %v907 = vunpack.c.l.b16 %v588
    %v908 = vunpack.c.h.b16 %v588
    %v909 = vunpack.c.l.b16 %v589
    %v910 = vunpack.c.h.b16 %v589
    %v911 = vunpack.c.l.b16 %v590
    %v912 = vunpack.c.h.b16 %v590
    %v913 = vunpack.c.l.b16 %v591
    %v914 = vunpack.c.h.b16 %v591
    %v915 = vunpack.c.l.b16 %v592
    %v916 = vunpack.c.h.b16 %v592
    %v917 = vunpack.c.l.b16 %v593
    %v918 = vunpack.c.h.b16 %v593
    %v919 = vunpack.c.l.b16 %v594
    %v920 = vunpack.c.h.b16 %v594
    %v921 = vunpack.c.l.b16 %v595
    %v922 = vunpack.c.h.b16 %v595
    %v923 = vunpack.c.l.b16 %v596
    %v924 = vunpack.c.h.b16 %v596
    %v925 = vunpack.c.l.b16 %v597
    %v926 = vunpack.c.h.b16 %v597
    %v927 = vunpack.c.l.b16 %v598
    %v928 = vunpack.c.h.b16 %v598
    %v929 = vunpack.c.l.b16 %v599
    %v930 = vunpack.c.h.b16 %v599
    %v931 = vunpack.c.l.b16 %v600
    %v932 = vunpack.c.h.b16 %v600
    %v933 = vunpack.c.l.b16 %v601
    %v934 = vunpack.c.h.b16 %v601
    %v935 = vunpack.c.l.b16 %v602
    %v936 = vunpack.c.h.b16 %v602
    %v937 = vunpack.c.l.b16 %v603
    %v938 = vunpack.c.h.b16 %v603
    %v939 = vunpack.c.l.b16 %v604
    %v940 = vunpack.c.h.b16 %v604
    %v941 = vunpack.c.l.b16 %v605
    %v942 = vunpack.c.h.b16 %v605
    %v943 = vunpack.c.l.b16 %v606
    %v944 = vunpack.c.h.b16 %v606
    %v945 = vunpack.c.l.b16 %v607
    %v946 = vunpack.c.h.b16 %v607
    %v947 = vunpack.c.l.b16 %v608
    %v948 = vunpack.c.h.b16 %v608
    %v949 = vunpack.c.l.b16 %v609
    %v950 = vunpack.c.h.b16 %v609
    %v951 = vunpack.c.l.b16 %v610
    %v952 = vunpack.c.h.b16 %v610
    %v953 = vunpack.c.l.b16 %v611
    %v954 = vunpack.c.h.b16 %v611
    %v955 = vunpack.c.l.b16 %v612
    %v956 = vunpack.c.h.b16 %v612
    %v957 = vunpack.c.l.b16 %v613
    %v958 = vunpack.c.h.b16 %v613
    %v959 = vunpack.c.l.b16 %v614
    %v960 = vunpack.c.h.b16 %v614
    %v961 = vunpack.c.l.b16 %v615
    %v962 = vunpack.c.h.b16 %v615
    %v963 = vunpack.c.l.b16 %v616
    %v964 = vunpack.c.h.b16 %v616
    %v965 = vunpack.c.l.b16 %v617
    %v966 = vunpack.c.h.b16 %v617
    %v967 = vunpack.c.l.b16 %v618
    %v968 = vunpack.c.h.b16 %v618
    %v969 = vunpack.c.l.b16 %v619
    %v970 = vunpack.c.h.b16 %v619
    %v971 = vunpack.c.l.b16 %v620
    %v972 = vunpack.c.h.b16 %v620
    %v973 = vunpack.c.l.b16 %v621
    %v974 = vunpack.c.h.b16 %v621
    %v975 = vunpack.c.l.b16 %v622
    %v976 = vunpack.c.h.b16 %v622
    %v977 = vunpack.c.l.b16 %v623
    %v978 = vunpack.c.h.b16 %v623
    %v979 = vunpack.c.l.b16 %v624
    %v980 = vunpack.c.h.b16 %v624
    %v981 = vunpack.c.l.b16 %v625
    %v982 = vunpack.c.h.b16 %v625
    %v983 = vunpack.c.l.b16 %v626
    %v984 = vunpack.c.h.b16 %v626
    %v985 = vunpack.c.l.b16 %v627
    %v986 = vunpack.c.h.b16 %v627
    %v987 = vunpack.c.l.b16 %v628
    %v988 = vunpack.c.h.b16 %v628
    %v989 = vunpack.c.l.b16 %v629
    %v990 = vunpack.c.h.b16 %v629
    %v991 = vunpack.c.l.b16 %v630
    %v992 = vunpack.c.h.b16 %v630
    %v993 = vunpack.c.l.b16 %v631
    %v994 = vunpack.c.h.b16 %v631
    %v995 = vunpack.c.l.b16 %v632
    %v996 = vunpack.c.h.b16 %v632
    %v997 = vunpack.c.l.b16 %v633
    %v998 = vunpack.c.h.b16 %v633
    %v999 = vunpack.c.l.b16 %v634
    %v1000 = vunpack.c.h.b16 %v634
    %v1001 = vunpack.c.l.b16 %v635
    %v1002 = vunpack.c.h.b16 %v635
    %v1003 = vunpack.c.l.b16 %v636
    %v1004 = vunpack.c.h.b16 %v636
    %v1005 = vunpack.c.l.b16 %v637
    %v1006 = vunpack.c.h.b16 %v637
    %v1007 = vunpack.c.l.b16 %v638
    %v1008 = vunpack.c.h.b16 %v638
    %v1009 = vunpack.c.l.b16 %v639
    %v1010 = vunpack.c.h.b16 %v639
    %v1011 = vunpack.c.l.b16 %v640
    %v1012 = vunpack.c.h.b16 %v640
    %v1013 = vunpack.c.l.b16 %v641
    %v1014 = vunpack.c.h.b16 %v641
    %v1015 = vunpack.c.l.b16 %v642
    %v1016 = vunpack.c.h.b16 %v642
    %v1017 = vunpack.c.l.b16 %v643
    %v1018 = vunpack.c.h.b16 %v643
    %v1019 = vunpack.c.l.b16 %v644
    %v1020 = vunpack.c.h.b16 %v644
    %v1021 = vunpack.c.l.b16 %v645
    %v1022 = vunpack.c.h.b16 %v645
    %v1023 = vunpack.c.l.b16 %v646
    %v1024 = vunpack.c.h.b16 %v646
    %v1025 = vunpack.c.l.b16 %v647
    %v1026 = vunpack.c.h.b16 %v647
    %v1027 = vunpack.c.l.b16 %v648
    %v1028 = vunpack.c.h.b16 %v648
    %v1029 = vunpack.c.l.b16 %v649
    %v1030 = vunpack.c.h.b16 %v649
    %v1031 = vunpack.c.l.b16 %v650
    %v1032 = vunpack.c.h.b16 %v650
    %v1033 = vunpack.c.l.b16 %v651
    %v1034 = vunpack.c.h.b16 %v651
    %v1035 = vunpack.c.l.b16 %v652
    %v1036 = vunpack.c.h.b16 %v652
    %v1037 = vunpack.c.l.b16 %v653
    %v1038 = vunpack.c.h.b16 %v653
    %v1039 = vunpack.c.l.b16 %v654
    %v1040 = vunpack.c.h.b16 %v654
    %v1041 = vunpack.c.l.b16 %v655
    %v1042 = vunpack.c.h.b16 %v655
    %v1043 = vunpack.c.l.b16 %v656
    %v1044 = vunpack.c.h.b16 %v656
    %v1045 = vunpack.c.l.b16 %v657
    %v1046 = vunpack.c.h.b16 %v657
    %v1047 = vunpack.c.l.b16 %v658
    %v1048 = vunpack.c.h.b16 %v658
    %v1049 = vunpack.c.l.b16 %v659
    %v1050 = vunpack.c.h.b16 %v659
    %v1051 = vunpack.c.l.b16 %v660
    %v1052 = vunpack.c.h.b16 %v660
    %v1053 = vunpack.c.l.b16 %v661
    %v1054 = vunpack.c.h.b16 %v661
    %v1055 = vunpack.c.l.b16 %v662
    %v1056 = vunpack.c.h.b16 %v662
    %v1057 = vunpack.c.l.b16 %v663
    %v1058 = vunpack.c.h.b16 %v663
    %v1059 = vunpack.c.l.b16 %v664
    %v1060 = vunpack.c.h.b16 %v664
    %v1061 = vunpack.c.l.b16 %v665
    %v1062 = vunpack.c.h.b16 %v665
    %v1063 = vunpack.c.l.b16 %v666
    %v1064 = vunpack.c.h.b16 %v666
    %v1065 = vunpack.c.l.b16 %v667
    %v1066 = vunpack.c.h.b16 %v667
    %v1067 = vunpack.c.l.b16 %v668
    %v1068 = vunpack.c.h.b16 %v668
    %v1069 = vunpack.c.l.b16 %v669
    %v1070 = vunpack.c.h.b16 %v669
    %v1071 = vunpack.c.l.b16 %v670
    %v1072 = vunpack.c.h.b16 %v670
    %v1073 = vunpack.c.l.b16 %v671
    %v1074 = vunpack.c.h.b16 %v671
    %v1075 = vunpack.c.l.b16 %v672
    %v1076 = vunpack.c.h.b16 %v672
    %v1077 = vunpack.c.l.b16 %v673
    %v1078 = vunpack.c.h.b16 %v673
    %v1079 = vunpack.c.l.b16 %v674
    %v1080 = vunpack.c.h.b16 %v674
    %v1081 = vpack.c.b16 %v829, %v825
    %v1082 = vpack.c.b16 %v830, %v826
    %v1083 = vpack.c.b16 %v831, %v827
    %v1084 = vpack.c.b16 %v832, %v828
    %v1085 = vpack.c.b16 %v837, %v833
    %v1086 = vpack.c.b16 %v838, %v834
    %v1087 = vpack.c.b16 %v839, %v835
    %v1088 = vpack.c.b16 %v840, %v836
    %v1089 = vpack.c.b16 %v845, %v841
    %v1090 = vpack.c.b16 %v846, %v842
    %v1091 = vpack.c.b16 %v847, %v843
    %v1092 = vpack.c.b16 %v848, %v844
    %v1093 = vpack.c.b16 %v853, %v849
    %v1094 = vpack.c.b16 %v854, %v850
    %v1095 = vpack.c.b16 %v855, %v851
    %v1096 = vpack.c.b16 %v856, %v852
    %v1097 = vpack.c.b16 %v861, %v857
    %v1098 = vpack.c.b16 %v862, %v858
    %v1099 = vpack.c.b16 %v863, %v859
    %v1100 = vpack.c.b16 %v864, %v860
    %v1101 = vpack.c.b16 %v869, %v865
    %v1102 = vpack.c.b16 %v870, %v866
    %v1103 = vpack.c.b16 %v871, %v867
    %v1104 = vpack.c.b16 %v872, %v868
    %v1105 = vpack.c.b16 %v877, %v873
    %v1106 = vpack.c.b16 %v878, %v874
    %v1107 = vpack.c.b16 %v879, %v875
    %v1108 = vpack.c.b16 %v880, %v876
    %v1109 = vpack.c.b16 %v885, %v881
    %v1110 = vpack.c.b16 %v886, %v882
    %v1111 = vpack.c.b16 %v887, %v883
    %v1112 = vpack.c.b16 %v888, %v884
    %v1113 = vpack.c.b16 %v893, %v889
    %v1114 = vpack.c.b16 %v894, %v890
    %v1115 = vpack.c.b16 %v895, %v891
    %v1116 = vpack.c.b16 %v896, %v892
    %v1117 = vpack.c.b16 %v901, %v897
    %v1118 = vpack.c.b16 %v902, %v898
    %v1119 = vpack.c.b16 %v903, %v899
    %v1120 = vpack.c.b16 %v904, %v900
    %v1121 = vpack.c.b16 %v909, %v905
    %v1122 = vpack.c.b16 %v910, %v906
    %v1123 = vpack.c.b16 %v911, %v907
    %v1124 = vpack.c.b16 %v912, %v908
    %v1125 = vpack.c.b16 %v917, %v913
    %v1126 = vpack.c.b16 %v918, %v914
    %v1127 = vpack.c.b16 %v919, %v915
    %v1128 = vpack.c.b16 %v920, %v916
    %v1129 = vpack.c.b16 %v925, %v921
    %v1130 = vpack.c.b16 %v926, %v922
    %v1131 = vpack.c.b16 %v927, %v923
    %v1132 = vpack.c.b16 %v928, %v924
    %v1133 = vpack.c.b16 %v933, %v929
    %v1134 = vpack.c.b16 %v934, %v930
    %v1135 = vpack.c.b16 %v935, %v931
    %v1136 = vpack.c.b16 %v936, %v932
    %v1137 = vpack.c.b16 %v941, %v937
    %v1138 = vpack.c.b16 %v942, %v938
    %v1139 = vpack.c.b16 %v943, %v939
    %v1140 = vpack.c.b16 %v944, %v940
    %v1141 = vpack.c.b16 %v949, %v945
    %v1142 = vpack.c.b16 %v950, %v946
    %v1143 = vpack.c.b16 %v951, %v947
    %v1144 = vpack.c.b16 %v952, %v948
    %v1145 = vpack.c.b16 %v957, %v953
    %v1146 = vpack.c.b16 %v958, %v954
    %v1147 = vpack.c.b16 %v959, %v955
    %v1148 = vpack.c.b16 %v960, %v956
    %v1149 = vpack.c.b16 %v965, %v961
    %v1150 = vpack.c.b16 %v966, %v962
    %v1151 = vpack.c.b16 %v967, %v963
    %v1152 = vpack.c.b16 %v968, %v964
    %v1153 = vpack.c.b16 %v973, %v969
    %v1154 = vpack.c.b16 %v974, %v970
    %v1155 = vpack.c.b16 %v975, %v971
    %v1156 = vpack.c.b16 %v976, %v972
    %v1157 = vpack.c.b16 %v981, %v977
    %v1158 = vpack.c.b16 %v982, %v978
    %v1159 = vpack.c.b16 %v983, %v979
    %v1160 = vpack.c.b16 %v984, %v980
    %v1161 = vpack.c.b16 %v989, %v985
    %v1162 = vpack.c.b16 %v990, %v986
    %v1163 = vpack.c.b16 %v991, %v987
    %v1164 = vpack.c.b16 %v992, %v988
    %v1165 = vpack.c.b16 %v997, %v993
    %v1166 = vpack.c.b16 %v998, %v994
    %v1167 = vpack.c.b16 %v999, %v995
    %v1168 = vpack.c.b16 %v1000, %v996
    %v1169 = vpack.c.b16 %v1005, %v1001
    %v1170 = vpack.c.b16 %v1006, %v1002
    %v1171 = vpack.c.b16 %v1007, %v1003
    %v1172 = vpack.c.b16 %v1008, %v1004
    %v1173 = vpack.c.b16 %v1013, %v1009
    %v1174 = vpack.c.b16 %v1014, %v1010
    %v1175 = vpack.c.b16 %v1015, %v1011
    %v1176 = vpack.c.b16 %v1016, %v1012
    %v1177 = vpack.c.b16 %v1021, %v1017
    %v1178 = vpack.c.b16 %v1022, %v1018
    %v1179 = vpack.c.b16 %v1023, %v1019
    %v1180 = vpack.c.b16 %v1024, %v1020
    %v1181 = vpack.c.b16 %v1029, %v1025
    %v1182 = vpack.c.b16 %v1030, %v1026
    %v1183 = vpack.c.b16 %v1031, %v1027
    %v1184 = vpack.c.b16 %v1032, %v1028
    %v1185 = vpack.c.b16 %v1037, %v1033
    %v1186 = vpack.c.b16 %v1038, %v1034
    %v1187 = vpack.c.b16 %v1039, %v1035
    %v1188 = vpack.c.b16 %v1040, %v1036
    %v1189 = vpack.c.b16 %v1045, %v1041
    %v1190 = vpack.c.b16 %v1046, %v1042
    %v1191 = vpack.c.b16 %v1047, %v1043
    %v1192 = vpack.c.b16 %v1048, %v1044
    %v1193 = vpack.c.b16 %v1053, %v1049
    %v1194 = vpack.c.b16 %v1054, %v1050
    %v1195 = vpack.c.b16 %v1055, %v1051
    %v1196 = vpack.c.b16 %v1056, %v1052
    %v1197 = vpack.c.b16 %v1061, %v1057
    %v1198 = vpack.c.b16 %v1062, %v1058
    %v1199 = vpack.c.b16 %v1063, %v1059
    %v1200 = vpack.c.b16 %v1064, %v1060
    %v1201 = vpack.c.b16 %v1069, %v1065
    %v1202 = vpack.c.b16 %v1070, %v1066
    %v1203 = vpack.c.b16 %v1071, %v1067
    %v1204 = vpack.c.b16 %v1072, %v1068
    %v1205 = vpack.c.b16 %v1077, %v1073
    %v1206 = vpack.c.b16 %v1078, %v1074
    %v1207 = vpack.c.b16 %v1079, %v1075
    %v1208 = vpack.c.b16 %v1080, %v1076
    %1337 = vmatprep.subr.bf16.mxu0 %v1082
    %1338 = vmatpush1.bf16.msra.mxu0 %v1081
    %1339 = vmatprep.subr.bf16.mxu0 %v1086
    %1340 = vmatpush1.bf16.msra.mxu0 %v1085
    %1341 = vmatprep.subr.bf16.mxu0 %v1090
    %1342 = vmatpush1.bf16.msra.mxu0 %v1089
    %1343 = vmatprep.subr.bf16.mxu0 %v1094
    %1344 = vmatpush1.bf16.msra.mxu0 %v1093
    %1345 = vmatprep.subr.bf16.mxu0 %v1098
    %1346 = vmatpush1.bf16.msra.mxu0 %v1097
    %1347 = vmatprep.subr.bf16.mxu0 %v1102
    %1348 = vmatpush1.bf16.msra.mxu0 %v1101
    %1349 = vmatprep.subr.bf16.mxu0 %v1106
    %1350 = vmatpush1.bf16.msra.mxu0 %v1105
    %1351 = vmatprep.subr.bf16.mxu0 %v1110
    %1352 = vmatpush1.bf16.msra.mxu0 %v1109
    %1353 = vmatprep.subr.bf16.mxu0 %v1114
    %1354 = vmatpush1.bf16.msra.mxu0 %v1113
    %1355 = vmatprep.subr.bf16.mxu0 %v1118
    %1356 = vmatpush1.bf16.msra.mxu0 %v1117
    %1357 = vmatprep.subr.bf16.mxu0 %v1122
    %1358 = vmatpush1.bf16.msra.mxu0 %v1121
    %1359 = vmatprep.subr.bf16.mxu0 %v1126
    %1360 = vmatpush1.bf16.msra.mxu0 %v1125
    %1361 = vmatprep.subr.bf16.mxu0 %v1130
    %1362 = vmatpush1.bf16.msra.mxu0 %v1129
    %1363 = vmatprep.subr.bf16.mxu0 %v1134
    %1364 = vmatpush1.bf16.msra.mxu0 %v1133
    %1365 = vmatprep.subr.bf16.mxu0 %v1138
    %1366 = vmatpush1.bf16.msra.mxu0 %v1137
    %1367 = vmatprep.subr.bf16.mxu0 %v1142
    %1368 = vmatpush1.bf16.msra.mxu0 %v1141
    %1369 = vmatprep.mubr.bf16.mxu0 %v532
    %1370 = vmatmul.mubr.bf16.gmra.mrb[0].mxu0 %v531
    %v1371 = vpop.f32.mrb[0].mxu0
    %v1372 = vadd.f32 %v680, %v1371
    %v1373 = vpop.f32.mrb[0].mxu0
    %v1374 = vadd.f32 %v684, %v1373
    %v1375 = vpop.f32.mrb[0].mxu0
    %v1376 = vadd.f32 %v680, %v1375
    %v1377 = vpop.f32.mrb[0].mxu0
    %v1378 = vadd.f32 %v684, %v1377
    %1379 = vmatprep.mubr.bf16.mxu0 %v536
    %1380 = vmatmul.mubr.bf16.gmra.mrb[0].mxu0 %v535
    %v1381 = vpop.f32.mrb[0].mxu0
    %v1382 = vadd.f32 %v680, %v1381
    %v1383 = vpop.f32.mrb[0].mxu0
    %v1384 = vadd.f32 %v684, %v1383
    %v1385 = vpop.f32.mrb[0].mxu0
    %v1386 = vadd.f32 %v680, %v1385
    %v1387 = vpop.f32.mrb[0].mxu0
    %v1388 = vadd.f32 %v684, %v1387
    %1389 = vmatprep.mubr.bf16.mxu0 %v540
    %1390 = vmatmul.mubr.bf16.gmra.mrb[0].mxu0 %v539
    %v1391 = vpop.f32.mrb[0].mxu0
    %v1392 = vadd.f32 %v680, %v1391
    %v1393 = vpop.f32.mrb[0].mxu0
    %v1394 = vadd.f32 %v684, %v1393
    %v1395 = vpop.f32.mrb[0].mxu0
    %v1396 = vadd.f32 %v680, %v1395
    %v1397 = vpop.f32.mrb[0].mxu0
    %v1398 = vadd.f32 %v684, %v1397
    %1399 = vmatprep.mubr.bf16.mxu0 %v544
    %1400 = vmatmul.mubr.bf16.gmra.mrb[0].mxu0 %v543
    %v1401 = vpop.f32.mrb[0].mxu0
    %v1402 = vadd.f32 %v680, %v1401
    %v1403 = vpop.f32.mrb[0].mxu0
    %v1404 = vadd.f32 %v684, %v1403
    %v1405 = vpop.f32.mrb[0].mxu0
    %v1406 = vadd.f32 %v680, %v1405
    %v1407 = vpop.f32.mrb[0].mxu0
    %v1408 = vadd.f32 %v684, %v1407
    %1409 = vdwg.mxu0
    %1410 = vmatprep.subr.bf16.mxu0 %v1146
    %1411 = vmatpush1.bf16.msra.mxu0 %v1145
    %1412 = vmatprep.subr.bf16.mxu0 %v1150
    %1413 = vmatpush1.bf16.msra.mxu0 %v1149
    %1414 = vmatprep.subr.bf16.mxu0 %v1154
    %1415 = vmatpush1.bf16.msra.mxu0 %v1153
    %1416 = vmatprep.subr.bf16.mxu0 %v1158
    %1417 = vmatpush1.bf16.msra.mxu0 %v1157
    %1418 = vmatprep.subr.bf16.mxu0 %v1162
    %1419 = vmatpush1.bf16.msra.mxu0 %v1161
    %1420 = vmatprep.subr.bf16.mxu0 %v1166
    %1421 = vmatpush1.bf16.msra.mxu0 %v1165
    %1422 = vmatprep.subr.bf16.mxu0 %v1170
    %1423 = vmatpush1.bf16.msra.mxu0 %v1169
    %1424 = vmatprep.subr.bf16.mxu0 %v1174
    %1425 = vmatpush1.bf16.msra.mxu0 %v1173
    %1426 = vmatprep.subr.bf16.mxu0 %v1178
    %1427 = vmatpush1.bf16.msra.mxu0 %v1177
    %1428 = vmatprep.subr.bf16.mxu0 %v1182
    %1429 = vmatpush1.bf16.msra.mxu0 %v1181
    %1430 = vmatprep.subr.bf16.mxu0 %v1186
    %1431 = vmatpush1.bf16.msra.mxu0 %v1185
    %1432 = vmatprep.subr.bf16.mxu0 %v1190
    %1433 = vmatpush1.bf16.msra.mxu0 %v1189
    %1434 = vmatprep.subr.bf16.mxu0 %v1194
    %1435 = vmatpush1.bf16.msra.mxu0 %v1193
    %1436 = vmatprep.subr.bf16.mxu0 %v1198
    %1437 = vmatpush1.bf16.msra.mxu0 %v1197
    %1438 = vmatprep.subr.bf16.mxu0 %v1202
    %1439 = vmatpush1.bf16.msra.mxu0 %v1201
    %1440 = vmatprep.subr.bf16.mxu0 %v1206
    %1441 = vmatpush1.bf16.msra.mxu0 %v1205
    %1442 = vmatprep.mubr.bf16.mxu0 %v534
    %1443 = vmatmul.mubr.bf16.gmra.mrb[0].mxu0 %v533
    %v1444 = vpop.f32.mrb[0].mxu0
    %v1445 = vadd.f32 %v1372, %v1444
    %v1446 = vpop.f32.mrb[0].mxu0
    %v1447 = vadd.f32 %v1374, %v1446
    %v1448 = vpop.f32.mrb[0].mxu0
    %v1449 = vadd.f32 %v1376, %v1448
    %v1450 = vpop.f32.mrb[0].mxu0
    %v1451 = vadd.f32 %v1378, %v1450
    %1452 = vmatprep.mubr.bf16.mxu0 %v538
    %1453 = vmatmul.mubr.bf16.gmra.mrb[0].mxu0 %v537
    %v1454 = vpop.f32.mrb[0].mxu0
    %v1455 = vadd.f32 %v1382, %v1454
    %v1456 = vpop.f32.mrb[0].mxu0
    %v1457 = vadd.f32 %v1384, %v1456
    %v1458 = vpop.f32.mrb[0].mxu0
    %v1459 = vadd.f32 %v1386, %v1458
    %v1460 = vpop.f32.mrb[0].mxu0
    %v1461 = vadd.f32 %v1388, %v1460
    %1462 = vmatprep.mubr.bf16.mxu0 %v542
    %1463 = vmatmul.mubr.bf16.gmra.mrb[0].mxu0 %v541
    %v1464 = vpop.f32.mrb[0].mxu0
    %v1465 = vadd.f32 %v1392, %v1464
    %v1466 = vpop.f32.mrb[0].mxu0
    %v1467 = vadd.f32 %v1394, %v1466
    %v1468 = vpop.f32.mrb[0].mxu0
    %v1469 = vadd.f32 %v1396, %v1468
    %v1470 = vpop.f32.mrb[0].mxu0
    %v1471 = vadd.f32 %v1398, %v1470
    %1472 = vmatprep.mubr.bf16.mxu0 %v546
    %1473 = vmatmul.mubr.bf16.gmra.mrb[0].mxu0 %v545
    %v1474 = vpop.f32.mrb[0].mxu0
    %v1475 = vadd.f32 %v1402, %v1474
    %v1476 = vpop.f32.mrb[0].mxu0
    %v1477 = vadd.f32 %v1404, %v1476
    %v1478 = vpop.f32.mrb[0].mxu0
    %v1479 = vadd.f32 %v1406, %v1478
    %v1480 = vpop.f32.mrb[0].mxu0
    %v1481 = vadd.f32 %v1408, %v1480
    %1482 = vdwg.mxu0
    %1483 = vmatprep.subr.bf16.mxu0 %v1084
    %1484 = vmatpush1.bf16.msra.mxu0 %v1083
    %1485 = vmatprep.subr.bf16.mxu0 %v1088
    %1486 = vmatpush1.bf16.msra.mxu0 %v1087
    %1487 = vmatprep.subr.bf16.mxu0 %v1092
    %1488 = vmatpush1.bf16.msra.mxu0 %v1091
    %1489 = vmatprep.subr.bf16.mxu0 %v1096
    %1490 = vmatpush1.bf16.msra.mxu0 %v1095
    %1491 = vmatprep.subr.bf16.mxu0 %v1100
    %1492 = vmatpush1.bf16.msra.mxu0 %v1099
    %1493 = vmatprep.subr.bf16.mxu0 %v1104
    %1494 = vmatpush1.bf16.msra.mxu0 %v1103
    %1495 = vmatprep.subr.bf16.mxu0 %v1108
    %1496 = vmatpush1.bf16.msra.mxu0 %v1107
    %1497 = vmatprep.subr.bf16.mxu0 %v1112
    %1498 = vmatpush1.bf16.msra.mxu0 %v1111
    %1499 = vmatprep.subr.bf16.mxu0 %v1116
    %1500 = vmatpush1.bf16.msra.mxu0 %v1115
    %1501 = vmatprep.subr.bf16.mxu0 %v1120
    %1502 = vmatpush1.bf16.msra.mxu0 %v1119
    %1503 = vmatprep.subr.bf16.mxu0 %v1124
    %1504 = vmatpush1.bf16.msra.mxu0 %v1123
    %1505 = vmatprep.subr.bf16.mxu0 %v1128
    %1506 = vmatpush1.bf16.msra.mxu0 %v1127
    %1507 = vmatprep.subr.bf16.mxu0 %v1132
    %1508 = vmatpush1.bf16.msra.mxu0 %v1131
    %1509 = vmatprep.subr.bf16.mxu0 %v1136
    %1510 = vmatpush1.bf16.msra.mxu0 %v1135
    %1511 = vmatprep.subr.bf16.mxu0 %v1140
    %1512 = vmatpush1.bf16.msra.mxu0 %v1139
    %1513 = vmatprep.subr.bf16.mxu0 %v1144
    %1514 = vmatpush1.bf16.msra.mxu0 %v1143
    %1515 = vmatprep.mubr.bf16.mxu0 %v532
    %1516 = vmatmul.mubr.bf16.gmra.mrb[0].mxu0 %v531
    %v1517 = vpop.f32.mrb[0].mxu0
    %v1518 = vadd.f32 %v688, %v1517
    %v1519 = vpop.f32.mrb[0].mxu0
    %v1520 = vadd.f32 %v692, %v1519
    %v1521 = vpop.f32.mrb[0].mxu0
    %v1522 = vadd.f32 %v688, %v1521
    %v1523 = vpop.f32.mrb[0].mxu0
    %v1524 = vadd.f32 %v692, %v1523
    %1525 = vmatprep.mubr.bf16.mxu0 %v536
    %1526 = vmatmul.mubr.bf16.gmra.mrb[0].mxu0 %v535
    %v1527 = vpop.f32.mrb[0].mxu0
    %v1528 = vadd.f32 %v688, %v1527
    %v1529 = vpop.f32.mrb[0].mxu0
    %v1530 = vadd.f32 %v692, %v1529
    %v1531 = vpop.f32.mrb[0].mxu0
    %v1532 = vadd.f32 %v688, %v1531
    %v1533 = vpop.f32.mrb[0].mxu0
    %v1534 = vadd.f32 %v692, %v1533
    %1535 = vmatprep.mubr.bf16.mxu0 %v540
    %1536 = vmatmul.mubr.bf16.gmra.mrb[0].mxu0 %v539
    %v1537 = vpop.f32.mrb[0].mxu0
    %v1538 = vadd.f32 %v688, %v1537
    %v1539 = vpop.f32.mrb[0].mxu0
    %v1540 = vadd.f32 %v692, %v1539
    %v1541 = vpop.f32.mrb[0].mxu0
    %v1542 = vadd.f32 %v688, %v1541
    %v1543 = vpop.f32.mrb[0].mxu0
    %v1544 = vadd.f32 %v692, %v1543
    %1545 = vmatprep.mubr.bf16.mxu0 %v544
    %1546 = vmatmul.mubr.bf16.gmra.mrb[0].mxu0 %v543
    %v1547 = vpop.f32.mrb[0].mxu0
    %v1548 = vadd.f32 %v688, %v1547
    %v1549 = vpop.f32.mrb[0].mxu0
    %v1550 = vadd.f32 %v692, %v1549
    %v1551 = vpop.f32.mrb[0].mxu0
    %v1552 = vadd.f32 %v688, %v1551
    %v1553 = vpop.f32.mrb[0].mxu0
    %v1554 = vadd.f32 %v692, %v1553
    %1555 = vdwg.mxu0
    %1556 = vmatprep.subr.bf16.mxu0 %v1148
    %1557 = vmatpush1.bf16.msra.mxu0 %v1147
    %1558 = vmatprep.subr.bf16.mxu0 %v1152
    %1559 = vmatpush1.bf16.msra.mxu0 %v1151
    %1560 = vmatprep.subr.bf16.mxu0 %v1156
    %1561 = vmatpush1.bf16.msra.mxu0 %v1155
    %1562 = vmatprep.subr.bf16.mxu0 %v1160
    %1563 = vmatpush1.bf16.msra.mxu0 %v1159
    %1564 = vmatprep.subr.bf16.mxu0 %v1164
    %1565 = vmatpush1.bf16.msra.mxu0 %v1163
    %1566 = vmatprep.subr.bf16.mxu0 %v1168
    %1567 = vmatpush1.bf16.msra.mxu0 %v1167
    %1568 = vmatprep.subr.bf16.mxu0 %v1172
    %1569 = vmatpush1.bf16.msra.mxu0 %v1171
    %1570 = vmatprep.subr.bf16.mxu0 %v1176
    %1571 = vmatpush1.bf16.msra.mxu0 %v1175
    %1572 = vmatprep.subr.bf16.mxu0 %v1180
    %1573 = vmatpush1.bf16.msra.mxu0 %v1179
    %1574 = vmatprep.subr.bf16.mxu0 %v1184
    %1575 = vmatpush1.bf16.msra.mxu0 %v1183
    %1576 = vmatprep.subr.bf16.mxu0 %v1188
    %1577 = vmatpush1.bf16.msra.mxu0 %v1187
    %1578 = vmatprep.subr.bf16.mxu0 %v1192
    %1579 = vmatpush1.bf16.msra.mxu0 %v1191
    %1580 = vmatprep.subr.bf16.mxu0 %v1196
    %1581 = vmatpush1.bf16.msra.mxu0 %v1195
    %1582 = vmatprep.subr.bf16.mxu0 %v1200
    %1583 = vmatpush1.bf16.msra.mxu0 %v1199
    %1584 = vmatprep.subr.bf16.mxu0 %v1204
    %1585 = vmatpush1.bf16.msra.mxu0 %v1203
    %1586 = vmatprep.subr.bf16.mxu0 %v1208
    %1587 = vmatpush1.bf16.msra.mxu0 %v1207
    %1588 = vmatprep.mubr.bf16.mxu0 %v534
    %1589 = vmatmul.mubr.bf16.gmra.mrb[0].mxu0 %v533
    %v1590 = vpop.f32.mrb[0].mxu0
    %v1591 = vadd.f32 %v1518, %v1590
    %v1592 = vpop.f32.mrb[0].mxu0
    %v1593 = vadd.f32 %v1520, %v1592
    %v1594 = vpop.f32.mrb[0].mxu0
    %v1595 = vadd.f32 %v1522, %v1594
    %v1596 = vpop.f32.mrb[0].mxu0
    %v1597 = vadd.f32 %v1524, %v1596
    %1598 = vmatprep.mubr.bf16.mxu0 %v538
    %1599 = vmatmul.mubr.bf16.gmra.mrb[0].mxu0 %v537
    %v1600 = vpop.f32.mrb[0].mxu0
    %v1601 = vadd.f32 %v1528, %v1600
    %v1602 = vpop.f32.mrb[0].mxu0
    %v1603 = vadd.f32 %v1530, %v1602
    %v1604 = vpop.f32.mrb[0].mxu0
    %v1605 = vadd.f32 %v1532, %v1604
    %v1606 = vpop.f32.mrb[0].mxu0
    %v1607 = vadd.f32 %v1534, %v1606
    %1608 = vmatprep.mubr.bf16.mxu0 %v542
    %1609 = vmatmul.mubr.bf16.gmra.mrb[0].mxu0 %v541
    %v1610 = vpop.f32.mrb[0].mxu0
    %v1611 = vadd.f32 %v1538, %v1610
    %v1612 = vpop.f32.mrb[0].mxu0
    %v1613 = vadd.f32 %v1540, %v1612
    %v1614 = vpop.f32.mrb[0].mxu0
    %v1615 = vadd.f32 %v1542, %v1614
    %v1616 = vpop.f32.mrb[0].mxu0
    %v1617 = vadd.f32 %v1544, %v1616
    %1618 = vmatprep.mubr.bf16.mxu0 %v546
    %1619 = vmatmul.mubr.bf16.gmra.mrb[0].mxu0 %v545
    %v1620 = vpop.f32.mrb[0].mxu0
    %v1621 = vadd.f32 %v1548, %v1620
    %v1622 = vpop.f32.mrb[0].mxu0
    %v1623 = vadd.f32 %v1550, %v1622
    %v1624 = vpop.f32.mrb[0].mxu0
    %v1625 = vadd.f32 %v1552, %v1624
    %v1626 = vpop.f32.mrb[0].mxu0
    %v1627 = vadd.f32 %v1554, %v1626
    %1628 = vdwg.mxu0
    %v1629 = vmax.f32 %v1445, 0.0
    %v1630 = vmax.f32 %v1447, 0.0
    %v1631 = vmax.f32 %v1591, 0.0
    %v1632 = vmax.f32 %v1593, 0.0
    %v1633 = vmax.f32 %v1449, 0.0
    %v1634 = vmax.f32 %v1451, 0.0
    %v1635 = vmax.f32 %v1595, 0.0
    %v1636 = vmax.f32 %v1597, 0.0
    %v1637 = vmax.f32 %v1455, 0.0
    %v1638 = vmax.f32 %v1457, 0.0
    %v1639 = vmax.f32 %v1601, 0.0
    %v1640 = vmax.f32 %v1603, 0.0
    %v1641 = vmax.f32 %v1459, 0.0
    %v1642 = vmax.f32 %v1461, 0.0
    %v1643 = vmax.f32 %v1605, 0.0
    %v1644 = vmax.f32 %v1607, 0.0
    %v1645 = vmax.f32 %v1465, 0.0
    %v1646 = vmax.f32 %v1467, 0.0
    %v1647 = vmax.f32 %v1611, 0.0
    %v1648 = vmax.f32 %v1613, 0.0
    %v1649 = vmax.f32 %v1469, 0.0
    %v1650 = vmax.f32 %v1471, 0.0
    %v1651 = vmax.f32 %v1615, 0.0
    %v1652 = vmax.f32 %v1617, 0.0
    %v1653 = vmax.f32 %v1475, 0.0
    %v1654 = vmax.f32 %v1477, 0.0
    %v1655 = vmax.f32 %v1621, 0.0
    %v1656 = vmax.f32 %v1623, 0.0
    %v1657 = vmax.f32 %v1479, 0.0
    %v1658 = vmax.f32 %v1481, 0.0
    %v1659 = vmax.f32 %v1625, 0.0
    %v1660 = vmax.f32 %v1627, 0.0
    %v1661 = vpack.c.bf16 %v1633, %v1629
    %v1662 = vpack.c.bf16 %v1634, %v1630
    %v1663 = vpack.c.bf16 %v1635, %v1631
    %v1664 = vpack.c.bf16 %v1636, %v1632
    %v1665 = vpack.c.bf16 %v1641, %v1637
    %v1666 = vpack.c.bf16 %v1642, %v1638
    %v1667 = vpack.c.bf16 %v1643, %v1639
    %v1668 = vpack.c.bf16 %v1644, %v1640
    %v1669 = vpack.c.bf16 %v1649, %v1645
    %v1670 = vpack.c.bf16 %v1650, %v1646
    %v1671 = vpack.c.bf16 %v1651, %v1647
    %v1672 = vpack.c.bf16 %v1652, %v1648
    %v1673 = vpack.c.bf16 %v1657, %v1653
    %v1674 = vpack.c.bf16 %v1658, %v1654
    %v1675 = vpack.c.bf16 %v1659, %v1655
    %v1676 = vpack.c.bf16 %v1660, %v1656
    %v1677 = vld [vmem:[#allocation6] sm:$0xff]
    %v1678 = vld [vmem:[#allocation6 + $0x8] sm:$0xff]
    %v1679 = vld [vmem:[#allocation6 + $0x10] sm:$0xff]
    %v1680 = vld [vmem:[#allocation6 + $0x18] sm:$0xff]
    %v1681 = vld [vmem:[#allocation6 + $0x20] sm:$0xff]
    %v1682 = vld [vmem:[#allocation6 + $0x28] sm:$0xff]
    %v1683 = vld [vmem:[#allocation6 + $0x30] sm:$0xff]
    %v1684 = vld [vmem:[#allocation6 + $0x38] sm:$0xff]
    %v1685 = vld [vmem:[#allocation6 + $0x40] sm:$0xff]
    %v1686 = vld [vmem:[#allocation6 + $0x48] sm:$0xff]
    %v1687 = vld [vmem:[#allocation6 + $0x50] sm:$0xff]
    %v1688 = vld [vmem:[#allocation6 + $0x58] sm:$0xff]
    %v1689 = vld [vmem:[#allocation6 + $0x60] sm:$0xff]
    %v1690 = vld [vmem:[#allocation6 + $0x68] sm:$0xff]
    %v1691 = vld [vmem:[#allocation6 + $0x70] sm:$0xff]
    %v1692 = vld [vmem:[#allocation6 + $0x78] sm:$0xff]
    %v1693 = vld [vmem:[#allocation6 + $0x80] sm:$0xff]
    %v1694 = vld [vmem:[#allocation6 + $0x88] sm:$0xff]
    %v1695 = vld [vmem:[#allocation6 + $0x90] sm:$0xff]
    %v1696 = vld [vmem:[#allocation6 + $0x98] sm:$0xff]
    %v1697 = vld [vmem:[#allocation6 + $0xa0] sm:$0xff]
    %v1698 = vld [vmem:[#allocation6 + $0xa8] sm:$0xff]
    %v1699 = vld [vmem:[#allocation6 + $0xb0] sm:$0xff]
    %v1700 = vld [vmem:[#allocation6 + $0xb8] sm:$0xff]
    %v1701 = vld [vmem:[#allocation6 + $0xc0] sm:$0xff]
    %v1702 = vld [vmem:[#allocation6 + $0xc8] sm:$0xff]
    %v1703 = vld [vmem:[#allocation6 + $0xd0] sm:$0xff]
    %v1704 = vld [vmem:[#allocation6 + $0xd8] sm:$0xff]
    %v1705 = vld [vmem:[#allocation6 + $0xe0] sm:$0xff]
    %v1706 = vld [vmem:[#allocation6 + $0xe8] sm:$0xff]
    %v1707 = vld [vmem:[#allocation6 + $0xf0] sm:$0xff]
    %v1708 = vld [vmem:[#allocation6 + $0xf8] sm:$0xff]
    %v1709 = vld [vmem:[#allocation6 + $0x100] sm:$0xff]
    %v1710 = vld [vmem:[#allocation6 + $0x108] sm:$0xff]
    %v1711 = vld [vmem:[#allocation6 + $0x110] sm:$0xff]
    %v1712 = vld [vmem:[#allocation6 + $0x118] sm:$0xff]
    %v1713 = vld [vmem:[#allocation6 + $0x120] sm:$0xff]
    %v1714 = vld [vmem:[#allocation6 + $0x128] sm:$0xff]
    %v1715 = vld [vmem:[#allocation6 + $0x130] sm:$0xff]
    %v1716 = vld [vmem:[#allocation6 + $0x138] sm:$0xff]
    %v1717 = vld [vmem:[#allocation6 + $0x140] sm:$0xff]
    %v1718 = vld [vmem:[#allocation6 + $0x148] sm:$0xff]
    %v1719 = vld [vmem:[#allocation6 + $0x150] sm:$0xff]
    %v1720 = vld [vmem:[#allocation6 + $0x158] sm:$0xff]
    %v1721 = vld [vmem:[#allocation6 + $0x160] sm:$0xff]
    %v1722 = vld [vmem:[#allocation6 + $0x168] sm:$0xff]
    %v1723 = vld [vmem:[#allocation6 + $0x170] sm:$0xff]
    %v1724 = vld [vmem:[#allocation6 + $0x178] sm:$0xff]
    %v1725 = vld [vmem:[#allocation6 + $0x180] sm:$0xff]
    %v1726 = vld [vmem:[#allocation6 + $0x188] sm:$0xff]
    %v1727 = vld [vmem:[#allocation6 + $0x190] sm:$0xff]
    %v1728 = vld [vmem:[#allocation6 + $0x198] sm:$0xff]
    %v1729 = vld [vmem:[#allocation6 + $0x1a0] sm:$0xff]
    %v1730 = vld [vmem:[#allocation6 + $0x1a8] sm:$0xff]
    %v1731 = vld [vmem:[#allocation6 + $0x1b0] sm:$0xff]
    %v1732 = vld [vmem:[#allocation6 + $0x1b8] sm:$0xff]
    %v1733 = vld [vmem:[#allocation6 + $0x1c0] sm:$0xff]
    %v1734 = vld [vmem:[#allocation6 + $0x1c8] sm:$0xff]
    %v1735 = vld [vmem:[#allocation6 + $0x1d0] sm:$0xff]
    %v1736 = vld [vmem:[#allocation6 + $0x1d8] sm:$0xff]
    %v1737 = vld [vmem:[#allocation6 + $0x1e0] sm:$0xff]
    %v1738 = vld [vmem:[#allocation6 + $0x1e8] sm:$0xff]
    %v1739 = vld [vmem:[#allocation6 + $0x1f0] sm:$0xff]
    %v1740 = vld [vmem:[#allocation6 + $0x1f8] sm:$0xff]
    %v1741 = vld [vmem:[#allocation6 + $0x200] sm:$0xff]
    %v1742 = vld [vmem:[#allocation6 + $0x208] sm:$0xff]
    %v1743 = vld [vmem:[#allocation6 + $0x210] sm:$0xff]
    %v1744 = vld [vmem:[#allocation6 + $0x218] sm:$0xff]
    %v1745 = vld [vmem:[#allocation6 + $0x220] sm:$0xff]
    %v1746 = vld [vmem:[#allocation6 + $0x228] sm:$0xff]
    %v1747 = vld [vmem:[#allocation6 + $0x230] sm:$0xff]
    %v1748 = vld [vmem:[#allocation6 + $0x238] sm:$0xff]
    %v1749 = vld [vmem:[#allocation6 + $0x240] sm:$0xff]
    %v1750 = vld [vmem:[#allocation6 + $0x248] sm:$0xff]
    %v1751 = vld [vmem:[#allocation6 + $0x250] sm:$0xff]
    %v1752 = vld [vmem:[#allocation6 + $0x258] sm:$0xff]
    %v1753 = vld [vmem:[#allocation6 + $0x260] sm:$0xff]
    %v1754 = vld [vmem:[#allocation6 + $0x268] sm:$0xff]
    %v1755 = vld [vmem:[#allocation6 + $0x270] sm:$0xff]
    %v1756 = vld [vmem:[#allocation6 + $0x278] sm:$0xff]
    %v1757 = vld [vmem:[#allocation6 + $0x280] sm:$0xff]
    %v1758 = vld [vmem:[#allocation6 + $0x288] sm:$0xff]
    %v1759 = vld [vmem:[#allocation6 + $0x290] sm:$0xff]
    %v1760 = vld [vmem:[#allocation6 + $0x298] sm:$0xff]
    %v1761 = vld [vmem:[#allocation6 + $0x2a0] sm:$0xff]
    %v1762 = vld [vmem:[#allocation6 + $0x2a8] sm:$0xff]
    %v1763 = vld [vmem:[#allocation6 + $0x2b0] sm:$0xff]
    %v1764 = vld [vmem:[#allocation6 + $0x2b8] sm:$0xff]
    %v1765 = vld [vmem:[#allocation6 + $0x2c0] sm:$0xff]
    %v1766 = vld [vmem:[#allocation6 + $0x2c8] sm:$0xff]
    %v1767 = vld [vmem:[#allocation6 + $0x2d0] sm:$0xff]
    %v1768 = vld [vmem:[#allocation6 + $0x2d8] sm:$0xff]
    %v1769 = vld [vmem:[#allocation6 + $0x2e0] sm:$0xff]
    %v1770 = vld [vmem:[#allocation6 + $0x2e8] sm:$0xff]
    %v1771 = vld [vmem:[#allocation6 + $0x2f0] sm:$0xff]
    %v1772 = vld [vmem:[#allocation6 + $0x2f8] sm:$0xff]
    %v1773 = vld [vmem:[#allocation6 + $0x300] sm:$0xff]
    %v1774 = vld [vmem:[#allocation6 + $0x308] sm:$0xff]
    %v1775 = vld [vmem:[#allocation6 + $0x310] sm:$0xff]
    %v1776 = vld [vmem:[#allocation6 + $0x318] sm:$0xff]
    %v1777 = vld [vmem:[#allocation6 + $0x320] sm:$0xff]
    %v1778 = vld [vmem:[#allocation6 + $0x328] sm:$0xff]
    %v1779 = vld [vmem:[#allocation6 + $0x330] sm:$0xff]
    %v1780 = vld [vmem:[#allocation6 + $0x338] sm:$0xff]
    %v1781 = vld [vmem:[#allocation6 + $0x340] sm:$0xff]
    %v1782 = vld [vmem:[#allocation6 + $0x348] sm:$0xff]
    %v1783 = vld [vmem:[#allocation6 + $0x350] sm:$0xff]
    %v1784 = vld [vmem:[#allocation6 + $0x358] sm:$0xff]
    %v1785 = vld [vmem:[#allocation6 + $0x360] sm:$0xff]
    %v1786 = vld [vmem:[#allocation6 + $0x368] sm:$0xff]
    %v1787 = vld [vmem:[#allocation6 + $0x370] sm:$0xff]
    %v1788 = vld [vmem:[#allocation6 + $0x378] sm:$0xff]
    %v1789 = vld [vmem:[#allocation6 + $0x380] sm:$0xff]
    %v1790 = vld [vmem:[#allocation6 + $0x388] sm:$0xff]
    %v1791 = vld [vmem:[#allocation6 + $0x390] sm:$0xff]
    %v1792 = vld [vmem:[#allocation6 + $0x398] sm:$0xff]
    %v1793 = vld [vmem:[#allocation6 + $0x3a0] sm:$0xff]
    %v1794 = vld [vmem:[#allocation6 + $0x3a8] sm:$0xff]
    %v1795 = vld [vmem:[#allocation6 + $0x3b0] sm:$0xff]
    %v1796 = vld [vmem:[#allocation6 + $0x3b8] sm:$0xff]
    %v1797 = vld [vmem:[#allocation6 + $0x3c0] sm:$0xff]
    %v1798 = vld [vmem:[#allocation6 + $0x3c8] sm:$0xff]
    %v1799 = vld [vmem:[#allocation6 + $0x3d0] sm:$0xff]
    %v1800 = vld [vmem:[#allocation6 + $0x3d8] sm:$0xff]
    %v1801 = vld [vmem:[#allocation6 + $0x3e0] sm:$0xff]
    %v1802 = vld [vmem:[#allocation6 + $0x3e8] sm:$0xff]
    %v1803 = vld [vmem:[#allocation6 + $0x3f0] sm:$0xff]
    %v1804 = vld [vmem:[#allocation6 + $0x3f8] sm:$0xff]
    %v1805 = vld [vmem:[%s6] sm:$0xf]
    %v1807 = vlaneseq
    %v1808 = vshrl.u32 %v1807, 7
    %v1809 = vsub.s32 0, %v1808
    %v1810 = vrot.slane %v1805, %v1809
    %v1811 = vlaneseq
    %v1812 = vshrl.u32 %v1811, 7
    %v1813 = vsub.s32 1, %v1812
    %v1814 = vrot.slane %v1805, %v1813
    %v1815 = vlaneseq
    %v1816 = vshrl.u32 %v1815, 7
    %v1817 = vsub.s32 2, %v1816
    %v1818 = vrot.slane %v1805, %v1817
    %v1819 = vlaneseq
    %v1820 = vshrl.u32 %v1819, 7
    %v1821 = vsub.s32 3, %v1820
    %v1822 = vrot.slane %v1805, %v1821
    %v1955 = vunpack.c.l.b16 %v1677
    %v1956 = vunpack.c.h.b16 %v1677
    %v1957 = vunpack.c.l.b16 %v1678
    %v1958 = vunpack.c.h.b16 %v1678
    %v1959 = vunpack.c.l.b16 %v1679
    %v1960 = vunpack.c.h.b16 %v1679
    %v1961 = vunpack.c.l.b16 %v1680
    %v1962 = vunpack.c.h.b16 %v1680
    %v1963 = vunpack.c.l.b16 %v1681
    %v1964 = vunpack.c.h.b16 %v1681
    %v1965 = vunpack.c.l.b16 %v1682
    %v1966 = vunpack.c.h.b16 %v1682
    %v1967 = vunpack.c.l.b16 %v1683
    %v1968 = vunpack.c.h.b16 %v1683
    %v1969 = vunpack.c.l.b16 %v1684
    %v1970 = vunpack.c.h.b16 %v1684
    %v1971 = vunpack.c.l.b16 %v1685
    %v1972 = vunpack.c.h.b16 %v1685
    %v1973 = vunpack.c.l.b16 %v1686
    %v1974 = vunpack.c.h.b16 %v1686
    %v1975 = vunpack.c.l.b16 %v1687
    %v1976 = vunpack.c.h.b16 %v1687
    %v1977 = vunpack.c.l.b16 %v1688
    %v1978 = vunpack.c.h.b16 %v1688
    %v1979 = vunpack.c.l.b16 %v1689
    %v1980 = vunpack.c.h.b16 %v1689
    %v1981 = vunpack.c.l.b16 %v1690
    %v1982 = vunpack.c.h.b16 %v1690
    %v1983 = vunpack.c.l.b16 %v1691
    %v1984 = vunpack.c.h.b16 %v1691
    %v1985 = vunpack.c.l.b16 %v1692
    %v1986 = vunpack.c.h.b16 %v1692
    %v1987 = vunpack.c.l.b16 %v1693
    %v1988 = vunpack.c.h.b16 %v1693
    %v1989 = vunpack.c.l.b16 %v1694
    %v1990 = vunpack.c.h.b16 %v1694
    %v1991 = vunpack.c.l.b16 %v1695
    %v1992 = vunpack.c.h.b16 %v1695
    %v1993 = vunpack.c.l.b16 %v1696
    %v1994 = vunpack.c.h.b16 %v1696
    %v1995 = vunpack.c.l.b16 %v1697
    %v1996 = vunpack.c.h.b16 %v1697
    %v1997 = vunpack.c.l.b16 %v1698
    %v1998 = vunpack.c.h.b16 %v1698
    %v1999 = vunpack.c.l.b16 %v1699
    %v2000 = vunpack.c.h.b16 %v1699
    %v2001 = vunpack.c.l.b16 %v1700
    %v2002 = vunpack.c.h.b16 %v1700
    %v2003 = vunpack.c.l.b16 %v1701
    %v2004 = vunpack.c.h.b16 %v1701
    %v2005 = vunpack.c.l.b16 %v1702
    %v2006 = vunpack.c.h.b16 %v1702
    %v2007 = vunpack.c.l.b16 %v1703
    %v2008 = vunpack.c.h.b16 %v1703
    %v2009 = vunpack.c.l.b16 %v1704
    %v2010 = vunpack.c.h.b16 %v1704
    %v2011 = vunpack.c.l.b16 %v1705
    %v2012 = vunpack.c.h.b16 %v1705
    %v2013 = vunpack.c.l.b16 %v1706
    %v2014 = vunpack.c.h.b16 %v1706
    %v2015 = vunpack.c.l.b16 %v1707
    %v2016 = vunpack.c.h.b16 %v1707
    %v2017 = vunpack.c.l.b16 %v1708
    %v2018 = vunpack.c.h.b16 %v1708
    %v2019 = vunpack.c.l.b16 %v1709
    %v2020 = vunpack.c.h.b16 %v1709
    %v2021 = vunpack.c.l.b16 %v1710
    %v2022 = vunpack.c.h.b16 %v1710
    %v2023 = vunpack.c.l.b16 %v1711
    %v2024 = vunpack.c.h.b16 %v1711
    %v2025 = vunpack.c.l.b16 %v1712
    %v2026 = vunpack.c.h.b16 %v1712
    %v2027 = vunpack.c.l.b16 %v1713
    %v2028 = vunpack.c.h.b16 %v1713
    %v2029 = vunpack.c.l.b16 %v1714
    %v2030 = vunpack.c.h.b16 %v1714
    %v2031 = vunpack.c.l.b16 %v1715
    %v2032 = vunpack.c.h.b16 %v1715
    %v2033 = vunpack.c.l.b16 %v1716
    %v2034 = vunpack.c.h.b16 %v1716
    %v2035 = vunpack.c.l.b16 %v1717
    %v2036 = vunpack.c.h.b16 %v1717
    %v2037 = vunpack.c.l.b16 %v1718
    %v2038 = vunpack.c.h.b16 %v1718
    %v2039 = vunpack.c.l.b16 %v1719
    %v2040 = vunpack.c.h.b16 %v1719
    %v2041 = vunpack.c.l.b16 %v1720
    %v2042 = vunpack.c.h.b16 %v1720
    %v2043 = vunpack.c.l.b16 %v1721
    %v2044 = vunpack.c.h.b16 %v1721
    %v2045 = vunpack.c.l.b16 %v1722
    %v2046 = vunpack.c.h.b16 %v1722
    %v2047 = vunpack.c.l.b16 %v1723
    %v2048 = vunpack.c.h.b16 %v1723
    %v2049 = vunpack.c.l.b16 %v1724
    %v2050 = vunpack.c.h.b16 %v1724
    %v2051 = vunpack.c.l.b16 %v1725
    %v2052 = vunpack.c.h.b16 %v1725
    %v2053 = vunpack.c.l.b16 %v1726
    %v2054 = vunpack.c.h.b16 %v1726
    %v2055 = vunpack.c.l.b16 %v1727
    %v2056 = vunpack.c.h.b16 %v1727
    %v2057 = vunpack.c.l.b16 %v1728
    %v2058 = vunpack.c.h.b16 %v1728
    %v2059 = vunpack.c.l.b16 %v1729
    %v2060 = vunpack.c.h.b16 %v1729
    %v2061 = vunpack.c.l.b16 %v1730
    %v2062 = vunpack.c.h.b16 %v1730
    %v2063 = vunpack.c.l.b16 %v1731
    %v2064 = vunpack.c.h.b16 %v1731
    %v2065 = vunpack.c.l.b16 %v1732
    %v2066 = vunpack.c.h.b16 %v1732
    %v2067 = vunpack.c.l.b16 %v1733
    %v2068 = vunpack.c.h.b16 %v1733
    %v2069 = vunpack.c.l.b16 %v1734
    %v2070 = vunpack.c.h.b16 %v1734
    %v2071 = vunpack.c.l.b16 %v1735
    %v2072 = vunpack.c.h.b16 %v1735
    %v2073 = vunpack.c.l.b16 %v1736
    %v2074 = vunpack.c.h.b16 %v1736
    %v2075 = vunpack.c.l.b16 %v1737
    %v2076 = vunpack.c.h.b16 %v1737
    %v2077 = vunpack.c.l.b16 %v1738
    %v2078 = vunpack.c.h.b16 %v1738
    %v2079 = vunpack.c.l.b16 %v1739
    %v2080 = vunpack.c.h.b16 %v1739
    %v2081 = vunpack.c.l.b16 %v1740
    %v2082 = vunpack.c.h.b16 %v1740
    %v2083 = vunpack.c.l.b16 %v1741
    %v2084 = vunpack.c.h.b16 %v1741
    %v2085 = vunpack.c.l.b16 %v1742
    %v2086 = vunpack.c.h.b16 %v1742
    %v2087 = vunpack.c.l.b16 %v1743
    %v2088 = vunpack.c.h.b16 %v1743
    %v2089 = vunpack.c.l.b16 %v1744
    %v2090 = vunpack.c.h.b16 %v1744
    %v2091 = vunpack.c.l.b16 %v1745
    %v2092 = vunpack.c.h.b16 %v1745
    %v2093 = vunpack.c.l.b16 %v1746
    %v2094 = vunpack.c.h.b16 %v1746
    %v2095 = vunpack.c.l.b16 %v1747
    %v2096 = vunpack.c.h.b16 %v1747
    %v2097 = vunpack.c.l.b16 %v1748
    %v2098 = vunpack.c.h.b16 %v1748
    %v2099 = vunpack.c.l.b16 %v1749
    %v2100 = vunpack.c.h.b16 %v1749
    %v2101 = vunpack.c.l.b16 %v1750
    %v2102 = vunpack.c.h.b16 %v1750
    %v2103 = vunpack.c.l.b16 %v1751
    %v2104 = vunpack.c.h.b16 %v1751
    %v2105 = vunpack.c.l.b16 %v1752
    %v2106 = vunpack.c.h.b16 %v1752
    %v2107 = vunpack.c.l.b16 %v1753
    %v2108 = vunpack.c.h.b16 %v1753
    %v2109 = vunpack.c.l.b16 %v1754
    %v2110 = vunpack.c.h.b16 %v1754
    %v2111 = vunpack.c.l.b16 %v1755
    %v2112 = vunpack.c.h.b16 %v1755
    %v2113 = vunpack.c.l.b16 %v1756
    %v2114 = vunpack.c.h.b16 %v1756
    %v2115 = vunpack.c.l.b16 %v1757
    %v2116 = vunpack.c.h.b16 %v1757
    %v2117 = vunpack.c.l.b16 %v1758
    %v2118 = vunpack.c.h.b16 %v1758
    %v2119 = vunpack.c.l.b16 %v1759
    %v2120 = vunpack.c.h.b16 %v1759
    %v2121 = vunpack.c.l.b16 %v1760
    %v2122 = vunpack.c.h.b16 %v1760
    %v2123 = vunpack.c.l.b16 %v1761
    %v2124 = vunpack.c.h.b16 %v1761
    %v2125 = vunpack.c.l.b16 %v1762
    %v2126 = vunpack.c.h.b16 %v1762
    %v2127 = vunpack.c.l.b16 %v1763
    %v2128 = vunpack.c.h.b16 %v1763
    %v2129 = vunpack.c.l.b16 %v1764
    %v2130 = vunpack.c.h.b16 %v1764
    %v2131 = vunpack.c.l.b16 %v1765
    %v2132 = vunpack.c.h.b16 %v1765
    %v2133 = vunpack.c.l.b16 %v1766
    %v2134 = vunpack.c.h.b16 %v1766
    %v2135 = vunpack.c.l.b16 %v1767
    %v2136 = vunpack.c.h.b16 %v1767
    %v2137 = vunpack.c.l.b16 %v1768
    %v2138 = vunpack.c.h.b16 %v1768
    %v2139 = vunpack.c.l.b16 %v1769
    %v2140 = vunpack.c.h.b16 %v1769
    %v2141 = vunpack.c.l.b16 %v1770
    %v2142 = vunpack.c.h.b16 %v1770
    %v2143 = vunpack.c.l.b16 %v1771
    %v2144 = vunpack.c.h.b16 %v1771
    %v2145 = vunpack.c.l.b16 %v1772
    %v2146 = vunpack.c.h.b16 %v1772
    %v2147 = vunpack.c.l.b16 %v1773
    %v2148 = vunpack.c.h.b16 %v1773
    %v2149 = vunpack.c.l.b16 %v1774
    %v2150 = vunpack.c.h.b16 %v1774
    %v2151 = vunpack.c.l.b16 %v1775
    %v2152 = vunpack.c.h.b16 %v1775
    %v2153 = vunpack.c.l.b16 %v1776
    %v2154 = vunpack.c.h.b16 %v1776
    %v2155 = vunpack.c.l.b16 %v1777
    %v2156 = vunpack.c.h.b16 %v1777
    %v2157 = vunpack.c.l.b16 %v1778
    %v2158 = vunpack.c.h.b16 %v1778
    %v2159 = vunpack.c.l.b16 %v1779
    %v2160 = vunpack.c.h.b16 %v1779
    %v2161 = vunpack.c.l.b16 %v1780
    %v2162 = vunpack.c.h.b16 %v1780
    %v2163 = vunpack.c.l.b16 %v1781
    %v2164 = vunpack.c.h.b16 %v1781
    %v2165 = vunpack.c.l.b16 %v1782
    %v2166 = vunpack.c.h.b16 %v1782
    %v2167 = vunpack.c.l.b16 %v1783
    %v2168 = vunpack.c.h.b16 %v1783
    %v2169 = vunpack.c.l.b16 %v1784
    %v2170 = vunpack.c.h.b16 %v1784
    %v2171 = vunpack.c.l.b16 %v1785
    %v2172 = vunpack.c.h.b16 %v1785
    %v2173 = vunpack.c.l.b16 %v1786
    %v2174 = vunpack.c.h.b16 %v1786
    %v2175 = vunpack.c.l.b16 %v1787
    %v2176 = vunpack.c.h.b16 %v1787
    %v2177 = vunpack.c.l.b16 %v1788
    %v2178 = vunpack.c.h.b16 %v1788
    %v2179 = vunpack.c.l.b16 %v1789
    %v2180 = vunpack.c.h.b16 %v1789
    %v2181 = vunpack.c.l.b16 %v1790
    %v2182 = vunpack.c.h.b16 %v1790
    %v2183 = vunpack.c.l.b16 %v1791
    %v2184 = vunpack.c.h.b16 %v1791
    %v2185 = vunpack.c.l.b16 %v1792
    %v2186 = vunpack.c.h.b16 %v1792
    %v2187 = vunpack.c.l.b16 %v1793
    %v2188 = vunpack.c.h.b16 %v1793
    %v2189 = vunpack.c.l.b16 %v1794
    %v2190 = vunpack.c.h.b16 %v1794
    %v2191 = vunpack.c.l.b16 %v1795
    %v2192 = vunpack.c.h.b16 %v1795
    %v2193 = vunpack.c.l.b16 %v1796
    %v2194 = vunpack.c.h.b16 %v1796
    %v2195 = vunpack.c.l.b16 %v1797
    %v2196 = vunpack.c.h.b16 %v1797
    %v2197 = vunpack.c.l.b16 %v1798
    %v2198 = vunpack.c.h.b16 %v1798
    %v2199 = vunpack.c.l.b16 %v1799
    %v2200 = vunpack.c.h.b16 %v1799
    %v2201 = vunpack.c.l.b16 %v1800
    %v2202 = vunpack.c.h.b16 %v1800
    %v2203 = vunpack.c.l.b16 %v1801
    %v2204 = vunpack.c.h.b16 %v1801
    %v2205 = vunpack.c.l.b16 %v1802
    %v2206 = vunpack.c.h.b16 %v1802
    %v2207 = vunpack.c.l.b16 %v1803
    %v2208 = vunpack.c.h.b16 %v1803
    %v2209 = vunpack.c.l.b16 %v1804
    %v2210 = vunpack.c.h.b16 %v1804
    %v2211 = vpack.c.b16 %v1959, %v1955
    %v2212 = vpack.c.b16 %v1960, %v1956
    %v2213 = vpack.c.b16 %v1961, %v1957
    %v2214 = vpack.c.b16 %v1962, %v1958
    %v2215 = vpack.c.b16 %v1967, %v1963
    %v2216 = vpack.c.b16 %v1968, %v1964
    %v2217 = vpack.c.b16 %v1969, %v1965
    %v2218 = vpack.c.b16 %v1970, %v1966
    %v2219 = vpack.c.b16 %v1975, %v1971
    %v2220 = vpack.c.b16 %v1976, %v1972
    %v2221 = vpack.c.b16 %v1977, %v1973
    %v2222 = vpack.c.b16 %v1978, %v1974
    %v2223 = vpack.c.b16 %v1983, %v1979
    %v2224 = vpack.c.b16 %v1984, %v1980
    %v2225 = vpack.c.b16 %v1985, %v1981
    %v2226 = vpack.c.b16 %v1986, %v1982
    %v2227 = vpack.c.b16 %v1991, %v1987
    %v2228 = vpack.c.b16 %v1992, %v1988
    %v2229 = vpack.c.b16 %v1993, %v1989
    %v2230 = vpack.c.b16 %v1994, %v1990
    %v2231 = vpack.c.b16 %v1999, %v1995
    %v2232 = vpack.c.b16 %v2000, %v1996
    %v2233 = vpack.c.b16 %v2001, %v1997
    %v2234 = vpack.c.b16 %v2002, %v1998
    %v2235 = vpack.c.b16 %v2007, %v2003
    %v2236 = vpack.c.b16 %v2008, %v2004
    %v2237 = vpack.c.b16 %v2009, %v2005
    %v2238 = vpack.c.b16 %v2010, %v2006
    %v2239 = vpack.c.b16 %v2015, %v2011
    %v2240 = vpack.c.b16 %v2016, %v2012
    %v2241 = vpack.c.b16 %v2017, %v2013
    %v2242 = vpack.c.b16 %v2018, %v2014
    %v2243 = vpack.c.b16 %v2023, %v2019
    %v2244 = vpack.c.b16 %v2024, %v2020
    %v2245 = vpack.c.b16 %v2025, %v2021
    %v2246 = vpack.c.b16 %v2026, %v2022
    %v2247 = vpack.c.b16 %v2031, %v2027
    %v2248 = vpack.c.b16 %v2032, %v2028
    %v2249 = vpack.c.b16 %v2033, %v2029
    %v2250 = vpack.c.b16 %v2034, %v2030
    %v2251 = vpack.c.b16 %v2039, %v2035
    %v2252 = vpack.c.b16 %v2040, %v2036
    %v2253 = vpack.c.b16 %v2041, %v2037
    %v2254 = vpack.c.b16 %v2042, %v2038
    %v2255 = vpack.c.b16 %v2047, %v2043
    %v2256 = vpack.c.b16 %v2048, %v2044
    %v2257 = vpack.c.b16 %v2049, %v2045
    %v2258 = vpack.c.b16 %v2050, %v2046
    %v2259 = vpack.c.b16 %v2055, %v2051
    %v2260 = vpack.c.b16 %v2056, %v2052
    %v2261 = vpack.c.b16 %v2057, %v2053
    %v2262 = vpack.c.b16 %v2058, %v2054
    %v2263 = vpack.c.b16 %v2063, %v2059
    %v2264 = vpack.c.b16 %v2064, %v2060
    %v2265 = vpack.c.b16 %v2065, %v2061
    %v2266 = vpack.c.b16 %v2066, %v2062
    %v2267 = vpack.c.b16 %v2071, %v2067
    %v2268 = vpack.c.b16 %v2072, %v2068
    %v2269 = vpack.c.b16 %v2073, %v2069
    %v2270 = vpack.c.b16 %v2074, %v2070
    %v2271 = vpack.c.b16 %v2079, %v2075
    %v2272 = vpack.c.b16 %v2080, %v2076
    %v2273 = vpack.c.b16 %v2081, %v2077
    %v2274 = vpack.c.b16 %v2082, %v2078
    %v2275 = vpack.c.b16 %v2087, %v2083
    %v2276 = vpack.c.b16 %v2088, %v2084
    %v2277 = vpack.c.b16 %v2089, %v2085
    %v2278 = vpack.c.b16 %v2090, %v2086
    %v2279 = vpack.c.b16 %v2095, %v2091
    %v2280 = vpack.c.b16 %v2096, %v2092
    %v2281 = vpack.c.b16 %v2097, %v2093
    %v2282 = vpack.c.b16 %v2098, %v2094
    %v2283 = vpack.c.b16 %v2103, %v2099
    %v2284 = vpack.c.b16 %v2104, %v2100
    %v2285 = vpack.c.b16 %v2105, %v2101
    %v2286 = vpack.c.b16 %v2106, %v2102
    %v2287 = vpack.c.b16 %v2111, %v2107
    %v2288 = vpack.c.b16 %v2112, %v2108
    %v2289 = vpack.c.b16 %v2113, %v2109
    %v2290 = vpack.c.b16 %v2114, %v2110
    %v2291 = vpack.c.b16 %v2119, %v2115
    %v2292 = vpack.c.b16 %v2120, %v2116
    %v2293 = vpack.c.b16 %v2121, %v2117
    %v2294 = vpack.c.b16 %v2122, %v2118
    %v2295 = vpack.c.b16 %v2127, %v2123
    %v2296 = vpack.c.b16 %v2128, %v2124
    %v2297 = vpack.c.b16 %v2129, %v2125
    %v2298 = vpack.c.b16 %v2130, %v2126
    %v2299 = vpack.c.b16 %v2135, %v2131
    %v2300 = vpack.c.b16 %v2136, %v2132
    %v2301 = vpack.c.b16 %v2137, %v2133
    %v2302 = vpack.c.b16 %v2138, %v2134
    %v2303 = vpack.c.b16 %v2143, %v2139
    %v2304 = vpack.c.b16 %v2144, %v2140
    %v2305 = vpack.c.b16 %v2145, %v2141
    %v2306 = vpack.c.b16 %v2146, %v2142
    %v2307 = vpack.c.b16 %v2151, %v2147
    %v2308 = vpack.c.b16 %v2152, %v2148
    %v2309 = vpack.c.b16 %v2153, %v2149
    %v2310 = vpack.c.b16 %v2154, %v2150
    %v2311 = vpack.c.b16 %v2159, %v2155
    %v2312 = vpack.c.b16 %v2160, %v2156
    %v2313 = vpack.c.b16 %v2161, %v2157
    %v2314 = vpack.c.b16 %v2162, %v2158
    %v2315 = vpack.c.b16 %v2167, %v2163
    %v2316 = vpack.c.b16 %v2168, %v2164
    %v2317 = vpack.c.b16 %v2169, %v2165
    %v2318 = vpack.c.b16 %v2170, %v2166
    %v2319 = vpack.c.b16 %v2175, %v2171
    %v2320 = vpack.c.b16 %v2176, %v2172
    %v2321 = vpack.c.b16 %v2177, %v2173
    %v2322 = vpack.c.b16 %v2178, %v2174
    %v2323 = vpack.c.b16 %v2183, %v2179
    %v2324 = vpack.c.b16 %v2184, %v2180
    %v2325 = vpack.c.b16 %v2185, %v2181
    %v2326 = vpack.c.b16 %v2186, %v2182
    %v2327 = vpack.c.b16 %v2191, %v2187
    %v2328 = vpack.c.b16 %v2192, %v2188
    %v2329 = vpack.c.b16 %v2193, %v2189
    %v2330 = vpack.c.b16 %v2194, %v2190
    %v2331 = vpack.c.b16 %v2199, %v2195
    %v2332 = vpack.c.b16 %v2200, %v2196
    %v2333 = vpack.c.b16 %v2201, %v2197
    %v2334 = vpack.c.b16 %v2202, %v2198
    %v2335 = vpack.c.b16 %v2207, %v2203
    %v2336 = vpack.c.b16 %v2208, %v2204
    %v2337 = vpack.c.b16 %v2209, %v2205
    %v2338 = vpack.c.b16 %v2210, %v2206
    %2467 = vmatprep.subr.bf16.mxu0 %v2212
    %2468 = vmatpush1.bf16.msra.mxu0 %v2211
    %2469 = vmatprep.subr.bf16.mxu0 %v2216
    %2470 = vmatpush1.bf16.msra.mxu0 %v2215
    %2471 = vmatprep.subr.bf16.mxu0 %v2220
    %2472 = vmatpush1.bf16.msra.mxu0 %v2219
    %2473 = vmatprep.subr.bf16.mxu0 %v2224
    %2474 = vmatpush1.bf16.msra.mxu0 %v2223
    %2475 = vmatprep.subr.bf16.mxu0 %v2228
    %2476 = vmatpush1.bf16.msra.mxu0 %v2227
    %2477 = vmatprep.subr.bf16.mxu0 %v2232
    %2478 = vmatpush1.bf16.msra.mxu0 %v2231
    %2479 = vmatprep.subr.bf16.mxu0 %v2236
    %2480 = vmatpush1.bf16.msra.mxu0 %v2235
    %2481 = vmatprep.subr.bf16.mxu0 %v2240
    %2482 = vmatpush1.bf16.msra.mxu0 %v2239
    %2483 = vmatprep.subr.bf16.mxu0 %v2244
    %2484 = vmatpush1.bf16.msra.mxu0 %v2243
    %2485 = vmatprep.subr.bf16.mxu0 %v2248
    %2486 = vmatpush1.bf16.msra.mxu0 %v2247
    %2487 = vmatprep.subr.bf16.mxu0 %v2252
    %2488 = vmatpush1.bf16.msra.mxu0 %v2251
    %2489 = vmatprep.subr.bf16.mxu0 %v2256
    %2490 = vmatpush1.bf16.msra.mxu0 %v2255
    %2491 = vmatprep.subr.bf16.mxu0 %v2260
    %2492 = vmatpush1.bf16.msra.mxu0 %v2259
    %2493 = vmatprep.subr.bf16.mxu0 %v2264
    %2494 = vmatpush1.bf16.msra.mxu0 %v2263
    %2495 = vmatprep.subr.bf16.mxu0 %v2268
    %2496 = vmatpush1.bf16.msra.mxu0 %v2267
    %2497 = vmatprep.subr.bf16.mxu0 %v2272
    %2498 = vmatpush1.bf16.msra.mxu0 %v2271
    %2499 = vmatprep.mubr.bf16.mxu0 %v1662
    %2500 = vmatmul.mubr.bf16.gmra.mrb[0].mxu0 %v1661
    %v2501 = vpop.f32.mrb[0].mxu0
    %v2502 = vadd.f32 %v1810, %v2501
    %v2503 = vpop.f32.mrb[0].mxu0
    %v2504 = vadd.f32 %v1814, %v2503
    %v2505 = vpop.f32.mrb[0].mxu0
    %v2506 = vadd.f32 %v1810, %v2505
    %v2507 = vpop.f32.mrb[0].mxu0
    %v2508 = vadd.f32 %v1814, %v2507
    %2509 = vmatprep.mubr.bf16.mxu0 %v1666
    %2510 = vmatmul.mubr.bf16.gmra.mrb[0].mxu0 %v1665
    %v2511 = vpop.f32.mrb[0].mxu0
    %v2512 = vadd.f32 %v1810, %v2511
    %v2513 = vpop.f32.mrb[0].mxu0
    %v2514 = vadd.f32 %v1814, %v2513
    %v2515 = vpop.f32.mrb[0].mxu0
    %v2516 = vadd.f32 %v1810, %v2515
    %v2517 = vpop.f32.mrb[0].mxu0
    %v2518 = vadd.f32 %v1814, %v2517
    %2519 = vmatprep.mubr.bf16.mxu0 %v1670
    %2520 = vmatmul.mubr.bf16.gmra.mrb[0].mxu0 %v1669
    %v2521 = vpop.f32.mrb[0].mxu0
    %v2522 = vadd.f32 %v1810, %v2521
    %v2523 = vpop.f32.mrb[0].mxu0
    %v2524 = vadd.f32 %v1814, %v2523
    %v2525 = vpop.f32.mrb[0].mxu0
    %v2526 = vadd.f32 %v1810, %v2525
    %v2527 = vpop.f32.mrb[0].mxu0
    %v2528 = vadd.f32 %v1814, %v2527
    %2529 = vmatprep.mubr.bf16.mxu0 %v1674
    %2530 = vmatmul.mubr.bf16.gmra.mrb[0].mxu0 %v1673
    %v2531 = vpop.f32.mrb[0].mxu0
    %v2532 = vadd.f32 %v1810, %v2531
    %v2533 = vpop.f32.mrb[0].mxu0
    %v2534 = vadd.f32 %v1814, %v2533
    %v2535 = vpop.f32.mrb[0].mxu0
    %v2536 = vadd.f32 %v1810, %v2535
    %v2537 = vpop.f32.mrb[0].mxu0
    %v2538 = vadd.f32 %v1814, %v2537
    %2539 = vdwg.mxu0
    %2540 = vmatprep.subr.bf16.mxu0 %v2276
    %2541 = vmatpush1.bf16.msra.mxu0 %v2275
    %2542 = vmatprep.subr.bf16.mxu0 %v2280
    %2543 = vmatpush1.bf16.msra.mxu0 %v2279
    %2544 = vmatprep.subr.bf16.mxu0 %v2284
    %2545 = vmatpush1.bf16.msra.mxu0 %v2283
    %2546 = vmatprep.subr.bf16.mxu0 %v2288
    %2547 = vmatpush1.bf16.msra.mxu0 %v2287
    %2548 = vmatprep.subr.bf16.mxu0 %v2292
    %2549 = vmatpush1.bf16.msra.mxu0 %v2291
    %2550 = vmatprep.subr.bf16.mxu0 %v2296
    %2551 = vmatpush1.bf16.msra.mxu0 %v2295
    %2552 = vmatprep.subr.bf16.mxu0 %v2300
    %2553 = vmatpush1.bf16.msra.mxu0 %v2299
    %2554 = vmatprep.subr.bf16.mxu0 %v2304
    %2555 = vmatpush1.bf16.msra.mxu0 %v2303
    %2556 = vmatprep.subr.bf16.mxu0 %v2308
    %2557 = vmatpush1.bf16.msra.mxu0 %v2307
    %2558 = vmatprep.subr.bf16.mxu0 %v2312
    %2559 = vmatpush1.bf16.msra.mxu0 %v2311
    %2560 = vmatprep.subr.bf16.mxu0 %v2316
    %2561 = vmatpush1.bf16.msra.mxu0 %v2315
    %2562 = vmatprep.subr.bf16.mxu0 %v2320
    %2563 = vmatpush1.bf16.msra.mxu0 %v2319
    %2564 = vmatprep.subr.bf16.mxu0 %v2324
    %2565 = vmatpush1.bf16.msra.mxu0 %v2323
    %2566 = vmatprep.subr.bf16.mxu0 %v2328
    %2567 = vmatpush1.bf16.msra.mxu0 %v2327
    %2568 = vmatprep.subr.bf16.mxu0 %v2332
    %2569 = vmatpush1.bf16.msra.mxu0 %v2331
    %2570 = vmatprep.subr.bf16.mxu0 %v2336
    %2571 = vmatpush1.bf16.msra.mxu0 %v2335
    %2572 = vmatprep.mubr.bf16.mxu0 %v1664
    %2573 = vmatmul.mubr.bf16.gmra.mrb[0].mxu0 %v1663
    %v2574 = vpop.f32.mrb[0].mxu0
    %v2575 = vadd.f32 %v2502, %v2574
    %v2576 = vpop.f32.mrb[0].mxu0
    %v2577 = vadd.f32 %v2504, %v2576
    %v2578 = vpop.f32.mrb[0].mxu0
    %v2579 = vadd.f32 %v2506, %v2578
    %v2580 = vpop.f32.mrb[0].mxu0
    %v2581 = vadd.f32 %v2508, %v2580
    %2582 = vmatprep.mubr.bf16.mxu0 %v1668
    %2583 = vmatmul.mubr.bf16.gmra.mrb[0].mxu0 %v1667
    %v2584 = vpop.f32.mrb[0].mxu0
    %v2585 = vadd.f32 %v2512, %v2584
    %v2586 = vpop.f32.mrb[0].mxu0
    %v2587 = vadd.f32 %v2514, %v2586
    %v2588 = vpop.f32.mrb[0].mxu0
    %v2589 = vadd.f32 %v2516, %v2588
    %v2590 = vpop.f32.mrb[0].mxu0
    %v2591 = vadd.f32 %v2518, %v2590
    %2592 = vmatprep.mubr.bf16.mxu0 %v1672
    %2593 = vmatmul.mubr.bf16.gmra.mrb[0].mxu0 %v1671
    %v2594 = vpop.f32.mrb[0].mxu0
    %v2595 = vadd.f32 %v2522, %v2594
    %v2596 = vpop.f32.mrb[0].mxu0
    %v2597 = vadd.f32 %v2524, %v2596
    %v2598 = vpop.f32.mrb[0].mxu0
    %v2599 = vadd.f32 %v2526, %v2598
    %v2600 = vpop.f32.mrb[0].mxu0
    %v2601 = vadd.f32 %v2528, %v2600
    %2602 = vmatprep.mubr.bf16.mxu0 %v1676
    %2603 = vmatmul.mubr.bf16.gmra.mrb[0].mxu0 %v1675
    %v2604 = vpop.f32.mrb[0].mxu0
    %v2605 = vadd.f32 %v2532, %v2604
    %v2606 = vpop.f32.mrb[0].mxu0
    %v2607 = vadd.f32 %v2534, %v2606
    %v2608 = vpop.f32.mrb[0].mxu0
    %v2609 = vadd.f32 %v2536, %v2608
    %v2610 = vpop.f32.mrb[0].mxu0
    %v2611 = vadd.f32 %v2538, %v2610
    %2612 = vdwg.mxu0
    %2613 = vmatprep.subr.bf16.mxu0 %v2214
    %2614 = vmatpush1.bf16.msra.mxu0 %v2213
    %2615 = vmatprep.subr.bf16.mxu0 %v2218
    %2616 = vmatpush1.bf16.msra.mxu0 %v2217
    %2617 = vmatprep.subr.bf16.mxu0 %v2222
    %2618 = vmatpush1.bf16.msra.mxu0 %v2221
    %2619 = vmatprep.subr.bf16.mxu0 %v2226
    %2620 = vmatpush1.bf16.msra.mxu0 %v2225
    %2621 = vmatprep.subr.bf16.mxu0 %v2230
    %2622 = vmatpush1.bf16.msra.mxu0 %v2229
    %2623 = vmatprep.subr.bf16.mxu0 %v2234
    %2624 = vmatpush1.bf16.msra.mxu0 %v2233
    %2625 = vmatprep.subr.bf16.mxu0 %v2238
    %2626 = vmatpush1.bf16.msra.mxu0 %v2237
    %2627 = vmatprep.subr.bf16.mxu0 %v2242
    %2628 = vmatpush1.bf16.msra.mxu0 %v2241
    %2629 = vmatprep.subr.bf16.mxu0 %v2246
    %2630 = vmatpush1.bf16.msra.mxu0 %v2245
    %2631 = vmatprep.subr.bf16.mxu0 %v2250
    %2632 = vmatpush1.bf16.msra.mxu0 %v2249
    %2633 = vmatprep.subr.bf16.mxu0 %v2254
    %2634 = vmatpush1.bf16.msra.mxu0 %v2253
    %2635 = vmatprep.subr.bf16.mxu0 %v2258
    %2636 = vmatpush1.bf16.msra.mxu0 %v2257
    %2637 = vmatprep.subr.bf16.mxu0 %v2262
    %2638 = vmatpush1.bf16.msra.mxu0 %v2261
    %2639 = vmatprep.subr.bf16.mxu0 %v2266
    %2640 = vmatpush1.bf16.msra.mxu0 %v2265
    %2641 = vmatprep.subr.bf16.mxu0 %v2270
    %2642 = vmatpush1.bf16.msra.mxu0 %v2269
    %2643 = vmatprep.subr.bf16.mxu0 %v2274
    %2644 = vmatpush1.bf16.msra.mxu0 %v2273
    %2645 = vmatprep.mubr.bf16.mxu0 %v1662
    %2646 = vmatmul.mubr.bf16.gmra.mrb[0].mxu0 %v1661
    %v2647 = vpop.f32.mrb[0].mxu0
    %v2648 = vadd.f32 %v1818, %v2647
    %v2649 = vpop.f32.mrb[0].mxu0
    %v2650 = vadd.f32 %v1822, %v2649
    %v2651 = vpop.f32.mrb[0].mxu0
    %v2652 = vadd.f32 %v1818, %v2651
    %v2653 = vpop.f32.mrb[0].mxu0
    %v2654 = vadd.f32 %v1822, %v2653
    %2655 = vmatprep.mubr.bf16.mxu0 %v1666
    %2656 = vmatmul.mubr.bf16.gmra.mrb[0].mxu0 %v1665
    %v2657 = vpop.f32.mrb[0].mxu0
    %v2658 = vadd.f32 %v1818, %v2657
    %v2659 = vpop.f32.mrb[0].mxu0
    %v2660 = vadd.f32 %v1822, %v2659
    %v2661 = vpop.f32.mrb[0].mxu0
    %v2662 = vadd.f32 %v1818, %v2661
    %v2663 = vpop.f32.mrb[0].mxu0
    %v2664 = vadd.f32 %v1822, %v2663
    %2665 = vmatprep.mubr.bf16.mxu0 %v1670
    %2666 = vmatmul.mubr.bf16.gmra.mrb[0].mxu0 %v1669
    %v2667 = vpop.f32.mrb[0].mxu0
    %v2668 = vadd.f32 %v1818, %v2667
    %v2669 = vpop.f32.mrb[0].mxu0
    %v2670 = vadd.f32 %v1822, %v2669
    %v2671 = vpop.f32.mrb[0].mxu0
    %v2672 = vadd.f32 %v1818, %v2671
    %v2673 = vpop.f32.mrb[0].mxu0
    %v2674 = vadd.f32 %v1822, %v2673
    %2675 = vmatprep.mubr.bf16.mxu0 %v1674
    %2676 = vmatmul.mubr.bf16.gmra.mrb[0].mxu0 %v1673
    %v2677 = vpop.f32.mrb[0].mxu0
    %v2678 = vadd.f32 %v1818, %v2677
    %v2679 = vpop.f32.mrb[0].mxu0
    %v2680 = vadd.f32 %v1822, %v2679
    %v2681 = vpop.f32.mrb[0].mxu0
    %v2682 = vadd.f32 %v1818, %v2681
    %v2683 = vpop.f32.mrb[0].mxu0
    %v2684 = vadd.f32 %v1822, %v2683
    %2685 = vdwg.mxu0
    %2686 = vmatprep.subr.bf16.mxu0 %v2278
    %2687 = vmatpush1.bf16.msra.mxu0 %v2277
    %2688 = vmatprep.subr.bf16.mxu0 %v2282
    %2689 = vmatpush1.bf16.msra.mxu0 %v2281
    %2690 = vmatprep.subr.bf16.mxu0 %v2286
    %2691 = vmatpush1.bf16.msra.mxu0 %v2285
    %2692 = vmatprep.subr.bf16.mxu0 %v2290
    %2693 = vmatpush1.bf16.msra.mxu0 %v2289
    %2694 = vmatprep.subr.bf16.mxu0 %v2294
    %2695 = vmatpush1.bf16.msra.mxu0 %v2293
    %2696 = vmatprep.subr.bf16.mxu0 %v2298
    %2697 = vmatpush1.bf16.msra.mxu0 %v2297
    %2698 = vmatprep.subr.bf16.mxu0 %v2302
    %2699 = vmatpush1.bf16.msra.mxu0 %v2301
    %2700 = vmatprep.subr.bf16.mxu0 %v2306
    %2701 = vmatpush1.bf16.msra.mxu0 %v2305
    %2702 = vmatprep.subr.bf16.mxu0 %v2310
    %2703 = vmatpush1.bf16.msra.mxu0 %v2309
    %2704 = vmatprep.subr.bf16.mxu0 %v2314
    %2705 = vmatpush1.bf16.msra.mxu0 %v2313
    %2706 = vmatprep.subr.bf16.mxu0 %v2318
    %2707 = vmatpush1.bf16.msra.mxu0 %v2317
    %2708 = vmatprep.subr.bf16.mxu0 %v2322
    %2709 = vmatpush1.bf16.msra.mxu0 %v2321
    %2710 = vmatprep.subr.bf16.mxu0 %v2326
    %2711 = vmatpush1.bf16.msra.mxu0 %v2325
    %2712 = vmatprep.subr.bf16.mxu0 %v2330
    %2713 = vmatpush1.bf16.msra.mxu0 %v2329
    %2714 = vmatprep.subr.bf16.mxu0 %v2334
    %2715 = vmatpush1.bf16.msra.mxu0 %v2333
    %2716 = vmatprep.subr.bf16.mxu0 %v2338
    %2717 = vmatpush1.bf16.msra.mxu0 %v2337
    %2718 = vmatprep.mubr.bf16.mxu0 %v1664
    %2719 = vmatmul.mubr.bf16.gmra.mrb[0].mxu0 %v1663
    %v2720 = vpop.f32.mrb[0].mxu0
    %v2721 = vadd.f32 %v2648, %v2720
    %v2722 = vpop.f32.mrb[0].mxu0
    %v2723 = vadd.f32 %v2650, %v2722
    %v2724 = vpop.f32.mrb[0].mxu0
    %v2725 = vadd.f32 %v2652, %v2724
    %v2726 = vpop.f32.mrb[0].mxu0
    %v2727 = vadd.f32 %v2654, %v2726
    %2728 = vmatprep.mubr.bf16.mxu0 %v1668
    %2729 = vmatmul.mubr.bf16.gmra.mrb[0].mxu0 %v1667
    %v2730 = vpop.f32.mrb[0].mxu0
    %v2731 = vadd.f32 %v2658, %v2730
    %v2732 = vpop.f32.mrb[0].mxu0
    %v2733 = vadd.f32 %v2660, %v2732
    %v2734 = vpop.f32.mrb[0].mxu0
    %v2735 = vadd.f32 %v2662, %v2734
    %v2736 = vpop.f32.mrb[0].mxu0
    %v2737 = vadd.f32 %v2664, %v2736
    %2738 = vmatprep.mubr.bf16.mxu0 %v1672
    %2739 = vmatmul.mubr.bf16.gmra.mrb[0].mxu0 %v1671
    %v2740 = vpop.f32.mrb[0].mxu0
    %v2741 = vadd.f32 %v2668, %v2740
    %v2742 = vpop.f32.mrb[0].mxu0
    %v2743 = vadd.f32 %v2670, %v2742
    %v2744 = vpop.f32.mrb[0].mxu0
    %v2745 = vadd.f32 %v2672, %v2744
    %v2746 = vpop.f32.mrb[0].mxu0
    %v2747 = vadd.f32 %v2674, %v2746
    %2748 = vmatprep.mubr.bf16.mxu0 %v1676
    %2749 = vmatmul.mubr.bf16.gmra.mrb[0].mxu0 %v1675
    %v2750 = vpop.f32.mrb[0].mxu0
    %v2751 = vadd.f32 %v2678, %v2750
    %v2752 = vpop.f32.mrb[0].mxu0
    %v2753 = vadd.f32 %v2680, %v2752
    %v2754 = vpop.f32.mrb[0].mxu0
    %v2755 = vadd.f32 %v2682, %v2754
    %v2756 = vpop.f32.mrb[0].mxu0
    %v2757 = vadd.f32 %v2684, %v2756
    %2758 = vdwg.mxu0
    %v2759 = vmax.f32 %v2575, 0.0
    %v2760 = vmax.f32 %v2577, 0.0
    %v2761 = vmax.f32 %v2721, 0.0
    %v2762 = vmax.f32 %v2723, 0.0
    %v2763 = vmax.f32 %v2579, 0.0
    %v2764 = vmax.f32 %v2581, 0.0
    %v2765 = vmax.f32 %v2725, 0.0
    %v2766 = vmax.f32 %v2727, 0.0
    %v2767 = vmax.f32 %v2585, 0.0
    %v2768 = vmax.f32 %v2587, 0.0
    %v2769 = vmax.f32 %v2731, 0.0
    %v2770 = vmax.f32 %v2733, 0.0
    %v2771 = vmax.f32 %v2589, 0.0
    %v2772 = vmax.f32 %v2591, 0.0
    %v2773 = vmax.f32 %v2735, 0.0
    %v2774 = vmax.f32 %v2737, 0.0
    %v2775 = vmax.f32 %v2595, 0.0
    %v2776 = vmax.f32 %v2597, 0.0
    %v2777 = vmax.f32 %v2741, 0.0
    %v2778 = vmax.f32 %v2743, 0.0
    %v2779 = vmax.f32 %v2599, 0.0
    %v2780 = vmax.f32 %v2601, 0.0
    %v2781 = vmax.f32 %v2745, 0.0
    %v2782 = vmax.f32 %v2747, 0.0
    %v2783 = vmax.f32 %v2605, 0.0
    %v2784 = vmax.f32 %v2607, 0.0
    %v2785 = vmax.f32 %v2751, 0.0
    %v2786 = vmax.f32 %v2753, 0.0
    %v2787 = vmax.f32 %v2609, 0.0
    %v2788 = vmax.f32 %v2611, 0.0
    %v2789 = vmax.f32 %v2755, 0.0
    %v2790 = vmax.f32 %v2757, 0.0
    %v2791 = vpack.c.bf16 %v2763, %v2759
    %v2792 = vpack.c.bf16 %v2764, %v2760
    %v2793 = vpack.c.bf16 %v2765, %v2761
    %v2794 = vpack.c.bf16 %v2766, %v2762
    %v2795 = vpack.c.bf16 %v2771, %v2767
    %v2796 = vpack.c.bf16 %v2772, %v2768
    %v2797 = vpack.c.bf16 %v2773, %v2769
    %v2798 = vpack.c.bf16 %v2774, %v2770
    %v2799 = vpack.c.bf16 %v2779, %v2775
    %v2800 = vpack.c.bf16 %v2780, %v2776
    %v2801 = vpack.c.bf16 %v2781, %v2777
    %v2802 = vpack.c.bf16 %v2782, %v2778
    %v2803 = vpack.c.bf16 %v2787, %v2783
    %v2804 = vpack.c.bf16 %v2788, %v2784
    %v2805 = vpack.c.bf16 %v2789, %v2785
    %v2806 = vpack.c.bf16 %v2790, %v2786
    %v2807 = vld [vmem:[#allocation7] sm:$0xff]
    %v2808 = vld [vmem:[#allocation7 + $0x8] sm:$0xff]
    %v2809 = vld [vmem:[#allocation7 + $0x10] sm:$0xff]
    %v2810 = vld [vmem:[#allocation7 + $0x18] sm:$0xff]
    %v2811 = vld [vmem:[#allocation7 + $0x20] sm:$0xff]
    %v2812 = vld [vmem:[#allocation7 + $0x28] sm:$0xff]
    %v2813 = vld [vmem:[#allocation7 + $0x30] sm:$0xff]
    %v2814 = vld [vmem:[#allocation7 + $0x38] sm:$0xff]
    %v2815 = vld [vmem:[#allocation7 + $0x40] sm:$0xff]
    %v2816 = vld [vmem:[#allocation7 + $0x48] sm:$0xff]
    %v2817 = vld [vmem:[#allocation7 + $0x50] sm:$0xff]
    %v2818 = vld [vmem:[#allocation7 + $0x58] sm:$0xff]
    %v2819 = vld [vmem:[#allocation7 + $0x60] sm:$0xff]
    %v2820 = vld [vmem:[#allocation7 + $0x68] sm:$0xff]
    %v2821 = vld [vmem:[#allocation7 + $0x70] sm:$0xff]
    %v2822 = vld [vmem:[#allocation7 + $0x78] sm:$0xff]
    %v2823 = vld [vmem:[#allocation7 + $0x80] sm:$0xff]
    %v2824 = vld [vmem:[#allocation7 + $0x88] sm:$0xff]
    %v2825 = vld [vmem:[#allocation7 + $0x90] sm:$0xff]
    %v2826 = vld [vmem:[#allocation7 + $0x98] sm:$0xff]
    %v2827 = vld [vmem:[#allocation7 + $0xa0] sm:$0xff]
    %v2828 = vld [vmem:[#allocation7 + $0xa8] sm:$0xff]
    %v2829 = vld [vmem:[#allocation7 + $0xb0] sm:$0xff]
    %v2830 = vld [vmem:[#allocation7 + $0xb8] sm:$0xff]
    %v2831 = vld [vmem:[#allocation7 + $0xc0] sm:$0xff]
    %v2832 = vld [vmem:[#allocation7 + $0xc8] sm:$0xff]
    %v2833 = vld [vmem:[#allocation7 + $0xd0] sm:$0xff]
    %v2834 = vld [vmem:[#allocation7 + $0xd8] sm:$0xff]
    %v2835 = vld [vmem:[#allocation7 + $0xe0] sm:$0xff]
    %v2836 = vld [vmem:[#allocation7 + $0xe8] sm:$0xff]
    %v2837 = vld [vmem:[#allocation7 + $0xf0] sm:$0xff]
    %v2838 = vld [vmem:[#allocation7 + $0xf8] sm:$0xff]
    %v2839 = vld [vmem:[#allocation7 + $0x100] sm:$0xff]
    %v2840 = vld [vmem:[#allocation7 + $0x108] sm:$0xff]
    %v2841 = vld [vmem:[#allocation7 + $0x110] sm:$0xff]
    %v2842 = vld [vmem:[#allocation7 + $0x118] sm:$0xff]
    %v2843 = vld [vmem:[#allocation7 + $0x120] sm:$0xff]
    %v2844 = vld [vmem:[#allocation7 + $0x128] sm:$0xff]
    %v2845 = vld [vmem:[#allocation7 + $0x130] sm:$0xff]
    %v2846 = vld [vmem:[#allocation7 + $0x138] sm:$0xff]
    %v2847 = vld [vmem:[#allocation7 + $0x140] sm:$0xff]
    %v2848 = vld [vmem:[#allocation7 + $0x148] sm:$0xff]
    %v2849 = vld [vmem:[#allocation7 + $0x150] sm:$0xff]
    %v2850 = vld [vmem:[#allocation7 + $0x158] sm:$0xff]
    %v2851 = vld [vmem:[#allocation7 + $0x160] sm:$0xff]
    %v2852 = vld [vmem:[#allocation7 + $0x168] sm:$0xff]
    %v2853 = vld [vmem:[#allocation7 + $0x170] sm:$0xff]
    %v2854 = vld [vmem:[#allocation7 + $0x178] sm:$0xff]
    %v2855 = vld [vmem:[#allocation7 + $0x180] sm:$0xff]
    %v2856 = vld [vmem:[#allocation7 + $0x188] sm:$0xff]
    %v2857 = vld [vmem:[#allocation7 + $0x190] sm:$0xff]
    %v2858 = vld [vmem:[#allocation7 + $0x198] sm:$0xff]
    %v2859 = vld [vmem:[#allocation7 + $0x1a0] sm:$0xff]
    %v2860 = vld [vmem:[#allocation7 + $0x1a8] sm:$0xff]
    %v2861 = vld [vmem:[#allocation7 + $0x1b0] sm:$0xff]
    %v2862 = vld [vmem:[#allocation7 + $0x1b8] sm:$0xff]
    %v2863 = vld [vmem:[#allocation7 + $0x1c0] sm:$0xff]
    %v2864 = vld [vmem:[#allocation7 + $0x1c8] sm:$0xff]
    %v2865 = vld [vmem:[#allocation7 + $0x1d0] sm:$0xff]
    %v2866 = vld [vmem:[#allocation7 + $0x1d8] sm:$0xff]
    %v2867 = vld [vmem:[#allocation7 + $0x1e0] sm:$0xff]
    %v2868 = vld [vmem:[#allocation7 + $0x1e8] sm:$0xff]
    %v2869 = vld [vmem:[#allocation7 + $0x1f0] sm:$0xff]
    %v2870 = vld [vmem:[#allocation7 + $0x1f8] sm:$0xff]
    %v2871 = vld [vmem:[#allocation7 + $0x200] sm:$0xff]
    %v2872 = vld [vmem:[#allocation7 + $0x208] sm:$0xff]
    %v2873 = vld [vmem:[#allocation7 + $0x210] sm:$0xff]
    %v2874 = vld [vmem:[#allocation7 + $0x218] sm:$0xff]
    %v2875 = vld [vmem:[#allocation7 + $0x220] sm:$0xff]
    %v2876 = vld [vmem:[#allocation7 + $0x228] sm:$0xff]
    %v2877 = vld [vmem:[#allocation7 + $0x230] sm:$0xff]
    %v2878 = vld [vmem:[#allocation7 + $0x238] sm:$0xff]
    %v2879 = vld [vmem:[#allocation7 + $0x240] sm:$0xff]
    %v2880 = vld [vmem:[#allocation7 + $0x248] sm:$0xff]
    %v2881 = vld [vmem:[#allocation7 + $0x250] sm:$0xff]
    %v2882 = vld [vmem:[#allocation7 + $0x258] sm:$0xff]
    %v2883 = vld [vmem:[#allocation7 + $0x260] sm:$0xff]
    %v2884 = vld [vmem:[#allocation7 + $0x268] sm:$0xff]
    %v2885 = vld [vmem:[#allocation7 + $0x270] sm:$0xff]
    %v2886 = vld [vmem:[#allocation7 + $0x278] sm:$0xff]
    %v2887 = vld [vmem:[#allocation7 + $0x280] sm:$0xff]
    %v2888 = vld [vmem:[#allocation7 + $0x288] sm:$0xff]
    %v2889 = vld [vmem:[#allocation7 + $0x290] sm:$0xff]
    %v2890 = vld [vmem:[#allocation7 + $0x298] sm:$0xff]
    %v2891 = vld [vmem:[#allocation7 + $0x2a0] sm:$0xff]
    %v2892 = vld [vmem:[#allocation7 + $0x2a8] sm:$0xff]
    %v2893 = vld [vmem:[#allocation7 + $0x2b0] sm:$0xff]
    %v2894 = vld [vmem:[#allocation7 + $0x2b8] sm:$0xff]
    %v2895 = vld [vmem:[#allocation7 + $0x2c0] sm:$0xff]
    %v2896 = vld [vmem:[#allocation7 + $0x2c8] sm:$0xff]
    %v2897 = vld [vmem:[#allocation7 + $0x2d0] sm:$0xff]
    %v2898 = vld [vmem:[#allocation7 + $0x2d8] sm:$0xff]
    %v2899 = vld [vmem:[#allocation7 + $0x2e0] sm:$0xff]
    %v2900 = vld [vmem:[#allocation7 + $0x2e8] sm:$0xff]
    %v2901 = vld [vmem:[#allocation7 + $0x2f0] sm:$0xff]
    %v2902 = vld [vmem:[#allocation7 + $0x2f8] sm:$0xff]
    %v2903 = vld [vmem:[#allocation7 + $0x300] sm:$0xff]
    %v2904 = vld [vmem:[#allocation7 + $0x308] sm:$0xff]
    %v2905 = vld [vmem:[#allocation7 + $0x310] sm:$0xff]
    %v2906 = vld [vmem:[#allocation7 + $0x318] sm:$0xff]
    %v2907 = vld [vmem:[#allocation7 + $0x320] sm:$0xff]
    %v2908 = vld [vmem:[#allocation7 + $0x328] sm:$0xff]
    %v2909 = vld [vmem:[#allocation7 + $0x330] sm:$0xff]
    %v2910 = vld [vmem:[#allocation7 + $0x338] sm:$0xff]
    %v2911 = vld [vmem:[#allocation7 + $0x340] sm:$0xff]
    %v2912 = vld [vmem:[#allocation7 + $0x348] sm:$0xff]
    %v2913 = vld [vmem:[#allocation7 + $0x350] sm:$0xff]
    %v2914 = vld [vmem:[#allocation7 + $0x358] sm:$0xff]
    %v2915 = vld [vmem:[#allocation7 + $0x360] sm:$0xff]
    %v2916 = vld [vmem:[#allocation7 + $0x368] sm:$0xff]
    %v2917 = vld [vmem:[#allocation7 + $0x370] sm:$0xff]
    %v2918 = vld [vmem:[#allocation7 + $0x378] sm:$0xff]
    %v2919 = vld [vmem:[#allocation7 + $0x380] sm:$0xff]
    %v2920 = vld [vmem:[#allocation7 + $0x388] sm:$0xff]
    %v2921 = vld [vmem:[#allocation7 + $0x390] sm:$0xff]
    %v2922 = vld [vmem:[#allocation7 + $0x398] sm:$0xff]
    %v2923 = vld [vmem:[#allocation7 + $0x3a0] sm:$0xff]
    %v2924 = vld [vmem:[#allocation7 + $0x3a8] sm:$0xff]
    %v2925 = vld [vmem:[#allocation7 + $0x3b0] sm:$0xff]
    %v2926 = vld [vmem:[#allocation7 + $0x3b8] sm:$0xff]
    %v2927 = vld [vmem:[#allocation7 + $0x3c0] sm:$0xff]
    %v2928 = vld [vmem:[#allocation7 + $0x3c8] sm:$0xff]
    %v2929 = vld [vmem:[#allocation7 + $0x3d0] sm:$0xff]
    %v2930 = vld [vmem:[#allocation7 + $0x3d8] sm:$0xff]
    %v2931 = vld [vmem:[#allocation7 + $0x3e0] sm:$0xff]
    %v2932 = vld [vmem:[#allocation7 + $0x3e8] sm:$0xff]
    %v2933 = vld [vmem:[#allocation7 + $0x3f0] sm:$0xff]
    %v2934 = vld [vmem:[#allocation7 + $0x3f8] sm:$0xff]
    %v2935 = vld [vmem:[%s8] sm:$0xf]
    %v2937 = vlaneseq
    %v2938 = vshrl.u32 %v2937, 7
    %v2939 = vsub.s32 0, %v2938
    %v2940 = vrot.slane %v2935, %v2939
    %v2941 = vlaneseq
    %v2942 = vshrl.u32 %v2941, 7
    %v2943 = vsub.s32 1, %v2942
    %v2944 = vrot.slane %v2935, %v2943
    %v2945 = vlaneseq
    %v2946 = vshrl.u32 %v2945, 7
    %v2947 = vsub.s32 2, %v2946
    %v2948 = vrot.slane %v2935, %v2947
    %v2949 = vlaneseq
    %v2950 = vshrl.u32 %v2949, 7
    %v2951 = vsub.s32 3, %v2950
    %v2952 = vrot.slane %v2935, %v2951
    %v3085 = vunpack.c.l.b16 %v2807
    %v3086 = vunpack.c.h.b16 %v2807
    %v3087 = vunpack.c.l.b16 %v2808
    %v3088 = vunpack.c.h.b16 %v2808
    %v3089 = vunpack.c.l.b16 %v2809
    %v3090 = vunpack.c.h.b16 %v2809
    %v3091 = vunpack.c.l.b16 %v2810
    %v3092 = vunpack.c.h.b16 %v2810
    %v3093 = vunpack.c.l.b16 %v2811
    %v3094 = vunpack.c.h.b16 %v2811
    %v3095 = vunpack.c.l.b16 %v2812
    %v3096 = vunpack.c.h.b16 %v2812
    %v3097 = vunpack.c.l.b16 %v2813
    %v3098 = vunpack.c.h.b16 %v2813
    %v3099 = vunpack.c.l.b16 %v2814
    %v3100 = vunpack.c.h.b16 %v2814
    %v3101 = vunpack.c.l.b16 %v2815
    %v3102 = vunpack.c.h.b16 %v2815
    %v3103 = vunpack.c.l.b16 %v2816
    %v3104 = vunpack.c.h.b16 %v2816
    %v3105 = vunpack.c.l.b16 %v2817
    %v3106 = vunpack.c.h.b16 %v2817
    %v3107 = vunpack.c.l.b16 %v2818
    %v3108 = vunpack.c.h.b16 %v2818
    %v3109 = vunpack.c.l.b16 %v2819
    %v3110 = vunpack.c.h.b16 %v2819
    %v3111 = vunpack.c.l.b16 %v2820
    %v3112 = vunpack.c.h.b16 %v2820
    %v3113 = vunpack.c.l.b16 %v2821
    %v3114 = vunpack.c.h.b16 %v2821
    %v3115 = vunpack.c.l.b16 %v2822
    %v3116 = vunpack.c.h.b16 %v2822
    %v3117 = vunpack.c.l.b16 %v2823
    %v3118 = vunpack.c.h.b16 %v2823
    %v3119 = vunpack.c.l.b16 %v2824
    %v3120 = vunpack.c.h.b16 %v2824
    %v3121 = vunpack.c.l.b16 %v2825
    %v3122 = vunpack.c.h.b16 %v2825
    %v3123 = vunpack.c.l.b16 %v2826
    %v3124 = vunpack.c.h.b16 %v2826
    %v3125 = vunpack.c.l.b16 %v2827
    %v3126 = vunpack.c.h.b16 %v2827
    %v3127 = vunpack.c.l.b16 %v2828
    %v3128 = vunpack.c.h.b16 %v2828
    %v3129 = vunpack.c.l.b16 %v2829
    %v3130 = vunpack.c.h.b16 %v2829
    %v3131 = vunpack.c.l.b16 %v2830
    %v3132 = vunpack.c.h.b16 %v2830
    %v3133 = vunpack.c.l.b16 %v2831
    %v3134 = vunpack.c.h.b16 %v2831
    %v3135 = vunpack.c.l.b16 %v2832
    %v3136 = vunpack.c.h.b16 %v2832
    %v3137 = vunpack.c.l.b16 %v2833
    %v3138 = vunpack.c.h.b16 %v2833
    %v3139 = vunpack.c.l.b16 %v2834
    %v3140 = vunpack.c.h.b16 %v2834
    %v3141 = vunpack.c.l.b16 %v2835
    %v3142 = vunpack.c.h.b16 %v2835
    %v3143 = vunpack.c.l.b16 %v2836
    %v3144 = vunpack.c.h.b16 %v2836
    %v3145 = vunpack.c.l.b16 %v2837
    %v3146 = vunpack.c.h.b16 %v2837
    %v3147 = vunpack.c.l.b16 %v2838
    %v3148 = vunpack.c.h.b16 %v2838
    %v3149 = vunpack.c.l.b16 %v2839
    %v3150 = vunpack.c.h.b16 %v2839
    %v3151 = vunpack.c.l.b16 %v2840
    %v3152 = vunpack.c.h.b16 %v2840
    %v3153 = vunpack.c.l.b16 %v2841
    %v3154 = vunpack.c.h.b16 %v2841
    %v3155 = vunpack.c.l.b16 %v2842
    %v3156 = vunpack.c.h.b16 %v2842
    %v3157 = vunpack.c.l.b16 %v2843
    %v3158 = vunpack.c.h.b16 %v2843
    %v3159 = vunpack.c.l.b16 %v2844
    %v3160 = vunpack.c.h.b16 %v2844
    %v3161 = vunpack.c.l.b16 %v2845
    %v3162 = vunpack.c.h.b16 %v2845
    %v3163 = vunpack.c.l.b16 %v2846
    %v3164 = vunpack.c.h.b16 %v2846
    %v3165 = vunpack.c.l.b16 %v2847
    %v3166 = vunpack.c.h.b16 %v2847
    %v3167 = vunpack.c.l.b16 %v2848
    %v3168 = vunpack.c.h.b16 %v2848
    %v3169 = vunpack.c.l.b16 %v2849
    %v3170 = vunpack.c.h.b16 %v2849
    %v3171 = vunpack.c.l.b16 %v2850
    %v3172 = vunpack.c.h.b16 %v2850
    %v3173 = vunpack.c.l.b16 %v2851
    %v3174 = vunpack.c.h.b16 %v2851
    %v3175 = vunpack.c.l.b16 %v2852
    %v3176 = vunpack.c.h.b16 %v2852
    %v3177 = vunpack.c.l.b16 %v2853
    %v3178 = vunpack.c.h.b16 %v2853
    %v3179 = vunpack.c.l.b16 %v2854
    %v3180 = vunpack.c.h.b16 %v2854
    %v3181 = vunpack.c.l.b16 %v2855
    %v3182 = vunpack.c.h.b16 %v2855
    %v3183 = vunpack.c.l.b16 %v2856
    %v3184 = vunpack.c.h.b16 %v2856
    %v3185 = vunpack.c.l.b16 %v2857
    %v3186 = vunpack.c.h.b16 %v2857
    %v3187 = vunpack.c.l.b16 %v2858
    %v3188 = vunpack.c.h.b16 %v2858
    %v3189 = vunpack.c.l.b16 %v2859
    %v3190 = vunpack.c.h.b16 %v2859
    %v3191 = vunpack.c.l.b16 %v2860
    %v3192 = vunpack.c.h.b16 %v2860
    %v3193 = vunpack.c.l.b16 %v2861
    %v3194 = vunpack.c.h.b16 %v2861
    %v3195 = vunpack.c.l.b16 %v2862
    %v3196 = vunpack.c.h.b16 %v2862
    %v3197 = vunpack.c.l.b16 %v2863
    %v3198 = vunpack.c.h.b16 %v2863
    %v3199 = vunpack.c.l.b16 %v2864
    %v3200 = vunpack.c.h.b16 %v2864
    %v3201 = vunpack.c.l.b16 %v2865
    %v3202 = vunpack.c.h.b16 %v2865
    %v3203 = vunpack.c.l.b16 %v2866
    %v3204 = vunpack.c.h.b16 %v2866
    %v3205 = vunpack.c.l.b16 %v2867
    %v3206 = vunpack.c.h.b16 %v2867
    %v3207 = vunpack.c.l.b16 %v2868
    %v3208 = vunpack.c.h.b16 %v2868
    %v3209 = vunpack.c.l.b16 %v2869
    %v3210 = vunpack.c.h.b16 %v2869
    %v3211 = vunpack.c.l.b16 %v2870
    %v3212 = vunpack.c.h.b16 %v2870
    %v3213 = vunpack.c.l.b16 %v2871
    %v3214 = vunpack.c.h.b16 %v2871
    %v3215 = vunpack.c.l.b16 %v2872
    %v3216 = vunpack.c.h.b16 %v2872
    %v3217 = vunpack.c.l.b16 %v2873
    %v3218 = vunpack.c.h.b16 %v2873
    %v3219 = vunpack.c.l.b16 %v2874
    %v3220 = vunpack.c.h.b16 %v2874
    %v3221 = vunpack.c.l.b16 %v2875
    %v3222 = vunpack.c.h.b16 %v2875
    %v3223 = vunpack.c.l.b16 %v2876
    %v3224 = vunpack.c.h.b16 %v2876
    %v3225 = vunpack.c.l.b16 %v2877
    %v3226 = vunpack.c.h.b16 %v2877
    %v3227 = vunpack.c.l.b16 %v2878
    %v3228 = vunpack.c.h.b16 %v2878
    %v3229 = vunpack.c.l.b16 %v2879
    %v3230 = vunpack.c.h.b16 %v2879
    %v3231 = vunpack.c.l.b16 %v2880
    %v3232 = vunpack.c.h.b16 %v2880
    %v3233 = vunpack.c.l.b16 %v2881
    %v3234 = vunpack.c.h.b16 %v2881
    %v3235 = vunpack.c.l.b16 %v2882
    %v3236 = vunpack.c.h.b16 %v2882
    %v3237 = vunpack.c.l.b16 %v2883
    %v3238 = vunpack.c.h.b16 %v2883
    %v3239 = vunpack.c.l.b16 %v2884
    %v3240 = vunpack.c.h.b16 %v2884
    %v3241 = vunpack.c.l.b16 %v2885
    %v3242 = vunpack.c.h.b16 %v2885
    %v3243 = vunpack.c.l.b16 %v2886
    %v3244 = vunpack.c.h.b16 %v2886
    %v3245 = vunpack.c.l.b16 %v2887
    %v3246 = vunpack.c.h.b16 %v2887
    %v3247 = vunpack.c.l.b16 %v2888
    %v3248 = vunpack.c.h.b16 %v2888
    %v3249 = vunpack.c.l.b16 %v2889
    %v3250 = vunpack.c.h.b16 %v2889
    %v3251 = vunpack.c.l.b16 %v2890
    %v3252 = vunpack.c.h.b16 %v2890
    %v3253 = vunpack.c.l.b16 %v2891
    %v3254 = vunpack.c.h.b16 %v2891
    %v3255 = vunpack.c.l.b16 %v2892
    %v3256 = vunpack.c.h.b16 %v2892
    %v3257 = vunpack.c.l.b16 %v2893
    %v3258 = vunpack.c.h.b16 %v2893
    %v3259 = vunpack.c.l.b16 %v2894
    %v3260 = vunpack.c.h.b16 %v2894
    %v3261 = vunpack.c.l.b16 %v2895
    %v3262 = vunpack.c.h.b16 %v2895
    %v3263 = vunpack.c.l.b16 %v2896
    %v3264 = vunpack.c.h.b16 %v2896
    %v3265 = vunpack.c.l.b16 %v2897
    %v3266 = vunpack.c.h.b16 %v2897
    %v3267 = vunpack.c.l.b16 %v2898
    %v3268 = vunpack.c.h.b16 %v2898
    %v3269 = vunpack.c.l.b16 %v2899
    %v3270 = vunpack.c.h.b16 %v2899
    %v3271 = vunpack.c.l.b16 %v2900
    %v3272 = vunpack.c.h.b16 %v2900
    %v3273 = vunpack.c.l.b16 %v2901
    %v3274 = vunpack.c.h.b16 %v2901
    %v3275 = vunpack.c.l.b16 %v2902
    %v3276 = vunpack.c.h.b16 %v2902
    %v3277 = vunpack.c.l.b16 %v2903
    %v3278 = vunpack.c.h.b16 %v2903
    %v3279 = vunpack.c.l.b16 %v2904
    %v3280 = vunpack.c.h.b16 %v2904
    %v3281 = vunpack.c.l.b16 %v2905
    %v3282 = vunpack.c.h.b16 %v2905
    %v3283 = vunpack.c.l.b16 %v2906
    %v3284 = vunpack.c.h.b16 %v2906
    %v3285 = vunpack.c.l.b16 %v2907
    %v3286 = vunpack.c.h.b16 %v2907
    %v3287 = vunpack.c.l.b16 %v2908
    %v3288 = vunpack.c.h.b16 %v2908
    %v3289 = vunpack.c.l.b16 %v2909
    %v3290 = vunpack.c.h.b16 %v2909
    %v3291 = vunpack.c.l.b16 %v2910
    %v3292 = vunpack.c.h.b16 %v2910
    %v3293 = vunpack.c.l.b16 %v2911
    %v3294 = vunpack.c.h.b16 %v2911
    %v3295 = vunpack.c.l.b16 %v2912
    %v3296 = vunpack.c.h.b16 %v2912
    %v3297 = vunpack.c.l.b16 %v2913
    %v3298 = vunpack.c.h.b16 %v2913
    %v3299 = vunpack.c.l.b16 %v2914
    %v3300 = vunpack.c.h.b16 %v2914
    %v3301 = vunpack.c.l.b16 %v2915
    %v3302 = vunpack.c.h.b16 %v2915
    %v3303 = vunpack.c.l.b16 %v2916
    %v3304 = vunpack.c.h.b16 %v2916
    %v3305 = vunpack.c.l.b16 %v2917
    %v3306 = vunpack.c.h.b16 %v2917
    %v3307 = vunpack.c.l.b16 %v2918
    %v3308 = vunpack.c.h.b16 %v2918
    %v3309 = vunpack.c.l.b16 %v2919
    %v3310 = vunpack.c.h.b16 %v2919
    %v3311 = vunpack.c.l.b16 %v2920
    %v3312 = vunpack.c.h.b16 %v2920
    %v3313 = vunpack.c.l.b16 %v2921
    %v3314 = vunpack.c.h.b16 %v2921
    %v3315 = vunpack.c.l.b16 %v2922
    %v3316 = vunpack.c.h.b16 %v2922
    %v3317 = vunpack.c.l.b16 %v2923
    %v3318 = vunpack.c.h.b16 %v2923
    %v3319 = vunpack.c.l.b16 %v2924
    %v3320 = vunpack.c.h.b16 %v2924
    %v3321 = vunpack.c.l.b16 %v2925
    %v3322 = vunpack.c.h.b16 %v2925
    %v3323 = vunpack.c.l.b16 %v2926
    %v3324 = vunpack.c.h.b16 %v2926
    %v3325 = vunpack.c.l.b16 %v2927
    %v3326 = vunpack.c.h.b16 %v2927
    %v3327 = vunpack.c.l.b16 %v2928
    %v3328 = vunpack.c.h.b16 %v2928
    %v3329 = vunpack.c.l.b16 %v2929
    %v3330 = vunpack.c.h.b16 %v2929
    %v3331 = vunpack.c.l.b16 %v2930
    %v3332 = vunpack.c.h.b16 %v2930
    %v3333 = vunpack.c.l.b16 %v2931
    %v3334 = vunpack.c.h.b16 %v2931
    %v3335 = vunpack.c.l.b16 %v2932
    %v3336 = vunpack.c.h.b16 %v2932
    %v3337 = vunpack.c.l.b16 %v2933
    %v3338 = vunpack.c.h.b16 %v2933
    %v3339 = vunpack.c.l.b16 %v2934
    %v3340 = vunpack.c.h.b16 %v2934
    %v3341 = vpack.c.b16 %v3089, %v3085
    %v3342 = vpack.c.b16 %v3090, %v3086
    %v3343 = vpack.c.b16 %v3091, %v3087
    %v3344 = vpack.c.b16 %v3092, %v3088
    %v3345 = vpack.c.b16 %v3097, %v3093
    %v3346 = vpack.c.b16 %v3098, %v3094
    %v3347 = vpack.c.b16 %v3099, %v3095
    %v3348 = vpack.c.b16 %v3100, %v3096
    %v3349 = vpack.c.b16 %v3105, %v3101
    %v3350 = vpack.c.b16 %v3106, %v3102
    %v3351 = vpack.c.b16 %v3107, %v3103
    %v3352 = vpack.c.b16 %v3108, %v3104
    %v3353 = vpack.c.b16 %v3113, %v3109
    %v3354 = vpack.c.b16 %v3114, %v3110
    %v3355 = vpack.c.b16 %v3115, %v3111
    %v3356 = vpack.c.b16 %v3116, %v3112
    %v3357 = vpack.c.b16 %v3121, %v3117
    %v3358 = vpack.c.b16 %v3122, %v3118
    %v3359 = vpack.c.b16 %v3123, %v3119
    %v3360 = vpack.c.b16 %v3124, %v3120
    %v3361 = vpack.c.b16 %v3129, %v3125
    %v3362 = vpack.c.b16 %v3130, %v3126
    %v3363 = vpack.c.b16 %v3131, %v3127
    %v3364 = vpack.c.b16 %v3132, %v3128
    %v3365 = vpack.c.b16 %v3137, %v3133
    %v3366 = vpack.c.b16 %v3138, %v3134
    %v3367 = vpack.c.b16 %v3139, %v3135
    %v3368 = vpack.c.b16 %v3140, %v3136
    %v3369 = vpack.c.b16 %v3145, %v3141
    %v3370 = vpack.c.b16 %v3146, %v3142
    %v3371 = vpack.c.b16 %v3147, %v3143
    %v3372 = vpack.c.b16 %v3148, %v3144
    %v3373 = vpack.c.b16 %v3153, %v3149
    %v3374 = vpack.c.b16 %v3154, %v3150
    %v3375 = vpack.c.b16 %v3155, %v3151
    %v3376 = vpack.c.b16 %v3156, %v3152
    %v3377 = vpack.c.b16 %v3161, %v3157
    %v3378 = vpack.c.b16 %v3162, %v3158
    %v3379 = vpack.c.b16 %v3163, %v3159
    %v3380 = vpack.c.b16 %v3164, %v3160
    %v3381 = vpack.c.b16 %v3169, %v3165
    %v3382 = vpack.c.b16 %v3170, %v3166
    %v3383 = vpack.c.b16 %v3171, %v3167
    %v3384 = vpack.c.b16 %v3172, %v3168
    %v3385 = vpack.c.b16 %v3177, %v3173
    %v3386 = vpack.c.b16 %v3178, %v3174
    %v3387 = vpack.c.b16 %v3179, %v3175
    %v3388 = vpack.c.b16 %v3180, %v3176
    %v3389 = vpack.c.b16 %v3185, %v3181
    %v3390 = vpack.c.b16 %v3186, %v3182
    %v3391 = vpack.c.b16 %v3187, %v3183
    %v3392 = vpack.c.b16 %v3188, %v3184
    %v3393 = vpack.c.b16 %v3193, %v3189
    %v3394 = vpack.c.b16 %v3194, %v3190
    %v3395 = vpack.c.b16 %v3195, %v3191
    %v3396 = vpack.c.b16 %v3196, %v3192
    %v3397 = vpack.c.b16 %v3201, %v3197
    %v3398 = vpack.c.b16 %v3202, %v3198
    %v3399 = vpack.c.b16 %v3203, %v3199
    %v3400 = vpack.c.b16 %v3204, %v3200
    %v3401 = vpack.c.b16 %v3209, %v3205
    %v3402 = vpack.c.b16 %v3210, %v3206
    %v3403 = vpack.c.b16 %v3211, %v3207
    %v3404 = vpack.c.b16 %v3212, %v3208
    %v3405 = vpack.c.b16 %v3217, %v3213
    %v3406 = vpack.c.b16 %v3218, %v3214
    %v3407 = vpack.c.b16 %v3219, %v3215
    %v3408 = vpack.c.b16 %v3220, %v3216
    %v3409 = vpack.c.b16 %v3225, %v3221
    %v3410 = vpack.c.b16 %v3226, %v3222
    %v3411 = vpack.c.b16 %v3227, %v3223
    %v3412 = vpack.c.b16 %v3228, %v3224
    %v3413 = vpack.c.b16 %v3233, %v3229
    %v3414 = vpack.c.b16 %v3234, %v3230
    %v3415 = vpack.c.b16 %v3235, %v3231
    %v3416 = vpack.c.b16 %v3236, %v3232
    %v3417 = vpack.c.b16 %v3241, %v3237
    %v3418 = vpack.c.b16 %v3242, %v3238
    %v3419 = vpack.c.b16 %v3243, %v3239
    %v3420 = vpack.c.b16 %v3244, %v3240
    %v3421 = vpack.c.b16 %v3249, %v3245
    %v3422 = vpack.c.b16 %v3250, %v3246
    %v3423 = vpack.c.b16 %v3251, %v3247
    %v3424 = vpack.c.b16 %v3252, %v3248
    %v3425 = vpack.c.b16 %v3257, %v3253
    %v3426 = vpack.c.b16 %v3258, %v3254
    %v3427 = vpack.c.b16 %v3259, %v3255
    %v3428 = vpack.c.b16 %v3260, %v3256
    %v3429 = vpack.c.b16 %v3265, %v3261
    %v3430 = vpack.c.b16 %v3266, %v3262
    %v3431 = vpack.c.b16 %v3267, %v3263
    %v3432 = vpack.c.b16 %v3268, %v3264
    %v3433 = vpack.c.b16 %v3273, %v3269
    %v3434 = vpack.c.b16 %v3274, %v3270
    %v3435 = vpack.c.b16 %v3275, %v3271
    %v3436 = vpack.c.b16 %v3276, %v3272
    %v3437 = vpack.c.b16 %v3281, %v3277
    %v3438 = vpack.c.b16 %v3282, %v3278
    %v3439 = vpack.c.b16 %v3283, %v3279
    %v3440 = vpack.c.b16 %v3284, %v3280
    %v3441 = vpack.c.b16 %v3289, %v3285
    %v3442 = vpack.c.b16 %v3290, %v3286
    %v3443 = vpack.c.b16 %v3291, %v3287
    %v3444 = vpack.c.b16 %v3292, %v3288
    %v3445 = vpack.c.b16 %v3297, %v3293
    %v3446 = vpack.c.b16 %v3298, %v3294
    %v3447 = vpack.c.b16 %v3299, %v3295
    %v3448 = vpack.c.b16 %v3300, %v3296
    %v3449 = vpack.c.b16 %v3305, %v3301
    %v3450 = vpack.c.b16 %v3306, %v3302
    %v3451 = vpack.c.b16 %v3307, %v3303
    %v3452 = vpack.c.b16 %v3308, %v3304
    %v3453 = vpack.c.b16 %v3313, %v3309
    %v3454 = vpack.c.b16 %v3314, %v3310
    %v3455 = vpack.c.b16 %v3315, %v3311
    %v3456 = vpack.c.b16 %v3316, %v3312
    %v3457 = vpack.c.b16 %v3321, %v3317
    %v3458 = vpack.c.b16 %v3322, %v3318
    %v3459 = vpack.c.b16 %v3323, %v3319
    %v3460 = vpack.c.b16 %v3324, %v3320
    %v3461 = vpack.c.b16 %v3329, %v3325
    %v3462 = vpack.c.b16 %v3330, %v3326
    %v3463 = vpack.c.b16 %v3331, %v3327
    %v3464 = vpack.c.b16 %v3332, %v3328
    %v3465 = vpack.c.b16 %v3337, %v3333
    %v3466 = vpack.c.b16 %v3338, %v3334
    %v3467 = vpack.c.b16 %v3339, %v3335
    %v3468 = vpack.c.b16 %v3340, %v3336
    %3597 = vmatprep.subr.bf16.mxu0 %v3342
    %3598 = vmatpush1.bf16.msra.mxu0 %v3341
    %3599 = vmatprep.subr.bf16.mxu0 %v3346
    %3600 = vmatpush1.bf16.msra.mxu0 %v3345
    %3601 = vmatprep.subr.bf16.mxu0 %v3350
    %3602 = vmatpush1.bf16.msra.mxu0 %v3349
    %3603 = vmatprep.subr.bf16.mxu0 %v3354
    %3604 = vmatpush1.bf16.msra.mxu0 %v3353
    %3605 = vmatprep.subr.bf16.mxu0 %v3358
    %3606 = vmatpush1.bf16.msra.mxu0 %v3357
    %3607 = vmatprep.subr.bf16.mxu0 %v3362
    %3608 = vmatpush1.bf16.msra.mxu0 %v3361
    %3609 = vmatprep.subr.bf16.mxu0 %v3366
    %3610 = vmatpush1.bf16.msra.mxu0 %v3365
    %3611 = vmatprep.subr.bf16.mxu0 %v3370
    %3612 = vmatpush1.bf16.msra.mxu0 %v3369
    %3613 = vmatprep.subr.bf16.mxu0 %v3374
    %3614 = vmatpush1.bf16.msra.mxu0 %v3373
    %3615 = vmatprep.subr.bf16.mxu0 %v3378
    %3616 = vmatpush1.bf16.msra.mxu0 %v3377
    %3617 = vmatprep.subr.bf16.mxu0 %v3382
    %3618 = vmatpush1.bf16.msra.mxu0 %v3381
    %3619 = vmatprep.subr.bf16.mxu0 %v3386
    %3620 = vmatpush1.bf16.msra.mxu0 %v3385
    %3621 = vmatprep.subr.bf16.mxu0 %v3390
    %3622 = vmatpush1.bf16.msra.mxu0 %v3389
    %3623 = vmatprep.subr.bf16.mxu0 %v3394
    %3624 = vmatpush1.bf16.msra.mxu0 %v3393
    %3625 = vmatprep.subr.bf16.mxu0 %v3398
    %3626 = vmatpush1.bf16.msra.mxu0 %v3397
    %3627 = vmatprep.subr.bf16.mxu0 %v3402
    %3628 = vmatpush1.bf16.msra.mxu0 %v3401
    %3629 = vmatprep.mubr.bf16.mxu0 %v2792
    %3630 = vmatmul.mubr.bf16.gmra.mrb[0].mxu0 %v2791
    %v3631 = vpop.f32.mrb[0].mxu0
    %v3632 = vadd.f32 %v2940, %v3631
    %v3633 = vpop.f32.mrb[0].mxu0
    %v3634 = vadd.f32 %v2944, %v3633
    %v3635 = vpop.f32.mrb[0].mxu0
    %v3636 = vadd.f32 %v2940, %v3635
    %v3637 = vpop.f32.mrb[0].mxu0
    %v3638 = vadd.f32 %v2944, %v3637
    %3639 = vmatprep.mubr.bf16.mxu0 %v2796
    %3640 = vmatmul.mubr.bf16.gmra.mrb[0].mxu0 %v2795
    %v3641 = vpop.f32.mrb[0].mxu0
    %v3642 = vadd.f32 %v2940, %v3641
    %v3643 = vpop.f32.mrb[0].mxu0
    %v3644 = vadd.f32 %v2944, %v3643
    %v3645 = vpop.f32.mrb[0].mxu0
    %v3646 = vadd.f32 %v2940, %v3645
    %v3647 = vpop.f32.mrb[0].mxu0
    %v3648 = vadd.f32 %v2944, %v3647
    %3649 = vmatprep.mubr.bf16.mxu0 %v2800
    %3650 = vmatmul.mubr.bf16.gmra.mrb[0].mxu0 %v2799
    %v3651 = vpop.f32.mrb[0].mxu0
    %v3652 = vadd.f32 %v2940, %v3651
    %v3653 = vpop.f32.mrb[0].mxu0
    %v3654 = vadd.f32 %v2944, %v3653
    %v3655 = vpop.f32.mrb[0].mxu0
    %v3656 = vadd.f32 %v2940, %v3655
    %v3657 = vpop.f32.mrb[0].mxu0
    %v3658 = vadd.f32 %v2944, %v3657
    %3659 = vmatprep.mubr.bf16.mxu0 %v2804
    %3660 = vmatmul.mubr.bf16.gmra.mrb[0].mxu0 %v2803
    %v3661 = vpop.f32.mrb[0].mxu0
    %v3662 = vadd.f32 %v2940, %v3661
    %v3663 = vpop.f32.mrb[0].mxu0
    %v3664 = vadd.f32 %v2944, %v3663
    %v3665 = vpop.f32.mrb[0].mxu0
    %v3666 = vadd.f32 %v2940, %v3665
    %v3667 = vpop.f32.mrb[0].mxu0
    %v3668 = vadd.f32 %v2944, %v3667
    %3669 = vdwg.mxu0
    %3670 = vmatprep.subr.bf16.mxu0 %v3406
    %3671 = vmatpush1.bf16.msra.mxu0 %v3405
    %3672 = vmatprep.subr.bf16.mxu0 %v3410
    %3673 = vmatpush1.bf16.msra.mxu0 %v3409
    %3674 = vmatprep.subr.bf16.mxu0 %v3414
    %3675 = vmatpush1.bf16.msra.mxu0 %v3413
    %3676 = vmatprep.subr.bf16.mxu0 %v3418
    %3677 = vmatpush1.bf16.msra.mxu0 %v3417
    %3678 = vmatprep.subr.bf16.mxu0 %v3422
    %3679 = vmatpush1.bf16.msra.mxu0 %v3421
    %3680 = vmatprep.subr.bf16.mxu0 %v3426
    %3681 = vmatpush1.bf16.msra.mxu0 %v3425
    %3682 = vmatprep.subr.bf16.mxu0 %v3430
    %3683 = vmatpush1.bf16.msra.mxu0 %v3429
    %3684 = vmatprep.subr.bf16.mxu0 %v3434
    %3685 = vmatpush1.bf16.msra.mxu0 %v3433
    %3686 = vmatprep.subr.bf16.mxu0 %v3438
    %3687 = vmatpush1.bf16.msra.mxu0 %v3437
    %3688 = vmatprep.subr.bf16.mxu0 %v3442
    %3689 = vmatpush1.bf16.msra.mxu0 %v3441
    %3690 = vmatprep.subr.bf16.mxu0 %v3446
    %3691 = vmatpush1.bf16.msra.mxu0 %v3445
    %3692 = vmatprep.subr.bf16.mxu0 %v3450
    %3693 = vmatpush1.bf16.msra.mxu0 %v3449
    %3694 = vmatprep.subr.bf16.mxu0 %v3454
    %3695 = vmatpush1.bf16.msra.mxu0 %v3453
    %3696 = vmatprep.subr.bf16.mxu0 %v3458
    %3697 = vmatpush1.bf16.msra.mxu0 %v3457
    %3698 = vmatprep.subr.bf16.mxu0 %v3462
    %3699 = vmatpush1.bf16.msra.mxu0 %v3461
    %3700 = vmatprep.subr.bf16.mxu0 %v3466
    %3701 = vmatpush1.bf16.msra.mxu0 %v3465
    %3702 = vmatprep.mubr.bf16.mxu0 %v2794
    %3703 = vmatmul.mubr.bf16.gmra.mrb[0].mxu0 %v2793
    %v3704 = vpop.f32.mrb[0].mxu0
    %v3705 = vadd.f32 %v3632, %v3704
    %v3706 = vpop.f32.mrb[0].mxu0
    %v3707 = vadd.f32 %v3634, %v3706
    %v3708 = vpop.f32.mrb[0].mxu0
    %v3709 = vadd.f32 %v3636, %v3708
    %v3710 = vpop.f32.mrb[0].mxu0
    %v3711 = vadd.f32 %v3638, %v3710
    %3712 = vmatprep.mubr.bf16.mxu0 %v2798
    %3713 = vmatmul.mubr.bf16.gmra.mrb[0].mxu0 %v2797
    %v3714 = vpop.f32.mrb[0].mxu0
    %v3715 = vadd.f32 %v3642, %v3714
    %v3716 = vpop.f32.mrb[0].mxu0
    %v3717 = vadd.f32 %v3644, %v3716
    %v3718 = vpop.f32.mrb[0].mxu0
    %v3719 = vadd.f32 %v3646, %v3718
    %v3720 = vpop.f32.mrb[0].mxu0
    %v3721 = vadd.f32 %v3648, %v3720
    %3722 = vmatprep.mubr.bf16.mxu0 %v2802
    %3723 = vmatmul.mubr.bf16.gmra.mrb[0].mxu0 %v2801
    %v3724 = vpop.f32.mrb[0].mxu0
    %v3725 = vadd.f32 %v3652, %v3724
    %v3726 = vpop.f32.mrb[0].mxu0
    %v3727 = vadd.f32 %v3654, %v3726
    %v3728 = vpop.f32.mrb[0].mxu0
    %v3729 = vadd.f32 %v3656, %v3728
    %v3730 = vpop.f32.mrb[0].mxu0
    %v3731 = vadd.f32 %v3658, %v3730
    %3732 = vmatprep.mubr.bf16.mxu0 %v2806
    %3733 = vmatmul.mubr.bf16.gmra.mrb[0].mxu0 %v2805
    %v3734 = vpop.f32.mrb[0].mxu0
    %v3735 = vadd.f32 %v3662, %v3734
    %v3736 = vpop.f32.mrb[0].mxu0
    %v3737 = vadd.f32 %v3664, %v3736
    %v3738 = vpop.f32.mrb[0].mxu0
    %v3739 = vadd.f32 %v3666, %v3738
    %v3740 = vpop.f32.mrb[0].mxu0
    %v3741 = vadd.f32 %v3668, %v3740
    %3742 = vdwg.mxu0
    %3743 = vmatprep.subr.bf16.mxu0 %v3344
    %3744 = vmatpush1.bf16.msra.mxu0 %v3343
    %3745 = vmatprep.subr.bf16.mxu0 %v3348
    %3746 = vmatpush1.bf16.msra.mxu0 %v3347
    %3747 = vmatprep.subr.bf16.mxu0 %v3352
    %3748 = vmatpush1.bf16.msra.mxu0 %v3351
    %3749 = vmatprep.subr.bf16.mxu0 %v3356
    %3750 = vmatpush1.bf16.msra.mxu0 %v3355
    %3751 = vmatprep.subr.bf16.mxu0 %v3360
    %3752 = vmatpush1.bf16.msra.mxu0 %v3359
    %3753 = vmatprep.subr.bf16.mxu0 %v3364
    %3754 = vmatpush1.bf16.msra.mxu0 %v3363
    %3755 = vmatprep.subr.bf16.mxu0 %v3368
    %3756 = vmatpush1.bf16.msra.mxu0 %v3367
    %3757 = vmatprep.subr.bf16.mxu0 %v3372
    %3758 = vmatpush1.bf16.msra.mxu0 %v3371
    %3759 = vmatprep.subr.bf16.mxu0 %v3376
    %3760 = vmatpush1.bf16.msra.mxu0 %v3375
    %3761 = vmatprep.subr.bf16.mxu0 %v3380
    %3762 = vmatpush1.bf16.msra.mxu0 %v3379
    %3763 = vmatprep.subr.bf16.mxu0 %v3384
    %3764 = vmatpush1.bf16.msra.mxu0 %v3383
    %3765 = vmatprep.subr.bf16.mxu0 %v3388
    %3766 = vmatpush1.bf16.msra.mxu0 %v3387
    %3767 = vmatprep.subr.bf16.mxu0 %v3392
    %3768 = vmatpush1.bf16.msra.mxu0 %v3391
    %3769 = vmatprep.subr.bf16.mxu0 %v3396
    %3770 = vmatpush1.bf16.msra.mxu0 %v3395
    %3771 = vmatprep.subr.bf16.mxu0 %v3400
    %3772 = vmatpush1.bf16.msra.mxu0 %v3399
    %3773 = vmatprep.subr.bf16.mxu0 %v3404
    %3774 = vmatpush1.bf16.msra.mxu0 %v3403
    %3775 = vmatprep.mubr.bf16.mxu0 %v2792
    %3776 = vmatmul.mubr.bf16.gmra.mrb[0].mxu0 %v2791
    %v3777 = vpop.f32.mrb[0].mxu0
    %v3778 = vadd.f32 %v2948, %v3777
    %v3779 = vpop.f32.mrb[0].mxu0
    %v3780 = vadd.f32 %v2952, %v3779
    %v3781 = vpop.f32.mrb[0].mxu0
    %v3782 = vadd.f32 %v2948, %v3781
    %v3783 = vpop.f32.mrb[0].mxu0
    %v3784 = vadd.f32 %v2952, %v3783
    %3785 = vmatprep.mubr.bf16.mxu0 %v2796
    %3786 = vmatmul.mubr.bf16.gmra.mrb[0].mxu0 %v2795
    %v3787 = vpop.f32.mrb[0].mxu0
    %v3788 = vadd.f32 %v2948, %v3787
    %v3789 = vpop.f32.mrb[0].mxu0
    %v3790 = vadd.f32 %v2952, %v3789
    %v3791 = vpop.f32.mrb[0].mxu0
    %v3792 = vadd.f32 %v2948, %v3791
    %v3793 = vpop.f32.mrb[0].mxu0
    %v3794 = vadd.f32 %v2952, %v3793
    %3795 = vmatprep.mubr.bf16.mxu0 %v2800
    %3796 = vmatmul.mubr.bf16.gmra.mrb[0].mxu0 %v2799
    %v3797 = vpop.f32.mrb[0].mxu0
    %v3798 = vadd.f32 %v2948, %v3797
    %v3799 = vpop.f32.mrb[0].mxu0
    %v3800 = vadd.f32 %v2952, %v3799
    %v3801 = vpop.f32.mrb[0].mxu0
    %v3802 = vadd.f32 %v2948, %v3801
    %v3803 = vpop.f32.mrb[0].mxu0
    %v3804 = vadd.f32 %v2952, %v3803
    %3805 = vmatprep.mubr.bf16.mxu0 %v2804
    %3806 = vmatmul.mubr.bf16.gmra.mrb[0].mxu0 %v2803
    %v3807 = vpop.f32.mrb[0].mxu0
    %v3808 = vadd.f32 %v2948, %v3807
    %v3809 = vpop.f32.mrb[0].mxu0
    %v3810 = vadd.f32 %v2952, %v3809
    %v3811 = vpop.f32.mrb[0].mxu0
    %v3812 = vadd.f32 %v2948, %v3811
    %v3813 = vpop.f32.mrb[0].mxu0
    %v3814 = vadd.f32 %v2952, %v3813
    %3815 = vdwg.mxu0
    %3816 = vmatprep.subr.bf16.mxu0 %v3408
    %3817 = vmatpush1.bf16.msra.mxu0 %v3407
    %3818 = vmatprep.subr.bf16.mxu0 %v3412
    %3819 = vmatpush1.bf16.msra.mxu0 %v3411
    %3820 = vmatprep.subr.bf16.mxu0 %v3416
    %3821 = vmatpush1.bf16.msra.mxu0 %v3415
    %3822 = vmatprep.subr.bf16.mxu0 %v3420
    %3823 = vmatpush1.bf16.msra.mxu0 %v3419
    %3824 = vmatprep.subr.bf16.mxu0 %v3424
    %3825 = vmatpush1.bf16.msra.mxu0 %v3423
    %3826 = vmatprep.subr.bf16.mxu0 %v3428
    %3827 = vmatpush1.bf16.msra.mxu0 %v3427
    %3828 = vmatprep.subr.bf16.mxu0 %v3432
    %3829 = vmatpush1.bf16.msra.mxu0 %v3431
    %3830 = vmatprep.subr.bf16.mxu0 %v3436
    %3831 = vmatpush1.bf16.msra.mxu0 %v3435
    %3832 = vmatprep.subr.bf16.mxu0 %v3440
    %3833 = vmatpush1.bf16.msra.mxu0 %v3439
    %3834 = vmatprep.subr.bf16.mxu0 %v3444
    %3835 = vmatpush1.bf16.msra.mxu0 %v3443
    %3836 = vmatprep.subr.bf16.mxu0 %v3448
    %3837 = vmatpush1.bf16.msra.mxu0 %v3447
    %3838 = vmatprep.subr.bf16.mxu0 %v3452
    %3839 = vmatpush1.bf16.msra.mxu0 %v3451
    %3840 = vmatprep.subr.bf16.mxu0 %v3456
    %3841 = vmatpush1.bf16.msra.mxu0 %v3455
    %3842 = vmatprep.subr.bf16.mxu0 %v3460
    %3843 = vmatpush1.bf16.msra.mxu0 %v3459
    %3844 = vmatprep.subr.bf16.mxu0 %v3464
    %3845 = vmatpush1.bf16.msra.mxu0 %v3463
    %3846 = vmatprep.subr.bf16.mxu0 %v3468
    %3847 = vmatpush1.bf16.msra.mxu0 %v3467
    %3848 = vmatprep.mubr.bf16.mxu0 %v2794
    %3849 = vmatmul.mubr.bf16.gmra.mrb[0].mxu0 %v2793
    %v3850 = vpop.f32.mrb[0].mxu0
    %v3851 = vadd.f32 %v3778, %v3850
    %v3852 = vpop.f32.mrb[0].mxu0
    %v3853 = vadd.f32 %v3780, %v3852
    %v3854 = vpop.f32.mrb[0].mxu0
    %v3855 = vadd.f32 %v3782, %v3854
    %v3856 = vpop.f32.mrb[0].mxu0
    %v3857 = vadd.f32 %v3784, %v3856
    %3858 = vmatprep.mubr.bf16.mxu0 %v2798
    %3859 = vmatmul.mubr.bf16.gmra.mrb[0].mxu0 %v2797
    %v3860 = vpop.f32.mrb[0].mxu0
    %v3861 = vadd.f32 %v3788, %v3860
    %v3862 = vpop.f32.mrb[0].mxu0
    %v3863 = vadd.f32 %v3790, %v3862
    %v3864 = vpop.f32.mrb[0].mxu0
    %v3865 = vadd.f32 %v3792, %v3864
    %v3866 = vpop.f32.mrb[0].mxu0
    %v3867 = vadd.f32 %v3794, %v3866
    %3868 = vmatprep.mubr.bf16.mxu0 %v2802
    %3869 = vmatmul.mubr.bf16.gmra.mrb[0].mxu0 %v2801
    %v3870 = vpop.f32.mrb[0].mxu0
    %v3871 = vadd.f32 %v3798, %v3870
    %v3872 = vpop.f32.mrb[0].mxu0
    %v3873 = vadd.f32 %v3800, %v3872
    %v3874 = vpop.f32.mrb[0].mxu0
    %v3875 = vadd.f32 %v3802, %v3874
    %v3876 = vpop.f32.mrb[0].mxu0
    %v3877 = vadd.f32 %v3804, %v3876
    %3878 = vmatprep.mubr.bf16.mxu0 %v2806
    %3879 = vmatmul.mubr.bf16.gmra.mrb[0].mxu0 %v2805
    %v3880 = vpop.f32.mrb[0].mxu0
    %v3881 = vadd.f32 %v3808, %v3880
    %v3882 = vpop.f32.mrb[0].mxu0
    %v3883 = vadd.f32 %v3810, %v3882
    %v3884 = vpop.f32.mrb[0].mxu0
    %v3885 = vadd.f32 %v3812, %v3884
    %v3886 = vpop.f32.mrb[0].mxu0
    %v3887 = vadd.f32 %v3814, %v3886
    %3888 = vdwg.mxu0
    %v3889 = vmax.f32 %v3705, 0.0
    %v3890 = vmax.f32 %v3707, 0.0
    %v3891 = vmax.f32 %v3851, 0.0
    %v3892 = vmax.f32 %v3853, 0.0
    %v3893 = vmax.f32 %v3709, 0.0
    %v3894 = vmax.f32 %v3711, 0.0
    %v3895 = vmax.f32 %v3855, 0.0
    %v3896 = vmax.f32 %v3857, 0.0
    %v3897 = vmax.f32 %v3715, 0.0
    %v3898 = vmax.f32 %v3717, 0.0
    %v3899 = vmax.f32 %v3861, 0.0
    %v3900 = vmax.f32 %v3863, 0.0
    %v3901 = vmax.f32 %v3719, 0.0
    %v3902 = vmax.f32 %v3721, 0.0
    %v3903 = vmax.f32 %v3865, 0.0
    %v3904 = vmax.f32 %v3867, 0.0
    %v3905 = vmax.f32 %v3725, 0.0
    %v3906 = vmax.f32 %v3727, 0.0
    %v3907 = vmax.f32 %v3871, 0.0
    %v3908 = vmax.f32 %v3873, 0.0
    %v3909 = vmax.f32 %v3729, 0.0
    %v3910 = vmax.f32 %v3731, 0.0
    %v3911 = vmax.f32 %v3875, 0.0
    %v3912 = vmax.f32 %v3877, 0.0
    %v3913 = vmax.f32 %v3735, 0.0
    %v3914 = vmax.f32 %v3737, 0.0
    %v3915 = vmax.f32 %v3881, 0.0
    %v3916 = vmax.f32 %v3883, 0.0
    %v3917 = vmax.f32 %v3739, 0.0
    %v3918 = vmax.f32 %v3741, 0.0
    %v3919 = vmax.f32 %v3885, 0.0
    %v3920 = vmax.f32 %v3887, 0.0
    %v3921 = vpack.c.bf16 %v3893, %v3889
    %v3922 = vpack.c.bf16 %v3894, %v3890
    %v3923 = vpack.c.bf16 %v3895, %v3891
    %v3924 = vpack.c.bf16 %v3896, %v3892
    %v3925 = vpack.c.bf16 %v3901, %v3897
    %v3926 = vpack.c.bf16 %v3902, %v3898
    %v3927 = vpack.c.bf16 %v3903, %v3899
    %v3928 = vpack.c.bf16 %v3904, %v3900
    %v3929 = vpack.c.bf16 %v3909, %v3905
    %v3930 = vpack.c.bf16 %v3910, %v3906
    %v3931 = vpack.c.bf16 %v3911, %v3907
    %v3932 = vpack.c.bf16 %v3912, %v3908
    %v3933 = vpack.c.bf16 %v3917, %v3913
    %v3934 = vpack.c.bf16 %v3918, %v3914
    %v3935 = vpack.c.bf16 %v3919, %v3915
    %v3936 = vpack.c.bf16 %v3920, %v3916
    %v3937 = vld [vmem:[#allocation9] sm:$0xf]
    %v3938 = vld [vmem:[#allocation9 + $0x4] sm:$0xf]
    %v3939 = vld [vmem:[#allocation9 + $0x8] sm:$0xf]
    %v3940 = vld [vmem:[#allocation9 + $0xc] sm:$0xf]
    %v3941 = vld [vmem:[#allocation9 + $0x10] sm:$0xf]
    %v3942 = vld [vmem:[#allocation9 + $0x14] sm:$0xf]
    %v3943 = vld [vmem:[#allocation9 + $0x18] sm:$0xf]
    %v3944 = vld [vmem:[#allocation9 + $0x1c] sm:$0xf]
    %v3945 = vld [vmem:[#allocation9 + $0x20] sm:$0xf]
    %v3946 = vld [vmem:[#allocation9 + $0x24] sm:$0xf]
    %v3947 = vld [vmem:[#allocation9 + $0x28] sm:$0xf]
    %v3948 = vld [vmem:[#allocation9 + $0x2c] sm:$0xf]
    %v3949 = vld [vmem:[#allocation9 + $0x30] sm:$0xf]
    %v3950 = vld [vmem:[#allocation9 + $0x34] sm:$0xf]
    %v3951 = vld [vmem:[#allocation9 + $0x38] sm:$0xf]
    %v3952 = vld [vmem:[#allocation9 + $0x3c] sm:$0xf]
    %v3953 = vld [vmem:[#allocation9 + $0x40] sm:$0xf]
    %v3954 = vld [vmem:[#allocation9 + $0x44] sm:$0xf]
    %v3955 = vld [vmem:[#allocation9 + $0x48] sm:$0xf]
    %v3956 = vld [vmem:[#allocation9 + $0x4c] sm:$0xf]
    %v3957 = vld [vmem:[#allocation9 + $0x50] sm:$0xf]
    %v3958 = vld [vmem:[#allocation9 + $0x54] sm:$0xf]
    %v3959 = vld [vmem:[#allocation9 + $0x58] sm:$0xf]
    %v3960 = vld [vmem:[#allocation9 + $0x5c] sm:$0xf]
    %v3961 = vld [vmem:[#allocation9 + $0x60] sm:$0xf]
    %v3962 = vld [vmem:[#allocation9 + $0x64] sm:$0xf]
    %v3963 = vld [vmem:[#allocation9 + $0x68] sm:$0xf]
    %v3964 = vld [vmem:[#allocation9 + $0x6c] sm:$0xf]
    %v3965 = vld [vmem:[#allocation9 + $0x70] sm:$0xf]
    %v3966 = vld [vmem:[#allocation9 + $0x74] sm:$0xf]
    %v3967 = vld [vmem:[#allocation9 + $0x78] sm:$0xf]
    %v3968 = vld [vmem:[#allocation9 + $0x7c] sm:$0xf]
    %v3969 = vld [vmem:[#allocation9 + $0x80] sm:$0xf]
    %v3970 = vld [vmem:[#allocation9 + $0x84] sm:$0xf]
    %v3971 = vld [vmem:[#allocation9 + $0x88] sm:$0xf]
    %v3972 = vld [vmem:[#allocation9 + $0x8c] sm:$0xf]
    %v3973 = vld [vmem:[#allocation9 + $0x90] sm:$0xf]
    %v3974 = vld [vmem:[#allocation9 + $0x94] sm:$0xf]
    %v3975 = vld [vmem:[#allocation9 + $0x98] sm:$0xf]
    %v3976 = vld [vmem:[#allocation9 + $0x9c] sm:$0xf]
    %v3977 = vld [vmem:[#allocation9 + $0xa0] sm:$0xf]
    %v3978 = vld [vmem:[#allocation9 + $0xa4] sm:$0xf]
    %v3979 = vld [vmem:[#allocation9 + $0xa8] sm:$0xf]
    %v3980 = vld [vmem:[#allocation9 + $0xac] sm:$0xf]
    %v3981 = vld [vmem:[#allocation9 + $0xb0] sm:$0xf]
    %v3982 = vld [vmem:[#allocation9 + $0xb4] sm:$0xf]
    %v3983 = vld [vmem:[#allocation9 + $0xb8] sm:$0xf]
    %v3984 = vld [vmem:[#allocation9 + $0xbc] sm:$0xf]
    %v3985 = vld [vmem:[#allocation9 + $0xc0] sm:$0xf]
    %v3986 = vld [vmem:[#allocation9 + $0xc4] sm:$0xf]
    %v3987 = vld [vmem:[#allocation9 + $0xc8] sm:$0xf]
    %v3988 = vld [vmem:[#allocation9 + $0xcc] sm:$0xf]
    %v3989 = vld [vmem:[#allocation9 + $0xd0] sm:$0xf]
    %v3990 = vld [vmem:[#allocation9 + $0xd4] sm:$0xf]
    %v3991 = vld [vmem:[#allocation9 + $0xd8] sm:$0xf]
    %v3992 = vld [vmem:[#allocation9 + $0xdc] sm:$0xf]
    %v3993 = vld [vmem:[#allocation9 + $0xe0] sm:$0xf]
    %v3994 = vld [vmem:[#allocation9 + $0xe4] sm:$0xf]
    %v3995 = vld [vmem:[#allocation9 + $0xe8] sm:$0xf]
    %v3996 = vld [vmem:[#allocation9 + $0xec] sm:$0xf]
    %v3997 = vld [vmem:[#allocation9 + $0xf0] sm:$0xf]
    %v3998 = vld [vmem:[#allocation9 + $0xf4] sm:$0xf]
    %v3999 = vld [vmem:[#allocation9 + $0xf8] sm:$0xf]
    %v4000 = vld [vmem:[#allocation9 + $0xfc] sm:$0xf]
    %v4001 = vld [vmem:[%s10] sm:$0x1]
    %v4003 = vlaneseq
    %v4004 = vshrl.u32 %v4003, 7
    %v4005 = vsub.s32 0, %v4004
    %v4006 = vrot.slane %v4001, %v4005
    %v4072 = vunpack.c.l.b16 %v3937
    %v4073 = vunpack.c.l.b16 %v3938
    %v4074 = vunpack.c.l.b16 %v3939
    %v4075 = vunpack.c.l.b16 %v3940
    %v4076 = vunpack.c.l.b16 %v3941
    %v4077 = vunpack.c.l.b16 %v3942
    %v4078 = vunpack.c.l.b16 %v3943
    %v4079 = vunpack.c.l.b16 %v3944
    %v4080 = vunpack.c.l.b16 %v3945
    %v4081 = vunpack.c.l.b16 %v3946
    %v4082 = vunpack.c.l.b16 %v3947
    %v4083 = vunpack.c.l.b16 %v3948
    %v4084 = vunpack.c.l.b16 %v3949
    %v4085 = vunpack.c.l.b16 %v3950
    %v4086 = vunpack.c.l.b16 %v3951
    %v4087 = vunpack.c.l.b16 %v3952
    %v4088 = vunpack.c.l.b16 %v3953
    %v4089 = vunpack.c.l.b16 %v3954
    %v4090 = vunpack.c.l.b16 %v3955
    %v4091 = vunpack.c.l.b16 %v3956
    %v4092 = vunpack.c.l.b16 %v3957
    %v4093 = vunpack.c.l.b16 %v3958
    %v4094 = vunpack.c.l.b16 %v3959
    %v4095 = vunpack.c.l.b16 %v3960
    %v4096 = vunpack.c.l.b16 %v3961
    %v4097 = vunpack.c.l.b16 %v3962
    %v4098 = vunpack.c.l.b16 %v3963
    %v4099 = vunpack.c.l.b16 %v3964
    %v4100 = vunpack.c.l.b16 %v3965
    %v4101 = vunpack.c.l.b16 %v3966
    %v4102 = vunpack.c.l.b16 %v3967
    %v4103 = vunpack.c.l.b16 %v3968
    %v4104 = vunpack.c.l.b16 %v3969
    %v4105 = vunpack.c.l.b16 %v3970
    %v4106 = vunpack.c.l.b16 %v3971
    %v4107 = vunpack.c.l.b16 %v3972
    %v4108 = vunpack.c.l.b16 %v3973
    %v4109 = vunpack.c.l.b16 %v3974
    %v4110 = vunpack.c.l.b16 %v3975
    %v4111 = vunpack.c.l.b16 %v3976
    %v4112 = vunpack.c.l.b16 %v3977
    %v4113 = vunpack.c.l.b16 %v3978
    %v4114 = vunpack.c.l.b16 %v3979
    %v4115 = vunpack.c.l.b16 %v3980
    %v4116 = vunpack.c.l.b16 %v3981
    %v4117 = vunpack.c.l.b16 %v3982
    %v4118 = vunpack.c.l.b16 %v3983
    %v4119 = vunpack.c.l.b16 %v3984
    %v4120 = vunpack.c.l.b16 %v3985
    %v4121 = vunpack.c.l.b16 %v3986
    %v4122 = vunpack.c.l.b16 %v3987
    %v4123 = vunpack.c.l.b16 %v3988
    %v4124 = vunpack.c.l.b16 %v3989
    %v4125 = vunpack.c.l.b16 %v3990
    %v4126 = vunpack.c.l.b16 %v3991
    %v4127 = vunpack.c.l.b16 %v3992
    %v4128 = vunpack.c.l.b16 %v3993
    %v4129 = vunpack.c.l.b16 %v3994
    %v4130 = vunpack.c.l.b16 %v3995
    %v4131 = vunpack.c.l.b16 %v3996
    %v4132 = vunpack.c.l.b16 %v3997
    %v4133 = vunpack.c.l.b16 %v3998
    %v4134 = vunpack.c.l.b16 %v3999
    %v4135 = vunpack.c.l.b16 %v4000
    %v4136 = vpack.c.b16 %v4073, %v4072
    %v4137 = vpack.c.b16 %v4075, %v4074
    %v4138 = vpack.c.b16 %v4077, %v4076
    %v4139 = vpack.c.b16 %v4079, %v4078
    %v4140 = vpack.c.b16 %v4081, %v4080
    %v4141 = vpack.c.b16 %v4083, %v4082
    %v4142 = vpack.c.b16 %v4085, %v4084
    %v4143 = vpack.c.b16 %v4087, %v4086
    %v4144 = vpack.c.b16 %v4089, %v4088
    %v4145 = vpack.c.b16 %v4091, %v4090
    %v4146 = vpack.c.b16 %v4093, %v4092
    %v4147 = vpack.c.b16 %v4095, %v4094
    %v4148 = vpack.c.b16 %v4097, %v4096
    %v4149 = vpack.c.b16 %v4099, %v4098
    %v4150 = vpack.c.b16 %v4101, %v4100
    %v4151 = vpack.c.b16 %v4103, %v4102
    %v4152 = vpack.c.b16 %v4105, %v4104
    %v4153 = vpack.c.b16 %v4107, %v4106
    %v4154 = vpack.c.b16 %v4109, %v4108
    %v4155 = vpack.c.b16 %v4111, %v4110
    %v4156 = vpack.c.b16 %v4113, %v4112
    %v4157 = vpack.c.b16 %v4115, %v4114
    %v4158 = vpack.c.b16 %v4117, %v4116
    %v4159 = vpack.c.b16 %v4119, %v4118
    %v4160 = vpack.c.b16 %v4121, %v4120
    %v4161 = vpack.c.b16 %v4123, %v4122
    %v4162 = vpack.c.b16 %v4125, %v4124
    %v4163 = vpack.c.b16 %v4127, %v4126
    %v4164 = vpack.c.b16 %v4129, %v4128
    %v4165 = vpack.c.b16 %v4131, %v4130
    %v4166 = vpack.c.b16 %v4133, %v4132
    %v4167 = vpack.c.b16 %v4135, %v4134
    %4200 = vmatprep.subr.bf16.mxu0 0
    %4201 = vmatpush1.bf16.msra.mxu0 %v4136
    %4202 = vmatprep.subr.bf16.mxu0 0
    %4203 = vmatpush1.bf16.msra.mxu0 %v4137
    %4204 = vmatprep.subr.bf16.mxu0 0
    %4205 = vmatpush1.bf16.msra.mxu0 %v4138
    %4206 = vmatprep.subr.bf16.mxu0 0
    %4207 = vmatpush1.bf16.msra.mxu0 %v4139
    %4208 = vmatprep.subr.bf16.mxu0 0
    %4209 = vmatpush1.bf16.msra.mxu0 %v4140
    %4210 = vmatprep.subr.bf16.mxu0 0
    %4211 = vmatpush1.bf16.msra.mxu0 %v4141
    %4212 = vmatprep.subr.bf16.mxu0 0
    %4213 = vmatpush1.bf16.msra.mxu0 %v4142
    %4214 = vmatprep.subr.bf16.mxu0 0
    %4215 = vmatpush1.bf16.msra.mxu0 %v4143
    %4216 = vmatprep.subr.bf16.mxu0 0
    %4217 = vmatpush1.bf16.msra.mxu0 %v4144
    %4218 = vmatprep.subr.bf16.mxu0 0
    %4219 = vmatpush1.bf16.msra.mxu0 %v4145
    %4220 = vmatprep.subr.bf16.mxu0 0
    %4221 = vmatpush1.bf16.msra.mxu0 %v4146
    %4222 = vmatprep.subr.bf16.mxu0 0
    %4223 = vmatpush1.bf16.msra.mxu0 %v4147
    %4224 = vmatprep.subr.bf16.mxu0 0
    %4225 = vmatpush1.bf16.msra.mxu0 %v4148
    %4226 = vmatprep.subr.bf16.mxu0 0
    %4227 = vmatpush1.bf16.msra.mxu0 %v4149
    %4228 = vmatprep.subr.bf16.mxu0 0
    %4229 = vmatpush1.bf16.msra.mxu0 %v4150
    %4230 = vmatprep.subr.bf16.mxu0 0
    %4231 = vmatpush1.bf16.msra.mxu0 %v4151
    %4232 = vmatprep.mubr.bf16.mxu0 %v3922
    %4233 = vmatmul.mubr.bf16.gmra.mrb[0].mxu0 %v3921
    %v4234 = vpop.f32.mrb[0].mxu0
    %v4235 = vadd.f32 %v4006, %v4234
    %v4236 = vpop.f32.mrb[0].mxu0
    %v4237 = vpop.f32.mrb[0].mxu0
    %v4238 = vadd.f32 %v4006, %v4237
    %v4239 = vpop.f32.mrb[0].mxu0
    %4240 = vmatprep.mubr.bf16.mxu0 %v3926
    %4241 = vmatmul.mubr.bf16.gmra.mrb[0].mxu0 %v3925
    %v4242 = vpop.f32.mrb[0].mxu0
    %v4243 = vadd.f32 %v4006, %v4242
    %v4244 = vpop.f32.mrb[0].mxu0
    %v4245 = vpop.f32.mrb[0].mxu0
    %v4246 = vadd.f32 %v4006, %v4245
    %v4247 = vpop.f32.mrb[0].mxu0
    %4248 = vmatprep.mubr.bf16.mxu0 %v3930
    %4249 = vmatmul.mubr.bf16.gmra.mrb[0].mxu0 %v3929
    %v4250 = vpop.f32.mrb[0].mxu0
    %v4251 = vadd.f32 %v4006, %v4250
    %v4252 = vpop.f32.mrb[0].mxu0
    %v4253 = vpop.f32.mrb[0].mxu0
    %v4254 = vadd.f32 %v4006, %v4253
    %v4255 = vpop.f32.mrb[0].mxu0
    %4256 = vmatprep.mubr.bf16.mxu0 %v3934
    %4257 = vmatmul.mubr.bf16.gmra.mrb[0].mxu0 %v3933
    %v4258 = vpop.f32.mrb[0].mxu0
    %v4259 = vadd.f32 %v4006, %v4258
    %v4260 = vpop.f32.mrb[0].mxu0
    %v4261 = vpop.f32.mrb[0].mxu0
    %v4262 = vadd.f32 %v4006, %v4261
    %v4263 = vpop.f32.mrb[0].mxu0
    %4264 = vdwg.mxu0
    %4265 = vmatprep.subr.bf16.mxu0 0
    %4266 = vmatpush1.bf16.msra.mxu0 %v4152
    %4267 = vmatprep.subr.bf16.mxu0 0
    %4268 = vmatpush1.bf16.msra.mxu0 %v4153
    %4269 = vmatprep.subr.bf16.mxu0 0
    %4270 = vmatpush1.bf16.msra.mxu0 %v4154
    %4271 = vmatprep.subr.bf16.mxu0 0
    %4272 = vmatpush1.bf16.msra.mxu0 %v4155
    %4273 = vmatprep.subr.bf16.mxu0 0
    %4274 = vmatpush1.bf16.msra.mxu0 %v4156
    %4275 = vmatprep.subr.bf16.mxu0 0
    %4276 = vmatpush1.bf16.msra.mxu0 %v4157
    %4277 = vmatprep.subr.bf16.mxu0 0
    %4278 = vmatpush1.bf16.msra.mxu0 %v4158
    %4279 = vmatprep.subr.bf16.mxu0 0
    %4280 = vmatpush1.bf16.msra.mxu0 %v4159
    %4281 = vmatprep.subr.bf16.mxu0 0
    %4282 = vmatpush1.bf16.msra.mxu0 %v4160
    %4283 = vmatprep.subr.bf16.mxu0 0
    %4284 = vmatpush1.bf16.msra.mxu0 %v4161
    %4285 = vmatprep.subr.bf16.mxu0 0
    %4286 = vmatpush1.bf16.msra.mxu0 %v4162
    %4287 = vmatprep.subr.bf16.mxu0 0
    %4288 = vmatpush1.bf16.msra.mxu0 %v4163
    %4289 = vmatprep.subr.bf16.mxu0 0
    %4290 = vmatpush1.bf16.msra.mxu0 %v4164
    %4291 = vmatprep.subr.bf16.mxu0 0
    %4292 = vmatpush1.bf16.msra.mxu0 %v4165
    %4293 = vmatprep.subr.bf16.mxu0 0
    %4294 = vmatpush1.bf16.msra.mxu0 %v4166
    %4295 = vmatprep.subr.bf16.mxu0 0
    %4296 = vmatpush1.bf16.msra.mxu0 %v4167
    %4297 = vmatprep.mubr.bf16.mxu0 %v3924
    %4298 = vmatmul.mubr.bf16.gmra.mrb[0].mxu0 %v3923
    %v4299 = vpop.f32.mrb[0].mxu0
    %v4300 = vadd.f32 %v4235, %v4299
    %v4301 = vpop.f32.mrb[0].mxu0
    %v4302 = vpop.f32.mrb[0].mxu0
    %v4303 = vadd.f32 %v4238, %v4302
    %v4304 = vpop.f32.mrb[0].mxu0
    %4305 = vmatprep.mubr.bf16.mxu0 %v3928
    %4306 = vmatmul.mubr.bf16.gmra.mrb[0].mxu0 %v3927
    %v4307 = vpop.f32.mrb[0].mxu0
    %v4308 = vadd.f32 %v4243, %v4307
    %v4309 = vpop.f32.mrb[0].mxu0
    %v4310 = vpop.f32.mrb[0].mxu0
    %v4311 = vadd.f32 %v4246, %v4310
    %v4312 = vpop.f32.mrb[0].mxu0
    %4313 = vmatprep.mubr.bf16.mxu0 %v3932
    %4314 = vmatmul.mubr.bf16.gmra.mrb[0].mxu0 %v3931
    %v4315 = vpop.f32.mrb[0].mxu0
    %v4316 = vadd.f32 %v4251, %v4315
    %v4317 = vpop.f32.mrb[0].mxu0
    %v4318 = vpop.f32.mrb[0].mxu0
    %v4319 = vadd.f32 %v4254, %v4318
    %v4320 = vpop.f32.mrb[0].mxu0
    %4321 = vmatprep.mubr.bf16.mxu0 %v3936
    %4322 = vmatmul.mubr.bf16.gmra.mrb[0].mxu0 %v3935
    %v4323 = vpop.f32.mrb[0].mxu0
    %v4324 = vadd.f32 %v4259, %v4323
    %v4325 = vpop.f32.mrb[0].mxu0
    %v4326 = vpop.f32.mrb[0].mxu0
    %v4327 = vadd.f32 %v4262, %v4326
    %v4328 = vpop.f32.mrb[0].mxu0
    %4329 = vdwg.mxu0
    %4330 = vst [vmem:[%s11] sm:$0xff] %v4300
    %4331 = vst [vmem:[%s11 + $0x8] sm:$0xff] %v4303
    %4332 = vst [vmem:[%s11 + $0x10] sm:$0xff] %v4308
    %4333 = vst [vmem:[%s11 + $0x18] sm:$0xff] %v4311
    %4334 = vst [vmem:[%s11 + $0x20] sm:$0xff] %v4316
    %4335 = vst [vmem:[%s11 + $0x28] sm:$0xff] %v4319
    %4336 = vst [vmem:[%s11 + $0x30] sm:$0xff] %v4324
    %4337 = vst [vmem:[%s11 + $0x38] sm:$0xff] %v4327
    // Predicated region
    $region66: #{black_scholes_ann_forward.1} parent=1 // pred_check
      _
    $region67: #{black_scholes_ann_forward.1} parent=1 // pred_check_branch
      %4339 = sbr.rel (0) target = $region69
    $region68: #{black_scholes_ann_forward.1} parent=1 // pred_region
      _
    $region69: #{black_scholes_ann_forward.1} parent=1 // pred_fallthru
      _
    // Predicated region
    $region70: #{black_scholes_ann_forward.1} parent=1 // pred_check
      _
    $region71: #{black_scholes_ann_forward.1} parent=1 // pred_check_branch
      %4341 = sbr.rel (0) target = $region73
    $region72: #{black_scholes_ann_forward.1} parent=1 // pred_region
      _
    $region73: #{black_scholes_ann_forward.1} parent=1 // pred_fallthru
      _
    %4342 = vsyncpa [#allocation3], 1
    %4343 = vsyncpa [#allocation5], 1
    %4344 = vsyncpa [#allocation8], 1

</llo_original>
